<compile_context>
chip_gen: v7x
topology: tpu7x:2x2x1
jax: 0.10.0
libtpu: 0.0.40
codegen_flags: <defaults>
</compile_context>

<pallas_src>
import math

import jax
import jax.numpy as jnp
from jax import lax
from jax.experimental import pallas as pl
from jax.experimental.pallas import tpu as pltpu


def _mmts_kernel(q_ref, k_ref, v_ref, wq_ref, wk_ref, wv_ref, o_ref):
    # q_ref / k_ref / v_ref / o_ref : (B, S, D)   -- all batches for branch m
    # wq_ref / wk_ref / wv_ref      : (H, D, D)   -- per-head weights, branch m
    B, S, D = q_ref.shape
    H = wq_ref.shape[0]
    scale = 1.0 / math.sqrt(D)

    # Fold B into the row (sublane) dim: minormost dim unchanged -> cheap.
    q2 = q_ref[...].reshape(B * S, D)
    k2 = k_ref[...].reshape(B * S, D)
    v2 = v_ref[...].reshape(B * S, D)

    acc = jnp.zeros((B * S, D), jnp.float32)   # sum over heads of non-NaN values
    cnt = jnp.zeros((B * S, D), jnp.float32)   # count over heads of non-NaN values

    # Static unroll over heads (H is small); wq_ref[h] is a free leading-axis
    # index, so no lane-offset slices / XLU relayouts anywhere in the body.
    for h in range(H):
        # Projections for all batches at once: (B*S, D) @ (D, D)
        Qh = jnp.dot(q2, wq_ref[h], preferred_element_type=jnp.float32)
        Kh = jnp.dot(k2, wk_ref[h], preferred_element_type=jnp.float32)
        Vh = jnp.dot(v2, wv_ref[h], preferred_element_type=jnp.float32)

        oh_parts = []
        for b in range(B):   # static unroll; sublane (row) slices are cheap
            qb = Qh[b * S:(b + 1) * S, :]          # (S, D)
            kb = Kh[b * S:(b + 1) * S, :]
            vb = Vh[b * S:(b + 1) * S, :]

            # scores: contract last dims (transposed-RHS MXU path, no explicit .T)
            s = lax.dot_general(qb, kb, (((1,), (1,)), ((), ())),
                                preferred_element_type=jnp.float32) * scale
            # numerically-stable softmax along the last dim
            m = jnp.max(s, axis=-1, keepdims=True)
            e = jnp.exp(s - m)
            p = e * pl.reciprocal(jnp.sum(e, axis=-1, keepdims=True), approx=False)
            # dropout is identity in eval mode (inference forward)

            oh_parts.append(jnp.dot(p, vb, preferred_element_type=jnp.float32))

        oh = jnp.concatenate(oh_parts, axis=0)     # (B*S, D)

        # nanmean over heads: ignore NaN entries per element (matches torch.nanmean)
        isn = jnp.isnan(oh)
        acc = acc + jnp.where(isn, 0.0, oh)
        cnt = cnt + jnp.where(isn, 0.0, 1.0)

    out = acc / cnt + q2                           # nanmean over heads + residual
    o_ref[...] = out.reshape(B, S, D).astype(o_ref.dtype)


def mmts_forward(q, k, v, Wq, Wk, Wv):
    """q, k, v: (B, M, S, D); Wq/Wk/Wv: (M, D, H*D). Returns (B, M, S, D)."""
    B, M, S, D = q.shape
    HD = Wq.shape[-1]
    H = HD // D

    # Wrapper-side weight relayout: (M, D, H*D) -> (M, H, D, D); column index
    # e of H*D maps to (h, d_out) = (e // D, e % D), matching the torch .view().
    def to_heads(W):
        return W.reshape(M, D, H, D).transpose(0, 2, 1, 3)

    Wq_h, Wk_h, Wv_h = to_heads(Wq), to_heads(Wk), to_heads(Wv)

    # Grid over branches only; M dim squeezed out of the kernel view.
    # Activations: block (B, 1, S, D) -> kernel sees (B, S, D).
    x_spec = pl.BlockSpec((B, None, S, D), lambda m: (0, m, 0, 0))
    # Weights: block (1, H, D, D) -> kernel sees (H, D, D); constant per grid step.
    w_spec = pl.BlockSpec((None, H, D, D), lambda m: (m, 0, 0, 0))

    return pl.pallas_call(
        _mmts_kernel,
        out_shape=jax.ShapeDtypeStruct((B, M, S, D), q.dtype),
        grid=(M,),
        in_specs=[x_spec, x_spec, x_spec, w_spec, w_spec, w_spec],
        out_specs=x_spec,
        compiler_params=pltpu.CompilerParams(
            dimension_semantics=("parallel",)),
    )(q, k, v, Wq_h, Wk_h, Wv_h)


def mmts_reference(q, k, v, Wq, Wk, Wv, heads, hidden):
    """Plain-JAX reference mirroring the PyTorch forward (eval mode)."""
    B, M, S, D = q.shape
    residual = q
    Qp = jnp.einsum("bmsd,mde->bmse", q, Wq).reshape(B, M, S, heads, hidden)
    Kp = jnp.einsum("bmsd,mde->bmse", k, Wk).reshape(B, M, S, heads, hidden)
    Vp = jnp.einsum("bmsd,mde->bmse", v, Wv).reshape(B, M, S, heads, hidden)
    Qp = jnp.swapaxes(Qp, 2, 3)   # (B, M, H, S, D)
    Kp = jnp.swapaxes(Kp, 2, 3)
    Vp = jnp.swapaxes(Vp, 2, 3)
    attn = jnp.einsum("bmhqd,bmhkd->bmhqk", Qp, Kp) / math.sqrt(hidden)
    attn = jax.nn.softmax(attn, axis=-1)
    out = jnp.einsum("bmhqk,bmhkd->bmhqd", attn, Vp)
    out = jnp.nanmean(out, axis=2) + residual
    return out


if __name__ == "__main__":
    # Small shapes consistent with the module's forward.
    B, M, S = 2, 3, 8
    hidden_nums = 32   # D
    heads = 4          # H
    dropout = 0.0      # eval-mode identity regardless

    key = jax.random.PRNGKey(0)
    kq, kk, kv, kwq, kwk, kwv = jax.random.split(key, 6)

    q = jax.random.normal(kq, (B, M, S, hidden_nums), dtype=jnp.float32)
    k = jax.random.normal(kk, (B, M, S, hidden_nums), dtype=jnp.float32)
    v = jax.random.normal(kv, (B, M, S, hidden_nums), dtype=jnp.float32)

    # Deterministic parameter init (torch.randn-like: standard normal).
    Wq = jax.random.normal(kwq, (M, hidden_nums, heads * hidden_nums), dtype=jnp.float32)
    Wk = jax.random.normal(kwk, (M, hidden_nums, heads * hidden_nums), dtype=jnp.float32)
    Wv = jax.random.normal(kwv, (M, hidden_nums, heads * hidden_nums), dtype=jnp.float32)

    out = mmts_forward(q, k, v, Wq, Wk, Wv)
    out = jax.block_until_ready(out)

    ref = mmts_reference(q, k, v, Wq, Wk, Wv, heads, hidden_nums)
    assert out.shape == (B, M, S, hidden_nums)
    assert jnp.allclose(out, ref, atol=1e-3, rtol=1e-3), "mismatch vs reference"

    print("KERNEL_OK")
</pallas_src>

<mosaic_0001>
module attributes {stable_mosaic.version = 11 : i64} {
  func.func @_mmts_kernel(%arg0: i32, %arg1: memref<2x1x8x32xf32, #tpu.memory_space<vmem>>, %arg2: memref<2x1x8x32xf32, #tpu.memory_space<vmem>>, %arg3: memref<2x1x8x32xf32, #tpu.memory_space<vmem>>, %arg4: memref<1x4x32x32xf32, #tpu.memory_space<vmem>>, %arg5: memref<1x4x32x32xf32, #tpu.memory_space<vmem>>, %arg6: memref<1x4x32x32xf32, #tpu.memory_space<vmem>>, %arg7: memref<2x1x8x32xf32, #tpu.memory_space<vmem>>) attributes {dimension_semantics = [#tpu.dimension_semantics<parallel>], iteration_bounds = array<i64: 3>, scalar_prefetch = 0 : i64, scratch_operands = 0 : i64, tpu.core_type = #tpu.core_type<tc>, window_params = [{transform_indices = @transform_0, window_bounds = array<i64: 2, 1, 8, 32>}, {transform_indices = @transform_1, window_bounds = array<i64: 2, 1, 8, 32>}, {transform_indices = @transform_2, window_bounds = array<i64: 2, 1, 8, 32>}, {transform_indices = @transform_3, window_bounds = array<i64: 1, 4, 32, 32>}, {transform_indices = @transform_4, window_bounds = array<i64: 1, 4, 32, 32>}, {transform_indices = @transform_5, window_bounds = array<i64: 1, 4, 32, 32>}, {transform_indices = @transform_6, window_bounds = array<i64: 2, 1, 8, 32>}]} {
    %c0 = arith.constant 0 : index
    %c0_0 = arith.constant 0 : index
    %c0_1 = arith.constant 0 : index
    %c0_2 = arith.constant 0 : index
    %0 = vector.load %arg1[%c0, %c0_0, %c0_1, %c0_2] : memref<2x1x8x32xf32, #tpu.memory_space<vmem>>, vector<2x1x8x32xf32>
    %1 = vector.shape_cast %0 : vector<2x1x8x32xf32> to vector<2x8x32xf32>
    %2 = vector.shape_cast %1 : vector<2x8x32xf32> to vector<16x32xf32>
    %c0_3 = arith.constant 0 : index
    %c0_4 = arith.constant 0 : index
    %c0_5 = arith.constant 0 : index
    %c0_6 = arith.constant 0 : index
    %3 = vector.load %arg2[%c0_3, %c0_4, %c0_5, %c0_6] : memref<2x1x8x32xf32, #tpu.memory_space<vmem>>, vector<2x1x8x32xf32>
    %4 = vector.shape_cast %3 : vector<2x1x8x32xf32> to vector<2x8x32xf32>
    %5 = vector.shape_cast %4 : vector<2x8x32xf32> to vector<16x32xf32>
    %c0_7 = arith.constant 0 : index
    %c0_8 = arith.constant 0 : index
    %c0_9 = arith.constant 0 : index
    %c0_10 = arith.constant 0 : index
    %6 = vector.load %arg3[%c0_7, %c0_8, %c0_9, %c0_10] : memref<2x1x8x32xf32, #tpu.memory_space<vmem>>, vector<2x1x8x32xf32>
    %7 = vector.shape_cast %6 : vector<2x1x8x32xf32> to vector<2x8x32xf32>
    %8 = vector.shape_cast %7 : vector<2x8x32xf32> to vector<16x32xf32>
    %cst = arith.constant 0.000000e+00 : f32
    %9 = vector.broadcast %cst : f32 to vector<16x32xf32>
    %cst_11 = arith.constant 0.000000e+00 : f32
    %10 = vector.broadcast %cst_11 : f32 to vector<16x32xf32>
    %c0_12 = arith.constant 0 : index
    %c0_13 = arith.constant 0 : index
    %c0_14 = arith.constant 0 : index
    %c0_15 = arith.constant 0 : index
    %11 = vector.load %arg4[%c0_12, %c0_13, %c0_14, %c0_15] : memref<1x4x32x32xf32, #tpu.memory_space<vmem>>, vector<1x1x32x32xf32>
    %12 = vector.shape_cast %11 : vector<1x1x32x32xf32> to vector<32x32xf32>
    %cst_16 = arith.constant dense<0.000000e+00> : vector<16x32xf32>
    %13 = tpu.matmul %2, %12, %cst_16 {dimension_numbers = #tpu.dot_dimension_numbers<[1], [0], [0], [1], [0, 0, 1, 1], [], []>} : vector<16x32xf32>, vector<32x32xf32>, vector<16x32xf32> -> vector<16x32xf32>
    %c0_17 = arith.constant 0 : index
    %c0_18 = arith.constant 0 : index
    %c0_19 = arith.constant 0 : index
    %c0_20 = arith.constant 0 : index
    %14 = vector.load %arg5[%c0_17, %c0_18, %c0_19, %c0_20] : memref<1x4x32x32xf32, #tpu.memory_space<vmem>>, vector<1x1x32x32xf32>
    %15 = vector.shape_cast %14 : vector<1x1x32x32xf32> to vector<32x32xf32>
    %cst_21 = arith.constant dense<0.000000e+00> : vector<16x32xf32>
    %16 = tpu.matmul %5, %15, %cst_21 {dimension_numbers = #tpu.dot_dimension_numbers<[1], [0], [0], [1], [0, 0, 1, 1], [], []>} : vector<16x32xf32>, vector<32x32xf32>, vector<16x32xf32> -> vector<16x32xf32>
    %c0_22 = arith.constant 0 : index
    %c0_23 = arith.constant 0 : index
    %c0_24 = arith.constant 0 : index
    %c0_25 = arith.constant 0 : index
    %17 = vector.load %arg6[%c0_22, %c0_23, %c0_24, %c0_25] : memref<1x4x32x32xf32, #tpu.memory_space<vmem>>, vector<1x1x32x32xf32>
    %18 = vector.shape_cast %17 : vector<1x1x32x32xf32> to vector<32x32xf32>
    %cst_26 = arith.constant dense<0.000000e+00> : vector<16x32xf32>
    %19 = tpu.matmul %8, %18, %cst_26 {dimension_numbers = #tpu.dot_dimension_numbers<[1], [0], [0], [1], [0, 0, 1, 1], [], []>} : vector<16x32xf32>, vector<32x32xf32>, vector<16x32xf32> -> vector<16x32xf32>
    %20 = vector.extract_strided_slice %13 {offsets = [0, 0], sizes = [8, 32], strides = [1, 1]} : vector<16x32xf32> to vector<8x32xf32>
    %21 = vector.extract_strided_slice %16 {offsets = [0, 0], sizes = [8, 32], strides = [1, 1]} : vector<16x32xf32> to vector<8x32xf32>
    %22 = vector.extract_strided_slice %19 {offsets = [0, 0], sizes = [8, 32], strides = [1, 1]} : vector<16x32xf32> to vector<8x32xf32>
    %cst_27 = arith.constant dense<0.000000e+00> : vector<8x8xf32>
    %23 = tpu.matmul %20, %21, %cst_27 {dimension_numbers = #tpu.dot_dimension_numbers<[1], [1], [0], [0], [0, 0, 1, 0], [], []>} : vector<8x32xf32>, vector<8x32xf32>, vector<8x8xf32> -> vector<8x8xf32>
    %cst_28 = arith.constant 0.176776692 : f32
    %24 = vector.broadcast %cst_28 : f32 to vector<8x8xf32>
    %25 = arith.mulf %23, %24 : vector<8x8xf32>
    %cst_29 = arith.constant dense<0xFF800000> : vector<8xf32>
    %26 = vector.multi_reduction <maximumf>, %25, %cst_29 [1] : vector<8x8xf32> to vector<8xf32>
    %27 = vector.shape_cast %26 : vector<8xf32> to vector<8x1xf32>
    %28 = vector.broadcast %27 : vector<8x1xf32> to vector<8x8xf32>
    %29 = arith.subf %25, %28 : vector<8x8xf32>
    %30 = math.exp %29 : vector<8x8xf32>
    %cst_30 = arith.constant dense<0.000000e+00> : vector<8xf32>
    %31 = vector.multi_reduction <add>, %30, %cst_30 [1] : vector<8x8xf32> to vector<8xf32>
    %32 = vector.shape_cast %31 : vector<8xf32> to vector<8x1xf32>
    %33 = tpu.reciprocal %32 : vector<8x1xf32> -> vector<8x1xf32>
    %34 = vector.broadcast %33 : vector<8x1xf32> to vector<8x8xf32>
    %35 = arith.mulf %30, %34 : vector<8x8xf32>
    %cst_31 = arith.constant dense<0.000000e+00> : vector<8x32xf32>
    %36 = tpu.matmul %35, %22, %cst_31 {dimension_numbers = #tpu.dot_dimension_numbers<[1], [0], [0], [1], [0, 0, 1, 1], [], []>} : vector<8x8xf32>, vector<8x32xf32>, vector<8x32xf32> -> vector<8x32xf32>
    %37 = vector.extract_strided_slice %13 {offsets = [8, 0], sizes = [8, 32], strides = [1, 1]} : vector<16x32xf32> to vector<8x32xf32>
    %38 = vector.extract_strided_slice %16 {offsets = [8, 0], sizes = [8, 32], strides = [1, 1]} : vector<16x32xf32> to vector<8x32xf32>
    %39 = vector.extract_strided_slice %19 {offsets = [8, 0], sizes = [8, 32], strides = [1, 1]} : vector<16x32xf32> to vector<8x32xf32>
    %cst_32 = arith.constant dense<0.000000e+00> : vector<8x8xf32>
    %40 = tpu.matmul %37, %38, %cst_32 {dimension_numbers = #tpu.dot_dimension_numbers<[1], [1], [0], [0], [0, 0, 1, 0], [], []>} : vector<8x32xf32>, vector<8x32xf32>, vector<8x8xf32> -> vector<8x8xf32>
    %cst_33 = arith.constant 0.176776692 : f32
    %41 = vector.broadcast %cst_33 : f32 to vector<8x8xf32>
    %42 = arith.mulf %40, %41 : vector<8x8xf32>
    %cst_34 = arith.constant dense<0xFF800000> : vector<8xf32>
    %43 = vector.multi_reduction <maximumf>, %42, %cst_34 [1] : vector<8x8xf32> to vector<8xf32>
    %44 = vector.shape_cast %43 : vector<8xf32> to vector<8x1xf32>
    %45 = vector.broadcast %44 : vector<8x1xf32> to vector<8x8xf32>
    %46 = arith.subf %42, %45 : vector<8x8xf32>
    %47 = math.exp %46 : vector<8x8xf32>
    %cst_35 = arith.constant dense<0.000000e+00> : vector<8xf32>
    %48 = vector.multi_reduction <add>, %47, %cst_35 [1] : vector<8x8xf32> to vector<8xf32>
    %49 = vector.shape_cast %48 : vector<8xf32> to vector<8x1xf32>
    %50 = tpu.reciprocal %49 : vector<8x1xf32> -> vector<8x1xf32>
    %51 = vector.broadcast %50 : vector<8x1xf32> to vector<8x8xf32>
    %52 = arith.mulf %47, %51 : vector<8x8xf32>
    %cst_36 = arith.constant dense<0.000000e+00> : vector<8x32xf32>
    %53 = tpu.matmul %52, %39, %cst_36 {dimension_numbers = #tpu.dot_dimension_numbers<[1], [0], [0], [1], [0, 0, 1, 1], [], []>} : vector<8x8xf32>, vector<8x32xf32>, vector<8x32xf32> -> vector<8x32xf32>
    %54 = tpu.concatenate %36, %53 in 0 : vector<8x32xf32>, vector<8x32xf32> -> vector<16x32xf32>
    %55 = arith.cmpf one, %54, %54 : vector<16x32xf32>
    %cst_37 = arith.constant 0.000000e+00 : f32
    %56 = vector.broadcast %cst_37 : f32 to vector<16x32xf32>
    %57 = arith.select %55, %56, %54 : vector<16x32xi1>, vector<16x32xf32>
    %58 = arith.addf %9, %57 : vector<16x32xf32>
    %cst_38 = arith.constant 0.000000e+00 : f32
    %cst_39 = arith.constant 1.000000e+00 : f32
    %59 = vector.broadcast %cst_38 : f32 to vector<16x32xf32>
    %60 = vector.broadcast %cst_39 : f32 to vector<16x32xf32>
    %61 = arith.select %55, %59, %60 : vector<16x32xi1>, vector<16x32xf32>
    %62 = arith.addf %10, %61 : vector<16x32xf32>
    %c0_40 = arith.constant 0 : index
    %c1 = arith.constant 1 : index
    %c0_41 = arith.constant 0 : index
    %c0_42 = arith.constant 0 : index
    %63 = vector.load %arg4[%c0_40, %c1, %c0_41, %c0_42] : memref<1x4x32x32xf32, #tpu.memory_space<vmem>>, vector<1x1x32x32xf32>
    %64 = vector.shape_cast %63 : vector<1x1x32x32xf32> to vector<32x32xf32>
    %cst_43 = arith.constant dense<0.000000e+00> : vector<16x32xf32>
    %65 = tpu.matmul %2, %64, %cst_43 {dimension_numbers = #tpu.dot_dimension_numbers<[1], [0], [0], [1], [0, 0, 1, 1], [], []>} : vector<16x32xf32>, vector<32x32xf32>, vector<16x32xf32> -> vector<16x32xf32>
    %c0_44 = arith.constant 0 : index
    %c1_45 = arith.constant 1 : index
    %c0_46 = arith.constant 0 : index
    %c0_47 = arith.constant 0 : index
    %66 = vector.load %arg5[%c0_44, %c1_45, %c0_46, %c0_47] : memref<1x4x32x32xf32, #tpu.memory_space<vmem>>, vector<1x1x32x32xf32>
    %67 = vector.shape_cast %66 : vector<1x1x32x32xf32> to vector<32x32xf32>
    %cst_48 = arith.constant dense<0.000000e+00> : vector<16x32xf32>
    %68 = tpu.matmul %5, %67, %cst_48 {dimension_numbers = #tpu.dot_dimension_numbers<[1], [0], [0], [1], [0, 0, 1, 1], [], []>} : vector<16x32xf32>, vector<32x32xf32>, vector<16x32xf32> -> vector<16x32xf32>
    %c0_49 = arith.constant 0 : index
    %c1_50 = arith.constant 1 : index
    %c0_51 = arith.constant 0 : index
    %c0_52 = arith.constant 0 : index
    %69 = vector.load %arg6[%c0_49, %c1_50, %c0_51, %c0_52] : memref<1x4x32x32xf32, #tpu.memory_space<vmem>>, vector<1x1x32x32xf32>
    %70 = vector.shape_cast %69 : vector<1x1x32x32xf32> to vector<32x32xf32>
    %cst_53 = arith.constant dense<0.000000e+00> : vector<16x32xf32>
    %71 = tpu.matmul %8, %70, %cst_53 {dimension_numbers = #tpu.dot_dimension_numbers<[1], [0], [0], [1], [0, 0, 1, 1], [], []>} : vector<16x32xf32>, vector<32x32xf32>, vector<16x32xf32> -> vector<16x32xf32>
    %72 = vector.extract_strided_slice %65 {offsets = [0, 0], sizes = [8, 32], strides = [1, 1]} : vector<16x32xf32> to vector<8x32xf32>
    %73 = vector.extract_strided_slice %68 {offsets = [0, 0], sizes = [8, 32], strides = [1, 1]} : vector<16x32xf32> to vector<8x32xf32>
    %74 = vector.extract_strided_slice %71 {offsets = [0, 0], sizes = [8, 32], strides = [1, 1]} : vector<16x32xf32> to vector<8x32xf32>
    %cst_54 = arith.constant dense<0.000000e+00> : vector<8x8xf32>
    %75 = tpu.matmul %72, %73, %cst_54 {dimension_numbers = #tpu.dot_dimension_numbers<[1], [1], [0], [0], [0, 0, 1, 0], [], []>} : vector<8x32xf32>, vector<8x32xf32>, vector<8x8xf32> -> vector<8x8xf32>
    %cst_55 = arith.constant 0.176776692 : f32
    %76 = vector.broadcast %cst_55 : f32 to vector<8x8xf32>
    %77 = arith.mulf %75, %76 : vector<8x8xf32>
    %cst_56 = arith.constant dense<0xFF800000> : vector<8xf32>
    %78 = vector.multi_reduction <maximumf>, %77, %cst_56 [1] : vector<8x8xf32> to vector<8xf32>
    %79 = vector.shape_cast %78 : vector<8xf32> to vector<8x1xf32>
    %80 = vector.broadcast %79 : vector<8x1xf32> to vector<8x8xf32>
    %81 = arith.subf %77, %80 : vector<8x8xf32>
    %82 = math.exp %81 : vector<8x8xf32>
    %cst_57 = arith.constant dense<0.000000e+00> : vector<8xf32>
    %83 = vector.multi_reduction <add>, %82, %cst_57 [1] : vector<8x8xf32> to vector<8xf32>
    %84 = vector.shape_cast %83 : vector<8xf32> to vector<8x1xf32>
    %85 = tpu.reciprocal %84 : vector<8x1xf32> -> vector<8x1xf32>
    %86 = vector.broadcast %85 : vector<8x1xf32> to vector<8x8xf32>
    %87 = arith.mulf %82, %86 : vector<8x8xf32>
    %cst_58 = arith.constant dense<0.000000e+00> : vector<8x32xf32>
    %88 = tpu.matmul %87, %74, %cst_58 {dimension_numbers = #tpu.dot_dimension_numbers<[1], [0], [0], [1], [0, 0, 1, 1], [], []>} : vector<8x8xf32>, vector<8x32xf32>, vector<8x32xf32> -> vector<8x32xf32>
    %89 = vector.extract_strided_slice %65 {offsets = [8, 0], sizes = [8, 32], strides = [1, 1]} : vector<16x32xf32> to vector<8x32xf32>
    %90 = vector.extract_strided_slice %68 {offsets = [8, 0], sizes = [8, 32], strides = [1, 1]} : vector<16x32xf32> to vector<8x32xf32>
    %91 = vector.extract_strided_slice %71 {offsets = [8, 0], sizes = [8, 32], strides = [1, 1]} : vector<16x32xf32> to vector<8x32xf32>
    %cst_59 = arith.constant dense<0.000000e+00> : vector<8x8xf32>
    %92 = tpu.matmul %89, %90, %cst_59 {dimension_numbers = #tpu.dot_dimension_numbers<[1], [1], [0], [0], [0, 0, 1, 0], [], []>} : vector<8x32xf32>, vector<8x32xf32>, vector<8x8xf32> -> vector<8x8xf32>
    %cst_60 = arith.constant 0.176776692 : f32
    %93 = vector.broadcast %cst_60 : f32 to vector<8x8xf32>
    %94 = arith.mulf %92, %93 : vector<8x8xf32>
    %cst_61 = arith.constant dense<0xFF800000> : vector<8xf32>
    %95 = vector.multi_reduction <maximumf>, %94, %cst_61 [1] : vector<8x8xf32> to vector<8xf32>
    %96 = vector.shape_cast %95 : vector<8xf32> to vector<8x1xf32>
    %97 = vector.broadcast %96 : vector<8x1xf32> to vector<8x8xf32>
    %98 = arith.subf %94, %97 : vector<8x8xf32>
    %99 = math.exp %98 : vector<8x8xf32>
    %cst_62 = arith.constant dense<0.000000e+00> : vector<8xf32>
    %100 = vector.multi_reduction <add>, %99, %cst_62 [1] : vector<8x8xf32> to vector<8xf32>
    %101 = vector.shape_cast %100 : vector<8xf32> to vector<8x1xf32>
    %102 = tpu.reciprocal %101 : vector<8x1xf32> -> vector<8x1xf32>
    %103 = vector.broadcast %102 : vector<8x1xf32> to vector<8x8xf32>
    %104 = arith.mulf %99, %103 : vector<8x8xf32>
    %cst_63 = arith.constant dense<0.000000e+00> : vector<8x32xf32>
    %105 = tpu.matmul %104, %91, %cst_63 {dimension_numbers = #tpu.dot_dimension_numbers<[1], [0], [0], [1], [0, 0, 1, 1], [], []>} : vector<8x8xf32>, vector<8x32xf32>, vector<8x32xf32> -> vector<8x32xf32>
    %106 = tpu.concatenate %88, %105 in 0 : vector<8x32xf32>, vector<8x32xf32> -> vector<16x32xf32>
    %107 = arith.cmpf one, %106, %106 : vector<16x32xf32>
    %cst_64 = arith.constant 0.000000e+00 : f32
    %108 = vector.broadcast %cst_64 : f32 to vector<16x32xf32>
    %109 = arith.select %107, %108, %106 : vector<16x32xi1>, vector<16x32xf32>
    %110 = arith.addf %58, %109 : vector<16x32xf32>
    %cst_65 = arith.constant 0.000000e+00 : f32
    %cst_66 = arith.constant 1.000000e+00 : f32
    %111 = vector.broadcast %cst_65 : f32 to vector<16x32xf32>
    %112 = vector.broadcast %cst_66 : f32 to vector<16x32xf32>
    %113 = arith.select %107, %111, %112 : vector<16x32xi1>, vector<16x32xf32>
    %114 = arith.addf %62, %113 : vector<16x32xf32>
    %c0_67 = arith.constant 0 : index
    %c2 = arith.constant 2 : index
    %c0_68 = arith.constant 0 : index
    %c0_69 = arith.constant 0 : index
    %115 = vector.load %arg4[%c0_67, %c2, %c0_68, %c0_69] : memref<1x4x32x32xf32, #tpu.memory_space<vmem>>, vector<1x1x32x32xf32>
    %116 = vector.shape_cast %115 : vector<1x1x32x32xf32> to vector<32x32xf32>
    %cst_70 = arith.constant dense<0.000000e+00> : vector<16x32xf32>
    %117 = tpu.matmul %2, %116, %cst_70 {dimension_numbers = #tpu.dot_dimension_numbers<[1], [0], [0], [1], [0, 0, 1, 1], [], []>} : vector<16x32xf32>, vector<32x32xf32>, vector<16x32xf32> -> vector<16x32xf32>
    %c0_71 = arith.constant 0 : index
    %c2_72 = arith.constant 2 : index
    %c0_73 = arith.constant 0 : index
    %c0_74 = arith.constant 0 : index
    %118 = vector.load %arg5[%c0_71, %c2_72, %c0_73, %c0_74] : memref<1x4x32x32xf32, #tpu.memory_space<vmem>>, vector<1x1x32x32xf32>
    %119 = vector.shape_cast %118 : vector<1x1x32x32xf32> to vector<32x32xf32>
    %cst_75 = arith.constant dense<0.000000e+00> : vector<16x32xf32>
    %120 = tpu.matmul %5, %119, %cst_75 {dimension_numbers = #tpu.dot_dimension_numbers<[1], [0], [0], [1], [0, 0, 1, 1], [], []>} : vector<16x32xf32>, vector<32x32xf32>, vector<16x32xf32> -> vector<16x32xf32>
    %c0_76 = arith.constant 0 : index
    %c2_77 = arith.constant 2 : index
    %c0_78 = arith.constant 0 : index
    %c0_79 = arith.constant 0 : index
    %121 = vector.load %arg6[%c0_76, %c2_77, %c0_78, %c0_79] : memref<1x4x32x32xf32, #tpu.memory_space<vmem>>, vector<1x1x32x32xf32>
    %122 = vector.shape_cast %121 : vector<1x1x32x32xf32> to vector<32x32xf32>
    %cst_80 = arith.constant dense<0.000000e+00> : vector<16x32xf32>
    %123 = tpu.matmul %8, %122, %cst_80 {dimension_numbers = #tpu.dot_dimension_numbers<[1], [0], [0], [1], [0, 0, 1, 1], [], []>} : vector<16x32xf32>, vector<32x32xf32>, vector<16x32xf32> -> vector<16x32xf32>
    %124 = vector.extract_strided_slice %117 {offsets = [0, 0], sizes = [8, 32], strides = [1, 1]} : vector<16x32xf32> to vector<8x32xf32>
    %125 = vector.extract_strided_slice %120 {offsets = [0, 0], sizes = [8, 32], strides = [1, 1]} : vector<16x32xf32> to vector<8x32xf32>
    %126 = vector.extract_strided_slice %123 {offsets = [0, 0], sizes = [8, 32], strides = [1, 1]} : vector<16x32xf32> to vector<8x32xf32>
    %cst_81 = arith.constant dense<0.000000e+00> : vector<8x8xf32>
    %127 = tpu.matmul %124, %125, %cst_81 {dimension_numbers = #tpu.dot_dimension_numbers<[1], [1], [0], [0], [0, 0, 1, 0], [], []>} : vector<8x32xf32>, vector<8x32xf32>, vector<8x8xf32> -> vector<8x8xf32>
    %cst_82 = arith.constant 0.176776692 : f32
    %128 = vector.broadcast %cst_82 : f32 to vector<8x8xf32>
    %129 = arith.mulf %127, %128 : vector<8x8xf32>
    %cst_83 = arith.constant dense<0xFF800000> : vector<8xf32>
    %130 = vector.multi_reduction <maximumf>, %129, %cst_83 [1] : vector<8x8xf32> to vector<8xf32>
    %131 = vector.shape_cast %130 : vector<8xf32> to vector<8x1xf32>
    %132 = vector.broadcast %131 : vector<8x1xf32> to vector<8x8xf32>
    %133 = arith.subf %129, %132 : vector<8x8xf32>
    %134 = math.exp %133 : vector<8x8xf32>
    %cst_84 = arith.constant dense<0.000000e+00> : vector<8xf32>
    %135 = vector.multi_reduction <add>, %134, %cst_84 [1] : vector<8x8xf32> to vector<8xf32>
    %136 = vector.shape_cast %135 : vector<8xf32> to vector<8x1xf32>
    %137 = tpu.reciprocal %136 : vector<8x1xf32> -> vector<8x1xf32>
    %138 = vector.broadcast %137 : vector<8x1xf32> to vector<8x8xf32>
    %139 = arith.mulf %134, %138 : vector<8x8xf32>
    %cst_85 = arith.constant dense<0.000000e+00> : vector<8x32xf32>
    %140 = tpu.matmul %139, %126, %cst_85 {dimension_numbers = #tpu.dot_dimension_numbers<[1], [0], [0], [1], [0, 0, 1, 1], [], []>} : vector<8x8xf32>, vector<8x32xf32>, vector<8x32xf32> -> vector<8x32xf32>
    %141 = vector.extract_strided_slice %117 {offsets = [8, 0], sizes = [8, 32], strides = [1, 1]} : vector<16x32xf32> to vector<8x32xf32>
    %142 = vector.extract_strided_slice %120 {offsets = [8, 0], sizes = [8, 32], strides = [1, 1]} : vector<16x32xf32> to vector<8x32xf32>
    %143 = vector.extract_strided_slice %123 {offsets = [8, 0], sizes = [8, 32], strides = [1, 1]} : vector<16x32xf32> to vector<8x32xf32>
    %cst_86 = arith.constant dense<0.000000e+00> : vector<8x8xf32>
    %144 = tpu.matmul %141, %142, %cst_86 {dimension_numbers = #tpu.dot_dimension_numbers<[1], [1], [0], [0], [0, 0, 1, 0], [], []>} : vector<8x32xf32>, vector<8x32xf32>, vector<8x8xf32> -> vector<8x8xf32>
    %cst_87 = arith.constant 0.176776692 : f32
    %145 = vector.broadcast %cst_87 : f32 to vector<8x8xf32>
    %146 = arith.mulf %144, %145 : vector<8x8xf32>
    %cst_88 = arith.constant dense<0xFF800000> : vector<8xf32>
    %147 = vector.multi_reduction <maximumf>, %146, %cst_88 [1] : vector<8x8xf32> to vector<8xf32>
    %148 = vector.shape_cast %147 : vector<8xf32> to vector<8x1xf32>
    %149 = vector.broadcast %148 : vector<8x1xf32> to vector<8x8xf32>
    %150 = arith.subf %146, %149 : vector<8x8xf32>
    %151 = math.exp %150 : vector<8x8xf32>
    %cst_89 = arith.constant dense<0.000000e+00> : vector<8xf32>
    %152 = vector.multi_reduction <add>, %151, %cst_89 [1] : vector<8x8xf32> to vector<8xf32>
    %153 = vector.shape_cast %152 : vector<8xf32> to vector<8x1xf32>
    %154 = tpu.reciprocal %153 : vector<8x1xf32> -> vector<8x1xf32>
    %155 = vector.broadcast %154 : vector<8x1xf32> to vector<8x8xf32>
    %156 = arith.mulf %151, %155 : vector<8x8xf32>
    %cst_90 = arith.constant dense<0.000000e+00> : vector<8x32xf32>
    %157 = tpu.matmul %156, %143, %cst_90 {dimension_numbers = #tpu.dot_dimension_numbers<[1], [0], [0], [1], [0, 0, 1, 1], [], []>} : vector<8x8xf32>, vector<8x32xf32>, vector<8x32xf32> -> vector<8x32xf32>
    %158 = tpu.concatenate %140, %157 in 0 : vector<8x32xf32>, vector<8x32xf32> -> vector<16x32xf32>
    %159 = arith.cmpf one, %158, %158 : vector<16x32xf32>
    %cst_91 = arith.constant 0.000000e+00 : f32
    %160 = vector.broadcast %cst_91 : f32 to vector<16x32xf32>
    %161 = arith.select %159, %160, %158 : vector<16x32xi1>, vector<16x32xf32>
    %162 = arith.addf %110, %161 : vector<16x32xf32>
    %cst_92 = arith.constant 0.000000e+00 : f32
    %cst_93 = arith.constant 1.000000e+00 : f32
    %163 = vector.broadcast %cst_92 : f32 to vector<16x32xf32>
    %164 = vector.broadcast %cst_93 : f32 to vector<16x32xf32>
    %165 = arith.select %159, %163, %164 : vector<16x32xi1>, vector<16x32xf32>
    %166 = arith.addf %114, %165 : vector<16x32xf32>
    %c0_94 = arith.constant 0 : index
    %c3 = arith.constant 3 : index
    %c0_95 = arith.constant 0 : index
    %c0_96 = arith.constant 0 : index
    %167 = vector.load %arg4[%c0_94, %c3, %c0_95, %c0_96] : memref<1x4x32x32xf32, #tpu.memory_space<vmem>>, vector<1x1x32x32xf32>
    %168 = vector.shape_cast %167 : vector<1x1x32x32xf32> to vector<32x32xf32>
    %cst_97 = arith.constant dense<0.000000e+00> : vector<16x32xf32>
    %169 = tpu.matmul %2, %168, %cst_97 {dimension_numbers = #tpu.dot_dimension_numbers<[1], [0], [0], [1], [0, 0, 1, 1], [], []>} : vector<16x32xf32>, vector<32x32xf32>, vector<16x32xf32> -> vector<16x32xf32>
    %c0_98 = arith.constant 0 : index
    %c3_99 = arith.constant 3 : index
    %c0_100 = arith.constant 0 : index
    %c0_101 = arith.constant 0 : index
    %170 = vector.load %arg5[%c0_98, %c3_99, %c0_100, %c0_101] : memref<1x4x32x32xf32, #tpu.memory_space<vmem>>, vector<1x1x32x32xf32>
    %171 = vector.shape_cast %170 : vector<1x1x32x32xf32> to vector<32x32xf32>
    %cst_102 = arith.constant dense<0.000000e+00> : vector<16x32xf32>
    %172 = tpu.matmul %5, %171, %cst_102 {dimension_numbers = #tpu.dot_dimension_numbers<[1], [0], [0], [1], [0, 0, 1, 1], [], []>} : vector<16x32xf32>, vector<32x32xf32>, vector<16x32xf32> -> vector<16x32xf32>
    %c0_103 = arith.constant 0 : index
    %c3_104 = arith.constant 3 : index
    %c0_105 = arith.constant 0 : index
    %c0_106 = arith.constant 0 : index
    %173 = vector.load %arg6[%c0_103, %c3_104, %c0_105, %c0_106] : memref<1x4x32x32xf32, #tpu.memory_space<vmem>>, vector<1x1x32x32xf32>
    %174 = vector.shape_cast %173 : vector<1x1x32x32xf32> to vector<32x32xf32>
    %cst_107 = arith.constant dense<0.000000e+00> : vector<16x32xf32>
    %175 = tpu.matmul %8, %174, %cst_107 {dimension_numbers = #tpu.dot_dimension_numbers<[1], [0], [0], [1], [0, 0, 1, 1], [], []>} : vector<16x32xf32>, vector<32x32xf32>, vector<16x32xf32> -> vector<16x32xf32>
    %176 = vector.extract_strided_slice %169 {offsets = [0, 0], sizes = [8, 32], strides = [1, 1]} : vector<16x32xf32> to vector<8x32xf32>
    %177 = vector.extract_strided_slice %172 {offsets = [0, 0], sizes = [8, 32], strides = [1, 1]} : vector<16x32xf32> to vector<8x32xf32>
    %178 = vector.extract_strided_slice %175 {offsets = [0, 0], sizes = [8, 32], strides = [1, 1]} : vector<16x32xf32> to vector<8x32xf32>
    %cst_108 = arith.constant dense<0.000000e+00> : vector<8x8xf32>
    %179 = tpu.matmul %176, %177, %cst_108 {dimension_numbers = #tpu.dot_dimension_numbers<[1], [1], [0], [0], [0, 0, 1, 0], [], []>} : vector<8x32xf32>, vector<8x32xf32>, vector<8x8xf32> -> vector<8x8xf32>
    %cst_109 = arith.constant 0.176776692 : f32
    %180 = vector.broadcast %cst_109 : f32 to vector<8x8xf32>
    %181 = arith.mulf %179, %180 : vector<8x8xf32>
    %cst_110 = arith.constant dense<0xFF800000> : vector<8xf32>
    %182 = vector.multi_reduction <maximumf>, %181, %cst_110 [1] : vector<8x8xf32> to vector<8xf32>
    %183 = vector.shape_cast %182 : vector<8xf32> to vector<8x1xf32>
    %184 = vector.broadcast %183 : vector<8x1xf32> to vector<8x8xf32>
    %185 = arith.subf %181, %184 : vector<8x8xf32>
    %186 = math.exp %185 : vector<8x8xf32>
    %cst_111 = arith.constant dense<0.000000e+00> : vector<8xf32>
    %187 = vector.multi_reduction <add>, %186, %cst_111 [1] : vector<8x8xf32> to vector<8xf32>
    %188 = vector.shape_cast %187 : vector<8xf32> to vector<8x1xf32>
    %189 = tpu.reciprocal %188 : vector<8x1xf32> -> vector<8x1xf32>
    %190 = vector.broadcast %189 : vector<8x1xf32> to vector<8x8xf32>
    %191 = arith.mulf %186, %190 : vector<8x8xf32>
    %cst_112 = arith.constant dense<0.000000e+00> : vector<8x32xf32>
    %192 = tpu.matmul %191, %178, %cst_112 {dimension_numbers = #tpu.dot_dimension_numbers<[1], [0], [0], [1], [0, 0, 1, 1], [], []>} : vector<8x8xf32>, vector<8x32xf32>, vector<8x32xf32> -> vector<8x32xf32>
    %193 = vector.extract_strided_slice %169 {offsets = [8, 0], sizes = [8, 32], strides = [1, 1]} : vector<16x32xf32> to vector<8x32xf32>
    %194 = vector.extract_strided_slice %172 {offsets = [8, 0], sizes = [8, 32], strides = [1, 1]} : vector<16x32xf32> to vector<8x32xf32>
    %195 = vector.extract_strided_slice %175 {offsets = [8, 0], sizes = [8, 32], strides = [1, 1]} : vector<16x32xf32> to vector<8x32xf32>
    %cst_113 = arith.constant dense<0.000000e+00> : vector<8x8xf32>
    %196 = tpu.matmul %193, %194, %cst_113 {dimension_numbers = #tpu.dot_dimension_numbers<[1], [1], [0], [0], [0, 0, 1, 0], [], []>} : vector<8x32xf32>, vector<8x32xf32>, vector<8x8xf32> -> vector<8x8xf32>
    %cst_114 = arith.constant 0.176776692 : f32
    %197 = vector.broadcast %cst_114 : f32 to vector<8x8xf32>
    %198 = arith.mulf %196, %197 : vector<8x8xf32>
    %cst_115 = arith.constant dense<0xFF800000> : vector<8xf32>
    %199 = vector.multi_reduction <maximumf>, %198, %cst_115 [1] : vector<8x8xf32> to vector<8xf32>
    %200 = vector.shape_cast %199 : vector<8xf32> to vector<8x1xf32>
    %201 = vector.broadcast %200 : vector<8x1xf32> to vector<8x8xf32>
    %202 = arith.subf %198, %201 : vector<8x8xf32>
    %203 = math.exp %202 : vector<8x8xf32>
    %cst_116 = arith.constant dense<0.000000e+00> : vector<8xf32>
    %204 = vector.multi_reduction <add>, %203, %cst_116 [1] : vector<8x8xf32> to vector<8xf32>
    %205 = vector.shape_cast %204 : vector<8xf32> to vector<8x1xf32>
    %206 = tpu.reciprocal %205 : vector<8x1xf32> -> vector<8x1xf32>
    %207 = vector.broadcast %206 : vector<8x1xf32> to vector<8x8xf32>
    %208 = arith.mulf %203, %207 : vector<8x8xf32>
    %cst_117 = arith.constant dense<0.000000e+00> : vector<8x32xf32>
    %209 = tpu.matmul %208, %195, %cst_117 {dimension_numbers = #tpu.dot_dimension_numbers<[1], [0], [0], [1], [0, 0, 1, 1], [], []>} : vector<8x8xf32>, vector<8x32xf32>, vector<8x32xf32> -> vector<8x32xf32>
    %210 = tpu.concatenate %192, %209 in 0 : vector<8x32xf32>, vector<8x32xf32> -> vector<16x32xf32>
    %211 = arith.cmpf one, %210, %210 : vector<16x32xf32>
    %cst_118 = arith.constant 0.000000e+00 : f32
    %212 = vector.broadcast %cst_118 : f32 to vector<16x32xf32>
    %213 = arith.select %211, %212, %210 : vector<16x32xi1>, vector<16x32xf32>
    %214 = arith.addf %162, %213 : vector<16x32xf32>
    %cst_119 = arith.constant 0.000000e+00 : f32
    %cst_120 = arith.constant 1.000000e+00 : f32
    %215 = vector.broadcast %cst_119 : f32 to vector<16x32xf32>
    %216 = vector.broadcast %cst_120 : f32 to vector<16x32xf32>
    %217 = arith.select %211, %215, %216 : vector<16x32xi1>, vector<16x32xf32>
    %218 = arith.addf %166, %217 : vector<16x32xf32>
    %219 = arith.divf %214, %218 : vector<16x32xf32>
    %220 = arith.addf %219, %2 : vector<16x32xf32>
    %221 = vector.shape_cast %220 : vector<16x32xf32> to vector<2x8x32xf32>
    %c0_121 = arith.constant 0 : index
    %c0_122 = arith.constant 0 : index
    %c0_123 = arith.constant 0 : index
    %c0_124 = arith.constant 0 : index
    %222 = vector.load %arg7[%c0_121, %c0_122, %c0_123, %c0_124] : memref<2x1x8x32xf32, #tpu.memory_space<vmem>>, vector<2x1x8x32xf32>
    %223 = vector.shape_cast %222 : vector<2x1x8x32xf32> to vector<2x8x32xf32>
    %224 = vector.shape_cast %221 : vector<2x8x32xf32> to vector<2x1x8x32xf32>
    tpu.vector_store %arg7[%c0_121, %c0_122, %c0_123, %c0_124], %224 {strides = array<i32>} : memref<2x1x8x32xf32, #tpu.memory_space<vmem>>, vector<2x1x8x32xf32>,
    return
  }
  func.func @transform_0(%arg0: i32) -> (i32, i32, i32, i32) {
    %c0_i32 = arith.constant 0 : i32
    %c0_i32_0 = arith.constant 0 : i32
    %c0_i32_1 = arith.constant 0 : i32
    %c0_i32_2 = arith.constant 0 : i32
    return %c0_i32, %arg0, %c0_i32_0, %c0_i32_1 : i32, i32, i32, i32
  }
  func.func @transform_1(%arg0: i32) -> (i32, i32, i32, i32) {
    %c0_i32 = arith.constant 0 : i32
    %c0_i32_0 = arith.constant 0 : i32
    %c0_i32_1 = arith.constant 0 : i32
    %c0_i32_2 = arith.constant 0 : i32
    return %c0_i32, %arg0, %c0_i32_0, %c0_i32_1 : i32, i32, i32, i32
  }
  func.func @transform_2(%arg0: i32) -> (i32, i32, i32, i32) {
    %c0_i32 = arith.constant 0 : i32
    %c0_i32_0 = arith.constant 0 : i32
    %c0_i32_1 = arith.constant 0 : i32
    %c0_i32_2 = arith.constant 0 : i32
    return %c0_i32, %arg0, %c0_i32_0, %c0_i32_1 : i32, i32, i32, i32
  }
  func.func @transform_3(%arg0: i32) -> (i32, i32, i32, i32) {
    %c0_i32 = arith.constant 0 : i32
    %c0_i32_0 = arith.constant 0 : i32
    %c0_i32_1 = arith.constant 0 : i32
    %c0_i32_2 = arith.constant 0 : i32
    return %arg0, %c0_i32, %c0_i32_0, %c0_i32_1 : i32, i32, i32, i32
  }
  func.func @transform_4(%arg0: i32) -> (i32, i32, i32, i32) {
    %c0_i32 = arith.constant 0 : i32
    %c0_i32_0 = arith.constant 0 : i32
    %c0_i32_1 = arith.constant 0 : i32
    %c0_i32_2 = arith.constant 0 : i32
    return %arg0, %c0_i32, %c0_i32_0, %c0_i32_1 : i32, i32, i32, i32
  }
  func.func @transform_5(%arg0: i32) -> (i32, i32, i32, i32) {
    %c0_i32 = arith.constant 0 : i32
    %c0_i32_0 = arith.constant 0 : i32
    %c0_i32_1 = arith.constant 0 : i32
    %c0_i32_2 = arith.constant 0 : i32
    return %arg0, %c0_i32, %c0_i32_0, %c0_i32_1 : i32, i32, i32, i32
  }
  func.func @transform_6(%arg0: i32) -> (i32, i32, i32, i32) {
    %c0_i32 = arith.constant 0 : i32
    %c0_i32_0 = arith.constant 0 : i32
    %c0_i32_1 = arith.constant 0 : i32
    %c0_i32_2 = arith.constant 0 : i32
    return %c0_i32, %arg0, %c0_i32_0, %c0_i32_1 : i32, i32, i32, i32
  }
}

</mosaic_0001>

<llo_original>
// kernel: tpu_custom_call.1
$region0: #{tpu_custom_call.1}
  #allocation0 [shape = 'u32[]', space=smem, size = 0x4, offset = 0x4, fixed_abs, tag = 'smem constant byte address 0x4 - core index']
  #allocation1 [shape = 'u32[144,128]{1,0:T(1,128)}', space=vmem, size = 0x12000, scoped, tag = 'internal scratch']
  %s0 = inlined_call_operand.hbm [shape: f32[2,3,8,32], index: 0, kind: input, shape index: {}]
  %s1 = inlined_call_operand.hbm [shape: f32[2,3,8,32], index: 1, kind: input, shape index: {}]
  %s2 = inlined_call_operand.hbm [shape: f32[2,3,8,32], index: 2, kind: input, shape index: {}]
  %s3 = inlined_call_operand.hbm [shape: f32[3,4,32,32], index: 3, kind: input, shape index: {}]
  %s4 = inlined_call_operand.hbm [shape: f32[3,4,32,32], index: 4, kind: input, shape index: {}]
  %s5 = inlined_call_operand.hbm [shape: f32[3,4,32,32], index: 5, kind: input, shape index: {}]
  %s6 = inlined_call_operand.hbm [shape: f32[2,3,8,32], index: 6, kind: output, shape index: {}]
  %s7 = sld [smem:[#allocation0]]
  $region81: #{tpu_custom_call.1} parent=0
    _
  %s9 = ssub.s32 1, %s7
  %s10 = scalar_select 0, %s9, %s7
  $region1: #{tpu_custom_call.1} parent=0
    #allocation2 [shape = 'u8[16384]{0}', space=vmem, size = 0x4000, scoped, tag = 'input window, operand 0']
    #allocation3 [shape = 's32[2]{0}', space=sflag, size = 0x8, scoped, tag = 'scoped memory for tpu_custom_call.1']
    #allocation4 [shape = 's32[2]{0}', space=sflag, size = 0x8, scoped, tag = 'scoped memory for tpu_custom_call.1']
    #allocation5 [shape = 'u8[16384]{0}', space=vmem, size = 0x4000, scoped, tag = 'input window, operand 1']
    #allocation6 [shape = 's32[2]{0}', space=sflag, size = 0x8, scoped, tag = 'scoped memory for tpu_custom_call.1']
    #allocation7 [shape = 'u8[16384]{0}', space=vmem, size = 0x4000, scoped, tag = 'input window, operand 2']
    #allocation8 [shape = 'u8[131072]{0}', space=vmem, size = 0x20000, scoped, tag = 'input window, operand 3']
    #allocation9 [shape = 's32[2]{0}', space=sflag, size = 0x8, scoped, tag = 'scoped memory for tpu_custom_call.1']
    #allocation10 [shape = 'u8[131072]{0}', space=vmem, size = 0x20000, scoped, tag = 'input window, operand 4']
    #allocation11 [shape = 'u8[131072]{0}', space=vmem, size = 0x20000, scoped, tag = 'input window, operand 5']
    #allocation12 [shape = 's32[2]{0}', space=sflag, size = 0x8, scoped, tag = 'scoped memory for tpu_custom_call.1']
    #allocation13 [shape = 'u8[16384]{0}', space=vmem, size = 0x4000, scoped, tag = 'output window, operand 0']
    %11 = vsyncpa [#allocation3], 0
    %s12 = scalar_lea.sflag [#allocation3], 1
    %13 = vsyncpa %s12, 0
    %14 = vsyncpa [#allocation6], 0
    %s15 = scalar_lea.sflag [#allocation6], 1
    %16 = vsyncpa %s15, 0
    %17 = vsyncpa [#allocation9], 0
    %s18 = scalar_lea.sflag [#allocation9], 1
    %19 = vsyncpa %s18, 0
    %20 = vsyncpa [#allocation12], 0
    %s21 = scalar_lea.sflag [#allocation12], 1
    %22 = vsyncpa %s21, 0
    %23 = vsyncpa [#allocation4], 0
    %s24 = scalar_lea.sflag [#allocation4], 1
    %25 = vsyncpa %s24, 0
    loop: start=0, step=1, limit=5
    $region2: #{tpu_custom_call.1} parent=1 // loop_pre_header
      _
    $region3: #{tpu_custom_call.1} parent=1 // loop_header
      %s27 = sphi 0, %s31
      %p28 = scmp.ge.s32.totalorder %s27, 5
      %s37 = sphi 0, %s39
      %s40 = sphi 0, %s37
      %s41 = sphi 0, %s40
      %s57 = sphi 0, %s41
      %s63 = sphi 0, %s65
      %s66 = sphi 0, %s63
      %s67 = sphi 0, %s66
      %s83 = sphi 0, %s67
      %s89 = sphi 0, %s91
      %s92 = sphi 0, %s89
      %s93 = sphi 0, %s92
      %s109 = sphi 0, %s93
      %s115 = sphi 0, %s117
      %s118 = sphi 0, %s115
      %s119 = sphi 0, %s118
      %s135 = sphi 0, %s119
      %s141 = sphi 0, %s143
      %s144 = sphi 0, %s141
      %s145 = sphi 0, %s144
      %s161 = sphi 0, %s145
      %s167 = sphi 0, %s169
      %s170 = sphi 0, %s167
      %s171 = sphi 0, %s170
      %s187 = sphi 0, %s171
      %s193 = sphi 0, %s195
      %s196 = sphi 0, %s193
      %s197 = sphi 0, %s196
      %s213 = sphi 0, %s197
    $region4: #{tpu_custom_call.1} parent=1 // loop_header_branch
      %30 = sbr.rel (%p28) target = $region8
    $region5: #{tpu_custom_call.1} parent=1 // loop_body
      %s32 = ssub.s32 %s27, 1
      %s33 = ssub.s32 %s27, 2
      %s34 = sadd.s32 %s27, 1
      %s35 = ssub.s32 %s27, %s34
      %p36 = scmp.eq.s32.totalorder %s35, 0
      %s38 = sadd.s32 %s37, 1
      %s39 = scalar_select %p36, %s37, %s38
      %p42 = pneg %p36
      %p43 = scmp.eq.s32.totalorder %s27, 2
      %p44 = por %p42, %p43
      %p45 = scmp.ne.s32.totalorder %s37, %s40
      %p46 = scmp.eq.s32.totalorder %s27, 0
      %p47 = por %p45, %p46
      %p48 = scmp.ne.s32.totalorder %s37, %s40
      %p49 = scmp.eq.s32.totalorder %s32, 2
      %p50 = por %p48, %p49
      %p51 = scmp.ne.s32.totalorder %s40, %s41
      %p52 = scmp.eq.s32.totalorder %s32, 0
      %p53 = por %p51, %p52
      %p54 = scmp.ne.s32.totalorder %s40, %s41
      %p55 = scmp.eq.s32.totalorder %s33, 2
      %p56 = por %p54, %p55
      %p58 = scmp.ne.s32.totalorder %s41, %s57
      %p59 = scmp.eq.s32.totalorder %s33, 0
      %p60 = por %p58, %p59
      %s61 = ssub.s32 %s27, %s34
      %p62 = scmp.eq.s32.totalorder %s61, 0
      %s64 = sadd.s32 %s63, 1
      %s65 = scalar_select %p62, %s63, %s64
      %p68 = pneg %p62
      %p69 = scmp.eq.s32.totalorder %s27, 2
      %p70 = por %p68, %p69
      %p71 = scmp.ne.s32.totalorder %s63, %s66
      %p72 = scmp.eq.s32.totalorder %s27, 0
      %p73 = por %p71, %p72
      %p74 = scmp.ne.s32.totalorder %s63, %s66
      %p75 = scmp.eq.s32.totalorder %s32, 2
      %p76 = por %p74, %p75
      %p77 = scmp.ne.s32.totalorder %s66, %s67
      %p78 = scmp.eq.s32.totalorder %s32, 0
      %p79 = por %p77, %p78
      %p80 = scmp.ne.s32.totalorder %s66, %s67
      %p81 = scmp.eq.s32.totalorder %s33, 2
      %p82 = por %p80, %p81
      %p84 = scmp.ne.s32.totalorder %s67, %s83
      %p85 = scmp.eq.s32.totalorder %s33, 0
      %p86 = por %p84, %p85
      %s87 = ssub.s32 %s27, %s34
      %p88 = scmp.eq.s32.totalorder %s87, 0
      %s90 = sadd.s32 %s89, 1
      %s91 = scalar_select %p88, %s89, %s90
      %p94 = pneg %p88
      %p95 = scmp.eq.s32.totalorder %s27, 2
      %p96 = por %p94, %p95
      %p97 = scmp.ne.s32.totalorder %s89, %s92
      %p98 = scmp.eq.s32.totalorder %s27, 0
      %p99 = por %p97, %p98
      %p100 = scmp.ne.s32.totalorder %s89, %s92
      %p101 = scmp.eq.s32.totalorder %s32, 2
      %p102 = por %p100, %p101
      %p103 = scmp.ne.s32.totalorder %s92, %s93
      %p104 = scmp.eq.s32.totalorder %s32, 0
      %p105 = por %p103, %p104
      %p106 = scmp.ne.s32.totalorder %s92, %s93
      %p107 = scmp.eq.s32.totalorder %s33, 2
      %p108 = por %p106, %p107
      %p110 = scmp.ne.s32.totalorder %s93, %s109
      %p111 = scmp.eq.s32.totalorder %s33, 0
      %p112 = por %p110, %p111
      %s113 = ssub.s32 %s27, %s34
      %p114 = scmp.eq.s32.totalorder %s113, 0
      %s116 = sadd.s32 %s115, 1
      %s117 = scalar_select %p114, %s115, %s116
      %p120 = pneg %p114
      %p121 = scmp.eq.s32.totalorder %s27, 2
      %p122 = por %p120, %p121
      %p123 = scmp.ne.s32.totalorder %s115, %s118
      %p124 = scmp.eq.s32.totalorder %s27, 0
      %p125 = por %p123, %p124
      %p126 = scmp.ne.s32.totalorder %s115, %s118
      %p127 = scmp.eq.s32.totalorder %s32, 2
      %p128 = por %p126, %p127
      %p129 = scmp.ne.s32.totalorder %s118, %s119
      %p130 = scmp.eq.s32.totalorder %s32, 0
      %p131 = por %p129, %p130
      %p132 = scmp.ne.s32.totalorder %s118, %s119
      %p133 = scmp.eq.s32.totalorder %s33, 2
      %p134 = por %p132, %p133
      %p136 = scmp.ne.s32.totalorder %s119, %s135
      %p137 = scmp.eq.s32.totalorder %s33, 0
      %p138 = por %p136, %p137
      %s139 = ssub.s32 %s27, %s34
      %p140 = scmp.eq.s32.totalorder %s139, 0
      %s142 = sadd.s32 %s141, 1
      %s143 = scalar_select %p140, %s141, %s142
      %p146 = pneg %p140
      %p147 = scmp.eq.s32.totalorder %s27, 2
      %p148 = por %p146, %p147
      %p149 = scmp.ne.s32.totalorder %s141, %s144
      %p150 = scmp.eq.s32.totalorder %s27, 0
      %p151 = por %p149, %p150
      %p152 = scmp.ne.s32.totalorder %s141, %s144
      %p153 = scmp.eq.s32.totalorder %s32, 2
      %p154 = por %p152, %p153
      %p155 = scmp.ne.s32.totalorder %s144, %s145
      %p156 = scmp.eq.s32.totalorder %s32, 0
      %p157 = por %p155, %p156
      %p158 = scmp.ne.s32.totalorder %s144, %s145
      %p159 = scmp.eq.s32.totalorder %s33, 2
      %p160 = por %p158, %p159
      %p162 = scmp.ne.s32.totalorder %s145, %s161
      %p163 = scmp.eq.s32.totalorder %s33, 0
      %p164 = por %p162, %p163
      %s165 = ssub.s32 %s27, %s34
      %p166 = scmp.eq.s32.totalorder %s165, 0
      %s168 = sadd.s32 %s167, 1
      %s169 = scalar_select %p166, %s167, %s168
      %p172 = pneg %p166
      %p173 = scmp.eq.s32.totalorder %s27, 2
      %p174 = por %p172, %p173
      %p175 = scmp.ne.s32.totalorder %s167, %s170
      %p176 = scmp.eq.s32.totalorder %s27, 0
      %p177 = por %p175, %p176
      %p178 = scmp.ne.s32.totalorder %s167, %s170
      %p179 = scmp.eq.s32.totalorder %s32, 2
      %p180 = por %p178, %p179
      %p181 = scmp.ne.s32.totalorder %s170, %s171
      %p182 = scmp.eq.s32.totalorder %s32, 0
      %p183 = por %p181, %p182
      %p184 = scmp.ne.s32.totalorder %s170, %s171
      %p185 = scmp.eq.s32.totalorder %s33, 2
      %p186 = por %p184, %p185
      %p188 = scmp.ne.s32.totalorder %s171, %s187
      %p189 = scmp.eq.s32.totalorder %s33, 0
      %p190 = por %p188, %p189
      %s191 = ssub.s32 %s27, %s34
      %p192 = scmp.eq.s32.totalorder %s191, 0
      %s194 = sadd.s32 %s193, 1
      %s195 = scalar_select %p192, %s193, %s194
      %p198 = pneg %p192
      %p199 = scmp.eq.s32.totalorder %s27, 2
      %p200 = por %p198, %p199
      %p201 = scmp.ne.s32.totalorder %s193, %s196
      %p202 = scmp.eq.s32.totalorder %s27, 0
      %p203 = por %p201, %p202
      %p204 = scmp.ne.s32.totalorder %s193, %s196
      %p205 = scmp.eq.s32.totalorder %s32, 2
      %p206 = por %p204, %p205
      %p207 = scmp.ne.s32.totalorder %s196, %s197
      %p208 = scmp.eq.s32.totalorder %s32, 0
      %p209 = por %p207, %p208
      %p210 = scmp.ne.s32.totalorder %s196, %s197
      %p211 = scmp.eq.s32.totalorder %s33, 2
      %p212 = por %p210, %p211
      %p214 = scmp.ne.s32.totalorder %s197, %s213
      %p215 = scmp.eq.s32.totalorder %s33, 0
      %p216 = por %p214, %p215
      %p217 = scmp.le.s32.totalorder 1, %s27
      %p218 = scmp.lt.s32.totalorder %s27, 4
      %p219 = pnand %p217, %p218
      %p220 = pneg %p219
      // Predicated region
      $region9: #{tpu_custom_call.1} parent=5 // pred_check
        _
      $region10: #{tpu_custom_call.1} parent=5 // pred_check_branch
        %222 = sbr.rel (%p219) target = $region12
      $region11: #{tpu_custom_call.1} parent=5 // pred_region
        %s223 = ssub.s32 %s27, 1
      $region12: #{tpu_custom_call.1} parent=5 // pred_fallthru
        _
      %p224 = scmp.lt.s32.totalorder %s27, 3
      // Predicated region
      $region13: #{tpu_custom_call.1} parent=5 // pred_check
        %p225 = pneg %p224
      $region14: #{tpu_custom_call.1} parent=5 // pred_check_branch
        %227 = sbr.rel (%p225) target = $region16
      $region15: #{tpu_custom_call.1} parent=5 // pred_region
        // Predicated region
        $region17: #{tpu_custom_call.1} parent=15 // pred_check
          %p228 = pneg %p47
        $region18: #{tpu_custom_call.1} parent=15 // pred_check_branch
          %230 = sbr.rel (%p228) target = $region20
        $region19: #{tpu_custom_call.1} parent=15 // pred_region
          %s231 = sand.u32 %s37, 1
          %s232 = scalar_lea.sflag [#allocation3], %s231
          %s233 = sand.u32 %s37, 1
          %s234 = smul.addr %s233, 16
          %s235 = scalar_lea.vmem [#allocation2], %s234
          %s237 = ssub.s32 256, 256
          %238 = vsyncadd %s232, %s237
          %s239 = smul.addr %s27, 128
          %s240 = scalar_lea.hbm %s0, %s239
          %s241 = sshll.u32 %s235, 4
          %s242 = int_to_ptr.vmem [resolvable:$true] %s241
          %247 = dma.hbm_to_vmem [thread:$0]  %s240, 256, %s242, %s232, 384, 128, 8
        $region20: #{tpu_custom_call.1} parent=15 // pred_fallthru
          _
        // Predicated region
        $region21: #{tpu_custom_call.1} parent=15 // pred_check
          %p248 = pneg %p73
        $region22: #{tpu_custom_call.1} parent=15 // pred_check_branch
          %250 = sbr.rel (%p248) target = $region24
        $region23: #{tpu_custom_call.1} parent=15 // pred_region
          %s251 = sand.u32 %s27, 1
          %s252 = scalar_lea.sflag [#allocation6], %s251
          %s253 = sand.u32 %s63, 1
          %s254 = smul.addr %s253, 16
          %s255 = scalar_lea.vmem [#allocation5], %s254
          %s257 = ssub.s32 256, 256
          %258 = vsyncadd %s252, %s257
          %s259 = smul.addr %s27, 128
          %s260 = scalar_lea.hbm %s1, %s259
          %s261 = sshll.u32 %s255, 4
          %s262 = int_to_ptr.vmem [resolvable:$true] %s261
          %267 = dma.hbm_to_vmem [thread:$0]  %s260, 256, %s262, %s252, 384, 128, 8
        $region24: #{tpu_custom_call.1} parent=15 // pred_fallthru
          _
        // Predicated region
        $region25: #{tpu_custom_call.1} parent=15 // pred_check
          %p268 = pneg %p99
        $region26: #{tpu_custom_call.1} parent=15 // pred_check_branch
          %270 = sbr.rel (%p268) target = $region28
        $region27: #{tpu_custom_call.1} parent=15 // pred_region
          %s271 = sand.u32 %s27, 1
          %s272 = scalar_lea.sflag [#allocation6], %s271
          %s273 = sand.u32 %s89, 1
          %s274 = smul.addr %s273, 16
          %s275 = scalar_lea.vmem [#allocation7], %s274
          %s277 = ssub.s32 256, 256
          %278 = vsyncadd %s272, %s277
          %s279 = smul.addr %s27, 128
          %s280 = scalar_lea.hbm %s2, %s279
          %s281 = sshll.u32 %s275, 4
          %s282 = int_to_ptr.vmem [resolvable:$true] %s281
          %287 = dma.hbm_to_vmem [thread:$0]  %s280, 256, %s282, %s272, 384, 128, 8
        $region28: #{tpu_custom_call.1} parent=15 // pred_fallthru
          _
        // Predicated region
        $region29: #{tpu_custom_call.1} parent=15 // pred_check
          %p288 = pneg %p125
        $region30: #{tpu_custom_call.1} parent=15 // pred_check_branch
          %290 = sbr.rel (%p288) target = $region32
        $region31: #{tpu_custom_call.1} parent=15 // pred_region
          %s291 = sand.u32 %s27, 1
          %s292 = scalar_lea.sflag [#allocation9], %s291
          %s293 = sand.u32 %s115, 1
          %s294 = smul.addr %s293, 128
          %s295 = scalar_lea.vmem [#allocation8], %s294
          %s297 = ssub.s32 2048, 2048
          %298 = vsyncadd %s292, %s297
          %s299 = smul.addr %s27, 16
          %s300 = smul.addr %s299, 128
          %s301 = scalar_lea.hbm %s3, %s300
          %s302 = sshll.u32 %s295, 4
          %s303 = int_to_ptr.vmem [resolvable:$true] %s302
          %308 = dma.hbm_to_vmem [thread:$0]  %s301, 2048, %s303, %s292, 128, 128, 8
        $region32: #{tpu_custom_call.1} parent=15 // pred_fallthru
          _
        // Predicated region
        $region33: #{tpu_custom_call.1} parent=15 // pred_check
          %p309 = pneg %p151
        $region34: #{tpu_custom_call.1} parent=15 // pred_check_branch
          %311 = sbr.rel (%p309) target = $region36
        $region35: #{tpu_custom_call.1} parent=15 // pred_region
          %s312 = sand.u32 %s27, 1
          %s313 = scalar_lea.sflag [#allocation9], %s312
          %s314 = sand.u32 %s141, 1
          %s315 = smul.addr %s314, 128
          %s316 = scalar_lea.vmem [#allocation10], %s315
          %s318 = ssub.s32 2048, 2048
          %319 = vsyncadd %s313, %s318
          %s320 = smul.addr %s27, 16
          %s321 = smul.addr %s320, 128
          %s322 = scalar_lea.hbm %s4, %s321
          %s323 = sshll.u32 %s316, 4
          %s324 = int_to_ptr.vmem [resolvable:$true] %s323
          %329 = dma.hbm_to_vmem [thread:$0]  %s322, 2048, %s324, %s313, 128, 128, 8
        $region36: #{tpu_custom_call.1} parent=15 // pred_fallthru
          _
        // Predicated region
        $region37: #{tpu_custom_call.1} parent=15 // pred_check
          %p330 = pneg %p177
        $region38: #{tpu_custom_call.1} parent=15 // pred_check_branch
          %332 = sbr.rel (%p330) target = $region40
        $region39: #{tpu_custom_call.1} parent=15 // pred_region
          %s333 = sand.u32 %s167, 1
          %s334 = scalar_lea.sflag [#allocation12], %s333
          %s335 = sand.u32 %s167, 1
          %s336 = smul.addr %s335, 128
          %s337 = scalar_lea.vmem [#allocation11], %s336
          %s339 = ssub.s32 2048, 2048
          %340 = vsyncadd %s334, %s339
          %s341 = smul.addr %s27, 16
          %s342 = smul.addr %s341, 128
          %s343 = scalar_lea.hbm %s5, %s342
          %s344 = sshll.u32 %s337, 4
          %s345 = int_to_ptr.vmem [resolvable:$true] %s344
          %350 = dma.hbm_to_vmem [thread:$0]  %s343, 2048, %s345, %s334, 128, 128, 8
        $region40: #{tpu_custom_call.1} parent=15 // pred_fallthru
          _
      $region16: #{tpu_custom_call.1} parent=5 // pred_fallthru
        _
      %p351 = scmp.le.s32.totalorder 1, %s27
      %p352 = scmp.lt.s32.totalorder %s27, 4
      %p353 = pnand %p351, %p352
      %p354 = pneg %p353
      // Predicated region
      $region41: #{tpu_custom_call.1} parent=5 // pred_check
        _
      $region42: #{tpu_custom_call.1} parent=5 // pred_check_branch
        %356 = sbr.rel (%p353) target = $region44
      $region43: #{tpu_custom_call.1} parent=5 // pred_region
        %s357 = ssub.s32 %s27, 1
        %s358 = sand.u32 %s40, 1
        %s359 = scalar_lea.sflag [#allocation3], %s358
        %s360 = sand.u32 %s40, 1
        %s361 = smul.addr %s360, 16
        %s362 = scalar_lea.vmem [#allocation2], %s361
        // Predicated region
        $region45: #{tpu_custom_call.1} parent=43 // pred_check
          %p363 = pneg %p53
        $region46: #{tpu_custom_call.1} parent=43 // pred_check_branch
          %365 = sbr.rel (%p363) target = $region48
        $region47: #{tpu_custom_call.1} parent=43 // pred_region
          %366 = dma.done %s359, 256
        $region48: #{tpu_custom_call.1} parent=43 // pred_fallthru
          _
        %s367 = sand.u32 %s32, 1
        %s368 = scalar_lea.sflag [#allocation6], %s367
        %s369 = sand.u32 %s66, 1
        %s370 = smul.addr %s369, 16
        %s371 = scalar_lea.vmem [#allocation5], %s370
        // Predicated region
        $region49: #{tpu_custom_call.1} parent=43 // pred_check
          %p372 = pneg %p79
        $region50: #{tpu_custom_call.1} parent=43 // pred_check_branch
          %374 = sbr.rel (%p372) target = $region52
        $region51: #{tpu_custom_call.1} parent=43 // pred_region
          %375 = dma.done %s368, 256
        $region52: #{tpu_custom_call.1} parent=43 // pred_fallthru
          _
        %s376 = sand.u32 %s32, 1
        %s377 = scalar_lea.sflag [#allocation6], %s376
        %s378 = sand.u32 %s92, 1
        %s379 = smul.addr %s378, 16
        %s380 = scalar_lea.vmem [#allocation7], %s379
        // Predicated region
        $region53: #{tpu_custom_call.1} parent=43 // pred_check
          %p381 = pneg %p105
        $region54: #{tpu_custom_call.1} parent=43 // pred_check_branch
          %383 = sbr.rel (%p381) target = $region56
        $region55: #{tpu_custom_call.1} parent=43 // pred_region
          %384 = dma.done %s377, 256
        $region56: #{tpu_custom_call.1} parent=43 // pred_fallthru
          _
        %s385 = sand.u32 %s32, 1
        %s386 = scalar_lea.sflag [#allocation9], %s385
        %s387 = sand.u32 %s118, 1
        %s388 = smul.addr %s387, 128
        %s389 = scalar_lea.vmem [#allocation8], %s388
        // Predicated region
        $region57: #{tpu_custom_call.1} parent=43 // pred_check
          %p390 = pneg %p131
        $region58: #{tpu_custom_call.1} parent=43 // pred_check_branch
          %392 = sbr.rel (%p390) target = $region60
        $region59: #{tpu_custom_call.1} parent=43 // pred_region
          %393 = dma.done %s386, 2048
        $region60: #{tpu_custom_call.1} parent=43 // pred_fallthru
          _
        %s394 = sand.u32 %s32, 1
        %s395 = scalar_lea.sflag [#allocation9], %s394
        %s396 = sand.u32 %s144, 1
        %s397 = smul.addr %s396, 128
        %s398 = scalar_lea.vmem [#allocation10], %s397
        // Predicated region
        $region61: #{tpu_custom_call.1} parent=43 // pred_check
          %p399 = pneg %p157
        $region62: #{tpu_custom_call.1} parent=43 // pred_check_branch
          %401 = sbr.rel (%p399) target = $region64
        $region63: #{tpu_custom_call.1} parent=43 // pred_region
          %402 = dma.done %s395, 2048
        $region64: #{tpu_custom_call.1} parent=43 // pred_fallthru
          _
        %s403 = sand.u32 %s170, 1
        %s404 = scalar_lea.sflag [#allocation12], %s403
        %s405 = sand.u32 %s170, 1
        %s406 = smul.addr %s405, 128
        %s407 = scalar_lea.vmem [#allocation11], %s406
        // Predicated region
        $region65: #{tpu_custom_call.1} parent=43 // pred_check
          %p408 = pneg %p183
        $region66: #{tpu_custom_call.1} parent=43 // pred_check_branch
          %410 = sbr.rel (%p408) target = $region68
        $region67: #{tpu_custom_call.1} parent=43 // pred_region
          %411 = dma.done %s404, 2048
        $region68: #{tpu_custom_call.1} parent=43 // pred_fallthru
          _
        %s412 = sand.u32 %s40, 1
        %s413 = scalar_lea.sflag [#allocation3], %s412
        %s414 = sand.u32 %s40, 1
        %s415 = smul.addr %s414, 16
        %s416 = scalar_lea.vmem [#allocation2], %s415
        %p417 = pneg %p53
        %p418 = pneg %p50
        %s419 = sand.u32 %s32, 1
        %s420 = scalar_lea.sflag [#allocation6], %s419
        %s421 = sand.u32 %s66, 1
        %s422 = smul.addr %s421, 16
        %s423 = scalar_lea.vmem [#allocation5], %s422
        %p424 = pneg %p79
        %p425 = pneg %p76
        %s426 = sand.u32 %s32, 1
        %s427 = scalar_lea.sflag [#allocation6], %s426
        %s428 = sand.u32 %s92, 1
        %s429 = smul.addr %s428, 16
        %s430 = scalar_lea.vmem [#allocation7], %s429
        %p431 = pneg %p105
        %p432 = pneg %p102
        %s433 = sand.u32 %s32, 1
        %s434 = scalar_lea.sflag [#allocation9], %s433
        %s435 = sand.u32 %s118, 1
        %s436 = smul.addr %s435, 128
        %s437 = scalar_lea.vmem [#allocation8], %s436
        %p438 = pneg %p131
        %p439 = pneg %p128
        %s440 = sand.u32 %s32, 1
        %s441 = scalar_lea.sflag [#allocation9], %s440
        %s442 = sand.u32 %s144, 1
        %s443 = smul.addr %s442, 128
        %s444 = scalar_lea.vmem [#allocation10], %s443
        %p445 = pneg %p157
        %p446 = pneg %p154
        %s447 = sand.u32 %s170, 1
        %s448 = scalar_lea.sflag [#allocation12], %s447
        %s449 = sand.u32 %s170, 1
        %s450 = smul.addr %s449, 128
        %s451 = scalar_lea.vmem [#allocation11], %s450
        %p452 = pneg %p183
        %p453 = pneg %p180
        %p454 = pneg %p209
        %p455 = pneg %p206
        %s456 = sand.u32 %s196, 1
        %s457 = scalar_lea.sflag [#allocation4], %s456
        %s458 = sand.u32 %s196, 1
        %s459 = smul.addr %s458, 16
        %s460 = scalar_lea.vmem [#allocation13], %s459
        %v461 = vld [vmem:[%s362] sm:$0xff]
        %v462 = vld [vmem:[%s362 + $0x8] sm:$0xff]
        %v463 = vld [vmem:[%s371] sm:$0xff]
        %v464 = vld [vmem:[%s371 + $0x8] sm:$0xff]
        %v465 = vld [vmem:[%s380] sm:$0xff]
        %v466 = vld [vmem:[%s380 + $0x8] sm:$0xff]
        %v467 = vld [vmem:[%s389] sm:$0xff]
        %v468 = vld [vmem:[%s389 + $0x8] sm:$0xff]
        %v469 = vld [vmem:[%s389 + $0x10] sm:$0xff]
        %v470 = vld [vmem:[%s389 + $0x18] sm:$0xff]
        %vm471 = vcmask 261120
        %v473 = vsel %vm471, %v461, 0
        %v476 = vsel %vm471, %v462, 0
        %478 = vmatprep.subr.mxu0 0.0
        %479 = vmatpush1.msra.mxu0 %v467
        %480 = vmatprep.subr.mxu0 0.0
        %481 = vmatpush1.msra.mxu0 %v468
        %482 = vmatprep.subr.mxu0 0.0
        %483 = vmatpush1.msra.mxu0 %v469
        %484 = vmatprep.subr.mxu0 0.0
        %485 = vmatpush1.msra.mxu0 %v470
        %486 = vmatprep.subr.mxu0 0.0
        %487 = vmatpush1.msra.mxu0 0.0
        %488 = vmatprep.subr.mxu0 0.0
        %489 = vmatpush1.msra.mxu0 0.0
        %490 = vmatprep.subr.mxu0 0.0
        %491 = vmatpush1.msra.mxu0 0.0
        %492 = vmatprep.subr.mxu0 0.0
        %493 = vmatpush1.msra.mxu0 0.0
        %494 = vmatprep.subr.mxu0 0.0
        %495 = vmatpush1.msra.mxu0 0.0
        %496 = vmatprep.subr.mxu0 0.0
        %497 = vmatpush1.msra.mxu0 0.0
        %498 = vmatprep.subr.mxu0 0.0
        %499 = vmatpush1.msra.mxu0 0.0
        %500 = vmatprep.subr.mxu0 0.0
        %501 = vmatpush1.msra.mxu0 0.0
        %502 = vmatprep.subr.mxu0 0.0
        %503 = vmatpush1.msra.mxu0 0.0
        %504 = vmatprep.subr.mxu0 0.0
        %505 = vmatpush1.msra.mxu0 0.0
        %506 = vmatprep.subr.mxu0 0.0
        %507 = vmatpush1.msra.mxu0 0.0
        %508 = vmatprep.subr.mxu0 0.0
        %509 = vmatpush1.msra.mxu0 0.0
        %510 = vmatprep.subr.mxu0 0.0
        %511 = vmatpush1.msra.mxu0 0.0
        %512 = vmatprep.subr.mxu0 0.0
        %513 = vmatpush1.msra.mxu0 0.0
        %514 = vmatprep.subr.mxu0 0.0
        %515 = vmatpush1.msra.mxu0 0.0
        %516 = vmatprep.subr.mxu0 0.0
        %517 = vmatpush1.msra.mxu0 0.0
        %518 = vmatprep.subr.mxu0 0.0
        %519 = vmatpush1.msra.mxu0 0.0
        %520 = vmatprep.subr.mxu0 0.0
        %521 = vmatpush1.msra.mxu0 0.0
        %522 = vmatprep.subr.mxu0 0.0
        %523 = vmatpush1.msra.mxu0 0.0
        %524 = vmatprep.subr.mxu0 0.0
        %525 = vmatpush1.msra.mxu0 0.0
        %526 = vmatprep.subr.mxu0 0.0
        %527 = vmatpush1.msra.mxu0 0.0
        %528 = vmatprep.subr.mxu0 0.0
        %529 = vmatpush1.msra.mxu0 0.0
        %530 = vmatprep.subr.mxu0 0.0
        %531 = vmatpush1.msra.mxu0 0.0
        %532 = vmatprep.subr.mxu0 0.0
        %533 = vmatpush1.msra.mxu0 0.0
        %534 = vmatprep.subr.mxu0 0.0
        %535 = vmatpush1.msra.mxu0 0.0
        %536 = vmatprep.subr.mxu0 0.0
        %537 = vmatpush1.msra.mxu0 0.0
        %538 = vmatprep.subr.mxu0 0.0
        %539 = vmatpush1.msra.mxu0 0.0
        %540 = vmatprep.subr.mxu0 0.0
        %541 = vmatpush1.msra.mxu0 0.0
        %542 = vmatprep.mubr.f32.mxu0 0.0
        %543 = vmatmul.mubr.f32.gmra.mrb[0].mxu0 %v473
        %v544 = vpop.f32.mrb[0].mxu0
        %v545 = vadd.f32 0.0, %v544
        %v546 = vpop.f32.mrb[0].mxu0
        %547 = vmatprep.mubr.f32.mxu0 0.0
        %548 = vmatmul.mubr.f32.gmra.mrb[0].mxu0 %v476
        %v549 = vpop.f32.mrb[0].mxu0
        %v550 = vadd.f32 0.0, %v549
        %v551 = vpop.f32.mrb[0].mxu0
        %552 = vdwg.mxu0
        %v553 = vld [vmem:[%s398] sm:$0xff]
        %v554 = vld [vmem:[%s398 + $0x8] sm:$0xff]
        %v555 = vld [vmem:[%s398 + $0x10] sm:$0xff]
        %v556 = vld [vmem:[%s398 + $0x18] sm:$0xff]
        %v558 = vsel %vm471, %v463, 0
        %v561 = vsel %vm471, %v464, 0
        %563 = vmatprep.subr.mxu0 0.0
        %564 = vmatpush1.msra.mxu0 %v553
        %565 = vmatprep.subr.mxu0 0.0
        %566 = vmatpush1.msra.mxu0 %v554
        %567 = vmatprep.subr.mxu0 0.0
        %568 = vmatpush1.msra.mxu0 %v555
        %569 = vmatprep.subr.mxu0 0.0
        %570 = vmatpush1.msra.mxu0 %v556
        %571 = vmatprep.subr.mxu0 0.0
        %572 = vmatpush1.msra.mxu0 0.0
        %573 = vmatprep.subr.mxu0 0.0
        %574 = vmatpush1.msra.mxu0 0.0
        %575 = vmatprep.subr.mxu0 0.0
        %576 = vmatpush1.msra.mxu0 0.0
        %577 = vmatprep.subr.mxu0 0.0
        %578 = vmatpush1.msra.mxu0 0.0
        %579 = vmatprep.subr.mxu0 0.0
        %580 = vmatpush1.msra.mxu0 0.0
        %581 = vmatprep.subr.mxu0 0.0
        %582 = vmatpush1.msra.mxu0 0.0
        %583 = vmatprep.subr.mxu0 0.0
        %584 = vmatpush1.msra.mxu0 0.0
        %585 = vmatprep.subr.mxu0 0.0
        %586 = vmatpush1.msra.mxu0 0.0
        %587 = vmatprep.subr.mxu0 0.0
        %588 = vmatpush1.msra.mxu0 0.0
        %589 = vmatprep.subr.mxu0 0.0
        %590 = vmatpush1.msra.mxu0 0.0
        %591 = vmatprep.subr.mxu0 0.0
        %592 = vmatpush1.msra.mxu0 0.0
        %593 = vmatprep.subr.mxu0 0.0
        %594 = vmatpush1.msra.mxu0 0.0
        %595 = vmatprep.subr.mxu0 0.0
        %596 = vmatpush1.msra.mxu0 0.0
        %597 = vmatprep.subr.mxu0 0.0
        %598 = vmatpush1.msra.mxu0 0.0
        %599 = vmatprep.subr.mxu0 0.0
        %600 = vmatpush1.msra.mxu0 0.0
        %601 = vmatprep.subr.mxu0 0.0
        %602 = vmatpush1.msra.mxu0 0.0
        %603 = vmatprep.subr.mxu0 0.0
        %604 = vmatpush1.msra.mxu0 0.0
        %605 = vmatprep.subr.mxu0 0.0
        %606 = vmatpush1.msra.mxu0 0.0
        %607 = vmatprep.subr.mxu0 0.0
        %608 = vmatpush1.msra.mxu0 0.0
        %609 = vmatprep.subr.mxu0 0.0
        %610 = vmatpush1.msra.mxu0 0.0
        %611 = vmatprep.subr.mxu0 0.0
        %612 = vmatpush1.msra.mxu0 0.0
        %613 = vmatprep.subr.mxu0 0.0
        %614 = vmatpush1.msra.mxu0 0.0
        %615 = vmatprep.subr.mxu0 0.0
        %616 = vmatpush1.msra.mxu0 0.0
        %617 = vmatprep.subr.mxu0 0.0
        %618 = vmatpush1.msra.mxu0 0.0
        %619 = vmatprep.subr.mxu0 0.0
        %620 = vmatpush1.msra.mxu0 0.0
        %621 = vmatprep.subr.mxu0 0.0
        %622 = vmatpush1.msra.mxu0 0.0
        %623 = vmatprep.subr.mxu0 0.0
        %624 = vmatpush1.msra.mxu0 0.0
        %625 = vmatprep.subr.mxu0 0.0
        %626 = vmatpush1.msra.mxu0 0.0
        %627 = vmatprep.mubr.f32.mxu0 0.0
        %628 = vmatmul.mubr.f32.gmra.mrb[0].mxu0 %v558
        %v629 = vpop.f32.mrb[0].mxu0
        %v630 = vadd.f32 0.0, %v629
        %v631 = vpop.f32.mrb[0].mxu0
        %632 = vmatprep.mubr.f32.mxu0 0.0
        %633 = vmatmul.mubr.f32.gmra.mrb[0].mxu0 %v561
        %v634 = vpop.f32.mrb[0].mxu0
        %v635 = vadd.f32 0.0, %v634
        %v636 = vpop.f32.mrb[0].mxu0
        %637 = vdwg.mxu0
        %v638 = vld [vmem:[%s407] sm:$0xff]
        %v639 = vld [vmem:[%s407 + $0x8] sm:$0xff]
        %v640 = vld [vmem:[%s407 + $0x10] sm:$0xff]
        %v641 = vld [vmem:[%s407 + $0x18] sm:$0xff]
        %v643 = vsel %vm471, %v465, 0
        %v646 = vsel %vm471, %v466, 0
        %648 = vmatprep.subr.mxu0 0.0
        %649 = vmatpush1.msra.mxu0 %v638
        %650 = vmatprep.subr.mxu0 0.0
        %651 = vmatpush1.msra.mxu0 %v639
        %652 = vmatprep.subr.mxu0 0.0
        %653 = vmatpush1.msra.mxu0 %v640
        %654 = vmatprep.subr.mxu0 0.0
        %655 = vmatpush1.msra.mxu0 %v641
        %656 = vmatprep.subr.mxu0 0.0
        %657 = vmatpush1.msra.mxu0 0.0
        %658 = vmatprep.subr.mxu0 0.0
        %659 = vmatpush1.msra.mxu0 0.0
        %660 = vmatprep.subr.mxu0 0.0
        %661 = vmatpush1.msra.mxu0 0.0
        %662 = vmatprep.subr.mxu0 0.0
        %663 = vmatpush1.msra.mxu0 0.0
        %664 = vmatprep.subr.mxu0 0.0
        %665 = vmatpush1.msra.mxu0 0.0
        %666 = vmatprep.subr.mxu0 0.0
        %667 = vmatpush1.msra.mxu0 0.0
        %668 = vmatprep.subr.mxu0 0.0
        %669 = vmatpush1.msra.mxu0 0.0
        %670 = vmatprep.subr.mxu0 0.0
        %671 = vmatpush1.msra.mxu0 0.0
        %672 = vmatprep.subr.mxu0 0.0
        %673 = vmatpush1.msra.mxu0 0.0
        %674 = vmatprep.subr.mxu0 0.0
        %675 = vmatpush1.msra.mxu0 0.0
        %676 = vmatprep.subr.mxu0 0.0
        %677 = vmatpush1.msra.mxu0 0.0
        %678 = vmatprep.subr.mxu0 0.0
        %679 = vmatpush1.msra.mxu0 0.0
        %680 = vmatprep.subr.mxu0 0.0
        %681 = vmatpush1.msra.mxu0 0.0
        %682 = vmatprep.subr.mxu0 0.0
        %683 = vmatpush1.msra.mxu0 0.0
        %684 = vmatprep.subr.mxu0 0.0
        %685 = vmatpush1.msra.mxu0 0.0
        %686 = vmatprep.subr.mxu0 0.0
        %687 = vmatpush1.msra.mxu0 0.0
        %688 = vmatprep.subr.mxu0 0.0
        %689 = vmatpush1.msra.mxu0 0.0
        %690 = vmatprep.subr.mxu0 0.0
        %691 = vmatpush1.msra.mxu0 0.0
        %692 = vmatprep.subr.mxu0 0.0
        %693 = vmatpush1.msra.mxu0 0.0
        %694 = vmatprep.subr.mxu0 0.0
        %695 = vmatpush1.msra.mxu0 0.0
        %696 = vmatprep.subr.mxu0 0.0
        %697 = vmatpush1.msra.mxu0 0.0
        %698 = vmatprep.subr.mxu0 0.0
        %699 = vmatpush1.msra.mxu0 0.0
        %700 = vmatprep.subr.mxu0 0.0
        %701 = vmatpush1.msra.mxu0 0.0
        %702 = vmatprep.subr.mxu0 0.0
        %703 = vmatpush1.msra.mxu0 0.0
        %704 = vmatprep.subr.mxu0 0.0
        %705 = vmatpush1.msra.mxu0 0.0
        %706 = vmatprep.subr.mxu0 0.0
        %707 = vmatpush1.msra.mxu0 0.0
        %708 = vmatprep.subr.mxu0 0.0
        %709 = vmatpush1.msra.mxu0 0.0
        %710 = vmatprep.subr.mxu0 0.0
        %711 = vmatpush1.msra.mxu0 0.0
        %712 = vmatprep.mubr.f32.mxu0 0.0
        %713 = vmatmul.mubr.f32.gmra.mrb[0].mxu0 %v643
        %v714 = vpop.f32.mrb[0].mxu0
        %v715 = vadd.f32 0.0, %v714
        %v716 = vpop.f32.mrb[0].mxu0
        %717 = vmatprep.mubr.f32.mxu0 0.0
        %718 = vmatmul.mubr.f32.gmra.mrb[0].mxu0 %v646
        %v719 = vpop.f32.mrb[0].mxu0
        %v720 = vadd.f32 0.0, %v719
        %v721 = vpop.f32.mrb[0].mxu0
        %722 = vdwg.mxu0
        %v724 = vsel %vm471, %v545, 0
        %v727 = vsel %vm471, %v630, 0
        %729 = vmatprep.subr.mxu0 0.0
        %730 = vmatpush1.xpose.msra.mxu0 %v727
        %731 = vmatprep.subr.mxu0 0.0
        %732 = vmatpush1.xpose.msra.mxu0 0.0
        %733 = vmatprep.subr.mxu0 0.0
        %734 = vmatpush1.xpose.msra.mxu0 0.0
        %735 = vmatprep.subr.mxu0 0.0
        %736 = vmatpush1.xpose.msra.mxu0 0.0
        %737 = vmatprep.subr.mxu0 0.0
        %738 = vmatpush1.xpose.msra.mxu0 0.0
        %739 = vmatprep.subr.mxu0 0.0
        %740 = vmatpush1.xpose.msra.mxu0 0.0
        %741 = vmatprep.subr.mxu0 0.0
        %742 = vmatpush1.xpose.msra.mxu0 0.0
        %743 = vmatprep.subr.mxu0 0.0
        %744 = vmatpush1.xpose.msra.mxu0 0.0
        %745 = vmatprep.subr.mxu0 0.0
        %746 = vmatpush1.xpose.msra.mxu0 0.0
        %747 = vmatprep.subr.mxu0 0.0
        %748 = vmatpush1.xpose.msra.mxu0 0.0
        %749 = vmatprep.subr.mxu0 0.0
        %750 = vmatpush1.xpose.msra.mxu0 0.0
        %751 = vmatprep.subr.mxu0 0.0
        %752 = vmatpush1.xpose.msra.mxu0 0.0
        %753 = vmatprep.subr.mxu0 0.0
        %754 = vmatpush1.xpose.msra.mxu0 0.0
        %755 = vmatprep.subr.mxu0 0.0
        %756 = vmatpush1.xpose.msra.mxu0 0.0
        %757 = vmatprep.subr.mxu0 0.0
        %758 = vmatpush1.xpose.msra.mxu0 0.0
        %759 = vmatprep.subr.mxu0 0.0
        %760 = vmatpush1.xpose.msra.mxu0 0.0
        %761 = vmatprep.subr.mxu0 0.0
        %762 = vmatpush1.xpose.msra.mxu0 0.0
        %763 = vmatprep.subr.mxu0 0.0
        %764 = vmatpush1.xpose.msra.mxu0 0.0
        %765 = vmatprep.subr.mxu0 0.0
        %766 = vmatpush1.xpose.msra.mxu0 0.0
        %767 = vmatprep.subr.mxu0 0.0
        %768 = vmatpush1.xpose.msra.mxu0 0.0
        %769 = vmatprep.subr.mxu0 0.0
        %770 = vmatpush1.xpose.msra.mxu0 0.0
        %771 = vmatprep.subr.mxu0 0.0
        %772 = vmatpush1.xpose.msra.mxu0 0.0
        %773 = vmatprep.subr.mxu0 0.0
        %774 = vmatpush1.xpose.msra.mxu0 0.0
        %775 = vmatprep.subr.mxu0 0.0
        %776 = vmatpush1.xpose.msra.mxu0 0.0
        %777 = vmatprep.subr.mxu0 0.0
        %778 = vmatpush1.xpose.msra.mxu0 0.0
        %779 = vmatprep.subr.mxu0 0.0
        %780 = vmatpush1.xpose.msra.mxu0 0.0
        %781 = vmatprep.subr.mxu0 0.0
        %782 = vmatpush1.xpose.msra.mxu0 0.0
        %783 = vmatprep.subr.mxu0 0.0
        %784 = vmatpush1.xpose.msra.mxu0 0.0
        %785 = vmatprep.subr.mxu0 0.0
        %786 = vmatpush1.xpose.msra.mxu0 0.0
        %787 = vmatprep.subr.mxu0 0.0
        %788 = vmatpush1.xpose.msra.mxu0 0.0
        %789 = vmatprep.subr.mxu0 0.0
        %790 = vmatpush1.xpose.msra.mxu0 0.0
        %791 = vmatprep.subr.mxu0 0.0
        %792 = vmatpush1.xpose.msra.mxu0 0.0
        %793 = vmatprep.mubr.f32.mxu0 0.0
        %794 = vmatmul.mubr.f32.gmra.mrb[0].mxu0 %v724
        %v795 = vpop.f32.mrb[0].mxu0
        %v796 = vadd.f32 0.0, %v795
        %v797 = vpop.f32.mrb[0].mxu0
        %798 = vdwg.mxu0
        %v799 = vmul.f32 %v796, 0.17677669
        %vm800 = vcmask 64512
        %v801 = vsel %vm800, %v799, -inf
        %802 = vmax.xlane.f32.xlu0 %v801
        %v803 = vpop.xlane.xlu0 %802
        %v804 = vsub.f32 %v799, %v803
        %v805 = vmul.f32 %v804, 1.442695
        %v806 = vpow.pop %v805
        %v807 = vsel %vm800, %v806, 0.0
        %808 = vadd.xlane.f32.xlu0 %v807
        %v809 = vpop.xlane.xlu0 %808
        %v810 = vrcp.pop %v809
        %v811 = vmul.f32 %v806, %v810
        %v813 = vsel %vm800, %v811, 0
        %815 = vmatprep.subr.mxu0 0.0
        %816 = vmatpush1.msra.mxu0 %v715
        %817 = vmatprep.subr.mxu0 0.0
        %818 = vmatpush1.msra.mxu0 0.0
        %819 = vmatprep.subr.mxu0 0.0
        %820 = vmatpush1.msra.mxu0 0.0
        %821 = vmatprep.subr.mxu0 0.0
        %822 = vmatpush1.msra.mxu0 0.0
        %823 = vmatprep.subr.mxu0 0.0
        %824 = vmatpush1.msra.mxu0 0.0
        %825 = vmatprep.subr.mxu0 0.0
        %826 = vmatpush1.msra.mxu0 0.0
        %827 = vmatprep.subr.mxu0 0.0
        %828 = vmatpush1.msra.mxu0 0.0
        %829 = vmatprep.subr.mxu0 0.0
        %830 = vmatpush1.msra.mxu0 0.0
        %831 = vmatprep.subr.mxu0 0.0
        %832 = vmatpush1.msra.mxu0 0.0
        %833 = vmatprep.subr.mxu0 0.0
        %834 = vmatpush1.msra.mxu0 0.0
        %835 = vmatprep.subr.mxu0 0.0
        %836 = vmatpush1.msra.mxu0 0.0
        %837 = vmatprep.subr.mxu0 0.0
        %838 = vmatpush1.msra.mxu0 0.0
        %839 = vmatprep.subr.mxu0 0.0
        %840 = vmatpush1.msra.mxu0 0.0
        %841 = vmatprep.subr.mxu0 0.0
        %842 = vmatpush1.msra.mxu0 0.0
        %843 = vmatprep.subr.mxu0 0.0
        %844 = vmatpush1.msra.mxu0 0.0
        %845 = vmatprep.subr.mxu0 0.0
        %846 = vmatpush1.msra.mxu0 0.0
        %847 = vmatprep.subr.mxu0 0.0
        %848 = vmatpush1.msra.mxu0 0.0
        %849 = vmatprep.subr.mxu0 0.0
        %850 = vmatpush1.msra.mxu0 0.0
        %851 = vmatprep.subr.mxu0 0.0
        %852 = vmatpush1.msra.mxu0 0.0
        %853 = vmatprep.subr.mxu0 0.0
        %854 = vmatpush1.msra.mxu0 0.0
        %855 = vmatprep.subr.mxu0 0.0
        %856 = vmatpush1.msra.mxu0 0.0
        %857 = vmatprep.subr.mxu0 0.0
        %858 = vmatpush1.msra.mxu0 0.0
        %859 = vmatprep.subr.mxu0 0.0
        %860 = vmatpush1.msra.mxu0 0.0
        %861 = vmatprep.subr.mxu0 0.0
        %862 = vmatpush1.msra.mxu0 0.0
        %863 = vmatprep.subr.mxu0 0.0
        %864 = vmatpush1.msra.mxu0 0.0
        %865 = vmatprep.subr.mxu0 0.0
        %866 = vmatpush1.msra.mxu0 0.0
        %867 = vmatprep.subr.mxu0 0.0
        %868 = vmatpush1.msra.mxu0 0.0
        %869 = vmatprep.subr.mxu0 0.0
        %870 = vmatpush1.msra.mxu0 0.0
        %871 = vmatprep.subr.mxu0 0.0
        %872 = vmatpush1.msra.mxu0 0.0
        %873 = vmatprep.subr.mxu0 0.0
        %874 = vmatpush1.msra.mxu0 0.0
        %875 = vmatprep.subr.mxu0 0.0
        %876 = vmatpush1.msra.mxu0 0.0
        %877 = vmatprep.subr.mxu0 0.0
        %878 = vmatpush1.msra.mxu0 0.0
        %879 = vmatprep.mubr.f32.mxu0 0.0
        %880 = vmatmul.mubr.f32.gmra.mrb[0].mxu0 %v813
        %v881 = vpop.f32.mrb[0].mxu0
        %v882 = vadd.f32 0.0, %v881
        %v883 = vpop.f32.mrb[0].mxu0
        %884 = vdwg.mxu0
        %v886 = vsel %vm471, %v550, 0
        %v889 = vsel %vm471, %v635, 0
        %891 = vmatprep.subr.mxu0 0.0
        %892 = vmatpush1.xpose.msra.mxu0 %v889
        %893 = vmatprep.subr.mxu0 0.0
        %894 = vmatpush1.xpose.msra.mxu0 0.0
        %895 = vmatprep.subr.mxu0 0.0
        %896 = vmatpush1.xpose.msra.mxu0 0.0
        %897 = vmatprep.subr.mxu0 0.0
        %898 = vmatpush1.xpose.msra.mxu0 0.0
        %899 = vmatprep.subr.mxu0 0.0
        %900 = vmatpush1.xpose.msra.mxu0 0.0
        %901 = vmatprep.subr.mxu0 0.0
        %902 = vmatpush1.xpose.msra.mxu0 0.0
        %903 = vmatprep.subr.mxu0 0.0
        %904 = vmatpush1.xpose.msra.mxu0 0.0
        %905 = vmatprep.subr.mxu0 0.0
        %906 = vmatpush1.xpose.msra.mxu0 0.0
        %907 = vmatprep.subr.mxu0 0.0
        %908 = vmatpush1.xpose.msra.mxu0 0.0
        %909 = vmatprep.subr.mxu0 0.0
        %910 = vmatpush1.xpose.msra.mxu0 0.0
        %911 = vmatprep.subr.mxu0 0.0
        %912 = vmatpush1.xpose.msra.mxu0 0.0
        %913 = vmatprep.subr.mxu0 0.0
        %914 = vmatpush1.xpose.msra.mxu0 0.0
        %915 = vmatprep.subr.mxu0 0.0
        %916 = vmatpush1.xpose.msra.mxu0 0.0
        %917 = vmatprep.subr.mxu0 0.0
        %918 = vmatpush1.xpose.msra.mxu0 0.0
        %919 = vmatprep.subr.mxu0 0.0
        %920 = vmatpush1.xpose.msra.mxu0 0.0
        %921 = vmatprep.subr.mxu0 0.0
        %922 = vmatpush1.xpose.msra.mxu0 0.0
        %923 = vmatprep.subr.mxu0 0.0
        %924 = vmatpush1.xpose.msra.mxu0 0.0
        %925 = vmatprep.subr.mxu0 0.0
        %926 = vmatpush1.xpose.msra.mxu0 0.0
        %927 = vmatprep.subr.mxu0 0.0
        %928 = vmatpush1.xpose.msra.mxu0 0.0
        %929 = vmatprep.subr.mxu0 0.0
        %930 = vmatpush1.xpose.msra.mxu0 0.0
        %931 = vmatprep.subr.mxu0 0.0
        %932 = vmatpush1.xpose.msra.mxu0 0.0
        %933 = vmatprep.subr.mxu0 0.0
        %934 = vmatpush1.xpose.msra.mxu0 0.0
        %935 = vmatprep.subr.mxu0 0.0
        %936 = vmatpush1.xpose.msra.mxu0 0.0
        %937 = vmatprep.subr.mxu0 0.0
        %938 = vmatpush1.xpose.msra.mxu0 0.0
        %939 = vmatprep.subr.mxu0 0.0
        %940 = vmatpush1.xpose.msra.mxu0 0.0
        %941 = vmatprep.subr.mxu0 0.0
        %942 = vmatpush1.xpose.msra.mxu0 0.0
        %943 = vmatprep.subr.mxu0 0.0
        %944 = vmatpush1.xpose.msra.mxu0 0.0
        %945 = vmatprep.subr.mxu0 0.0
        %946 = vmatpush1.xpose.msra.mxu0 0.0
        %947 = vmatprep.subr.mxu0 0.0
        %948 = vmatpush1.xpose.msra.mxu0 0.0
        %949 = vmatprep.subr.mxu0 0.0
        %950 = vmatpush1.xpose.msra.mxu0 0.0
        %951 = vmatprep.subr.mxu0 0.0
        %952 = vmatpush1.xpose.msra.mxu0 0.0
        %953 = vmatprep.subr.mxu0 0.0
        %954 = vmatpush1.xpose.msra.mxu0 0.0
        %955 = vmatprep.mubr.f32.mxu0 0.0
        %956 = vmatmul.mubr.f32.gmra.mrb[0].mxu0 %v886
        %v957 = vpop.f32.mrb[0].mxu0
        %v958 = vadd.f32 0.0, %v957
        %v959 = vpop.f32.mrb[0].mxu0
        %960 = vdwg.mxu0
        %v961 = vmul.f32 %v958, 0.17677669
        %v962 = vsel %vm800, %v961, -inf
        %963 = vmax.xlane.f32.xlu0 %v962
        %v964 = vpop.xlane.xlu0 %963
        %v965 = vsub.f32 %v961, %v964
        %v966 = vmul.f32 %v965, 1.442695
        %v967 = vpow.pop %v966
        %v968 = vsel %vm800, %v967, 0.0
        %969 = vadd.xlane.f32.xlu0 %v968
        %v970 = vpop.xlane.xlu0 %969
        %v971 = vrcp.pop %v970
        %v972 = vmul.f32 %v967, %v971
        %v974 = vsel %vm800, %v972, 0
        %976 = vmatprep.subr.mxu0 0.0
        %977 = vmatpush1.msra.mxu0 %v720
        %978 = vmatprep.subr.mxu0 0.0
        %979 = vmatpush1.msra.mxu0 0.0
        %980 = vmatprep.subr.mxu0 0.0
        %981 = vmatpush1.msra.mxu0 0.0
        %982 = vmatprep.subr.mxu0 0.0
        %983 = vmatpush1.msra.mxu0 0.0
        %984 = vmatprep.subr.mxu0 0.0
        %985 = vmatpush1.msra.mxu0 0.0
        %986 = vmatprep.subr.mxu0 0.0
        %987 = vmatpush1.msra.mxu0 0.0
        %988 = vmatprep.subr.mxu0 0.0
        %989 = vmatpush1.msra.mxu0 0.0
        %990 = vmatprep.subr.mxu0 0.0
        %991 = vmatpush1.msra.mxu0 0.0
        %992 = vmatprep.subr.mxu0 0.0
        %993 = vmatpush1.msra.mxu0 0.0
        %994 = vmatprep.subr.mxu0 0.0
        %995 = vmatpush1.msra.mxu0 0.0
        %996 = vmatprep.subr.mxu0 0.0
        %997 = vmatpush1.msra.mxu0 0.0
        %998 = vmatprep.subr.mxu0 0.0
        %999 = vmatpush1.msra.mxu0 0.0
        %1000 = vmatprep.subr.mxu0 0.0
        %1001 = vmatpush1.msra.mxu0 0.0
        %1002 = vmatprep.subr.mxu0 0.0
        %1003 = vmatpush1.msra.mxu0 0.0
        %1004 = vmatprep.subr.mxu0 0.0
        %1005 = vmatpush1.msra.mxu0 0.0
        %1006 = vmatprep.subr.mxu0 0.0
        %1007 = vmatpush1.msra.mxu0 0.0
        %1008 = vmatprep.subr.mxu0 0.0
        %1009 = vmatpush1.msra.mxu0 0.0
        %1010 = vmatprep.subr.mxu0 0.0
        %1011 = vmatpush1.msra.mxu0 0.0
        %1012 = vmatprep.subr.mxu0 0.0
        %1013 = vmatpush1.msra.mxu0 0.0
        %1014 = vmatprep.subr.mxu0 0.0
        %1015 = vmatpush1.msra.mxu0 0.0
        %1016 = vmatprep.subr.mxu0 0.0
        %1017 = vmatpush1.msra.mxu0 0.0
        %1018 = vmatprep.subr.mxu0 0.0
        %1019 = vmatpush1.msra.mxu0 0.0
        %1020 = vmatprep.subr.mxu0 0.0
        %1021 = vmatpush1.msra.mxu0 0.0
        %1022 = vmatprep.subr.mxu0 0.0
        %1023 = vmatpush1.msra.mxu0 0.0
        %1024 = vmatprep.subr.mxu0 0.0
        %1025 = vmatpush1.msra.mxu0 0.0
        %1026 = vmatprep.subr.mxu0 0.0
        %1027 = vmatpush1.msra.mxu0 0.0
        %1028 = vmatprep.subr.mxu0 0.0
        %1029 = vmatpush1.msra.mxu0 0.0
        %1030 = vmatprep.subr.mxu0 0.0
        %1031 = vmatpush1.msra.mxu0 0.0
        %1032 = vmatprep.subr.mxu0 0.0
        %1033 = vmatpush1.msra.mxu0 0.0
        %1034 = vmatprep.subr.mxu0 0.0
        %1035 = vmatpush1.msra.mxu0 0.0
        %1036 = vmatprep.subr.mxu0 0.0
        %1037 = vmatpush1.msra.mxu0 0.0
        %1038 = vmatprep.subr.mxu0 0.0
        %1039 = vmatpush1.msra.mxu0 0.0
        %1040 = vmatprep.mubr.f32.mxu0 0.0
        %1041 = vmatmul.mubr.f32.gmra.mrb[0].mxu0 %v974
        %v1042 = vpop.f32.mrb[0].mxu0
        %v1043 = vadd.f32 0.0, %v1042
        %v1044 = vpop.f32.mrb[0].mxu0
        %1045 = vdwg.mxu0
        %vm1046 = vcmp.ne.f32.partialorder %v882, %v882
        %vm1047 = vcmp.ne.f32.partialorder %v1043, %v1043
        %v1048 = vsel %vm1046, 0.0, %v882
        %v1049 = vsel %vm1047, 0.0, %v1043
        %v1050 = vadd.f32 %v1048, 0.0
        %v1051 = vadd.f32 %v1049, 0.0
        %v1052 = vsel %vm1046, 0.0, 1.0
        %v1053 = vsel %vm1047, 0.0, 1.0
        %v1054 = vadd.f32 %v1052, 0.0
        %v1055 = vadd.f32 %v1053, 0.0
        %s1056 = scalar_lea.vmem %s389, 32 [#allocation8]
        %v1057 = vld [vmem:[%s1056] sm:$0xff]
        %v1058 = vld [vmem:[%s1056 + $0x8] sm:$0xff]
        %v1059 = vld [vmem:[%s1056 + $0x10] sm:$0xff]
        %v1060 = vld [vmem:[%s1056 + $0x18] sm:$0xff]
        %1061 = vmatprep.subr.mxu0 0.0
        %1062 = vmatpush1.msra.mxu0 %v1057
        %1063 = vmatprep.subr.mxu0 0.0
        %1064 = vmatpush1.msra.mxu0 %v1058
        %1065 = vmatprep.subr.mxu0 0.0
        %1066 = vmatpush1.msra.mxu0 %v1059
        %1067 = vmatprep.subr.mxu0 0.0
        %1068 = vmatpush1.msra.mxu0 %v1060
        %1069 = vmatprep.subr.mxu0 0.0
        %1070 = vmatpush1.msra.mxu0 0.0
        %1071 = vmatprep.subr.mxu0 0.0
        %1072 = vmatpush1.msra.mxu0 0.0
        %1073 = vmatprep.subr.mxu0 0.0
        %1074 = vmatpush1.msra.mxu0 0.0
        %1075 = vmatprep.subr.mxu0 0.0
        %1076 = vmatpush1.msra.mxu0 0.0
        %1077 = vmatprep.subr.mxu0 0.0
        %1078 = vmatpush1.msra.mxu0 0.0
        %1079 = vmatprep.subr.mxu0 0.0
        %1080 = vmatpush1.msra.mxu0 0.0
        %1081 = vmatprep.subr.mxu0 0.0
        %1082 = vmatpush1.msra.mxu0 0.0
        %1083 = vmatprep.subr.mxu0 0.0
        %1084 = vmatpush1.msra.mxu0 0.0
        %1085 = vmatprep.subr.mxu0 0.0
        %1086 = vmatpush1.msra.mxu0 0.0
        %1087 = vmatprep.subr.mxu0 0.0
        %1088 = vmatpush1.msra.mxu0 0.0
        %1089 = vmatprep.subr.mxu0 0.0
        %1090 = vmatpush1.msra.mxu0 0.0
        %1091 = vmatprep.subr.mxu0 0.0
        %1092 = vmatpush1.msra.mxu0 0.0
        %1093 = vmatprep.subr.mxu0 0.0
        %1094 = vmatpush1.msra.mxu0 0.0
        %1095 = vmatprep.subr.mxu0 0.0
        %1096 = vmatpush1.msra.mxu0 0.0
        %1097 = vmatprep.subr.mxu0 0.0
        %1098 = vmatpush1.msra.mxu0 0.0
        %1099 = vmatprep.subr.mxu0 0.0
        %1100 = vmatpush1.msra.mxu0 0.0
        %1101 = vmatprep.subr.mxu0 0.0
        %1102 = vmatpush1.msra.mxu0 0.0
        %1103 = vmatprep.subr.mxu0 0.0
        %1104 = vmatpush1.msra.mxu0 0.0
        %1105 = vmatprep.subr.mxu0 0.0
        %1106 = vmatpush1.msra.mxu0 0.0
        %1107 = vmatprep.subr.mxu0 0.0
        %1108 = vmatpush1.msra.mxu0 0.0
        %1109 = vmatprep.subr.mxu0 0.0
        %1110 = vmatpush1.msra.mxu0 0.0
        %1111 = vmatprep.subr.mxu0 0.0
        %1112 = vmatpush1.msra.mxu0 0.0
        %1113 = vmatprep.subr.mxu0 0.0
        %1114 = vmatpush1.msra.mxu0 0.0
        %1115 = vmatprep.subr.mxu0 0.0
        %1116 = vmatpush1.msra.mxu0 0.0
        %1117 = vmatprep.subr.mxu0 0.0
        %1118 = vmatpush1.msra.mxu0 0.0
        %1119 = vmatprep.subr.mxu0 0.0
        %1120 = vmatpush1.msra.mxu0 0.0
        %1121 = vmatprep.subr.mxu0 0.0
        %1122 = vmatpush1.msra.mxu0 0.0
        %1123 = vmatprep.subr.mxu0 0.0
        %1124 = vmatpush1.msra.mxu0 0.0
        %1125 = vmatprep.mubr.f32.mxu0 0.0
        %1126 = vmatmul.mubr.f32.gmra.mrb[0].mxu0 %v473
        %v1127 = vpop.f32.mrb[0].mxu0
        %v1128 = vadd.f32 0.0, %v1127
        %v1129 = vpop.f32.mrb[0].mxu0
        %1130 = vmatprep.mubr.f32.mxu0 0.0
        %1131 = vmatmul.mubr.f32.gmra.mrb[0].mxu0 %v476
        %v1132 = vpop.f32.mrb[0].mxu0
        %v1133 = vadd.f32 0.0, %v1132
        %v1134 = vpop.f32.mrb[0].mxu0
        %1135 = vdwg.mxu0
        %s1136 = scalar_lea.vmem %s398, 32 [#allocation10]
        %v1137 = vld [vmem:[%s1136] sm:$0xff]
        %v1138 = vld [vmem:[%s1136 + $0x8] sm:$0xff]
        %v1139 = vld [vmem:[%s1136 + $0x10] sm:$0xff]
        %v1140 = vld [vmem:[%s1136 + $0x18] sm:$0xff]
        %1141 = vmatprep.subr.mxu0 0.0
        %1142 = vmatpush1.msra.mxu0 %v1137
        %1143 = vmatprep.subr.mxu0 0.0
        %1144 = vmatpush1.msra.mxu0 %v1138
        %1145 = vmatprep.subr.mxu0 0.0
        %1146 = vmatpush1.msra.mxu0 %v1139
        %1147 = vmatprep.subr.mxu0 0.0
        %1148 = vmatpush1.msra.mxu0 %v1140
        %1149 = vmatprep.subr.mxu0 0.0
        %1150 = vmatpush1.msra.mxu0 0.0
        %1151 = vmatprep.subr.mxu0 0.0
        %1152 = vmatpush1.msra.mxu0 0.0
        %1153 = vmatprep.subr.mxu0 0.0
        %1154 = vmatpush1.msra.mxu0 0.0
        %1155 = vmatprep.subr.mxu0 0.0
        %1156 = vmatpush1.msra.mxu0 0.0
        %1157 = vmatprep.subr.mxu0 0.0
        %1158 = vmatpush1.msra.mxu0 0.0
        %1159 = vmatprep.subr.mxu0 0.0
        %1160 = vmatpush1.msra.mxu0 0.0
        %1161 = vmatprep.subr.mxu0 0.0
        %1162 = vmatpush1.msra.mxu0 0.0
        %1163 = vmatprep.subr.mxu0 0.0
        %1164 = vmatpush1.msra.mxu0 0.0
        %1165 = vmatprep.subr.mxu0 0.0
        %1166 = vmatpush1.msra.mxu0 0.0
        %1167 = vmatprep.subr.mxu0 0.0
        %1168 = vmatpush1.msra.mxu0 0.0
        %1169 = vmatprep.subr.mxu0 0.0
        %1170 = vmatpush1.msra.mxu0 0.0
        %1171 = vmatprep.subr.mxu0 0.0
        %1172 = vmatpush1.msra.mxu0 0.0
        %1173 = vmatprep.subr.mxu0 0.0
        %1174 = vmatpush1.msra.mxu0 0.0
        %1175 = vmatprep.subr.mxu0 0.0
        %1176 = vmatpush1.msra.mxu0 0.0
        %1177 = vmatprep.subr.mxu0 0.0
        %1178 = vmatpush1.msra.mxu0 0.0
        %1179 = vmatprep.subr.mxu0 0.0
        %1180 = vmatpush1.msra.mxu0 0.0
        %1181 = vmatprep.subr.mxu0 0.0
        %1182 = vmatpush1.msra.mxu0 0.0
        %1183 = vmatprep.subr.mxu0 0.0
        %1184 = vmatpush1.msra.mxu0 0.0
        %1185 = vmatprep.subr.mxu0 0.0
        %1186 = vmatpush1.msra.mxu0 0.0
        %1187 = vmatprep.subr.mxu0 0.0
        %1188 = vmatpush1.msra.mxu0 0.0
        %1189 = vmatprep.subr.mxu0 0.0
        %1190 = vmatpush1.msra.mxu0 0.0
        %1191 = vmatprep.subr.mxu0 0.0
        %1192 = vmatpush1.msra.mxu0 0.0
        %1193 = vmatprep.subr.mxu0 0.0
        %1194 = vmatpush1.msra.mxu0 0.0
        %1195 = vmatprep.subr.mxu0 0.0
        %1196 = vmatpush1.msra.mxu0 0.0
        %1197 = vmatprep.subr.mxu0 0.0
        %1198 = vmatpush1.msra.mxu0 0.0
        %1199 = vmatprep.subr.mxu0 0.0
        %1200 = vmatpush1.msra.mxu0 0.0
        %1201 = vmatprep.subr.mxu0 0.0
        %1202 = vmatpush1.msra.mxu0 0.0
        %1203 = vmatprep.subr.mxu0 0.0
        %1204 = vmatpush1.msra.mxu0 0.0
        %1205 = vmatprep.mubr.f32.mxu0 0.0
        %1206 = vmatmul.mubr.f32.gmra.mrb[0].mxu0 %v558
        %v1207 = vpop.f32.mrb[0].mxu0
        %v1208 = vadd.f32 0.0, %v1207
        %v1209 = vpop.f32.mrb[0].mxu0
        %1210 = vmatprep.mubr.f32.mxu0 0.0
        %1211 = vmatmul.mubr.f32.gmra.mrb[0].mxu0 %v561
        %v1212 = vpop.f32.mrb[0].mxu0
        %v1213 = vadd.f32 0.0, %v1212
        %v1214 = vpop.f32.mrb[0].mxu0
        %1215 = vdwg.mxu0
        %s1216 = scalar_lea.vmem %s407, 32 [#allocation11]
        %v1217 = vld [vmem:[%s1216] sm:$0xff]
        %v1218 = vld [vmem:[%s1216 + $0x8] sm:$0xff]
        %v1219 = vld [vmem:[%s1216 + $0x10] sm:$0xff]
        %v1220 = vld [vmem:[%s1216 + $0x18] sm:$0xff]
        %1221 = vmatprep.subr.mxu0 0.0
        %1222 = vmatpush1.msra.mxu0 %v1217
        %1223 = vmatprep.subr.mxu0 0.0
        %1224 = vmatpush1.msra.mxu0 %v1218
        %1225 = vmatprep.subr.mxu0 0.0
        %1226 = vmatpush1.msra.mxu0 %v1219
        %1227 = vmatprep.subr.mxu0 0.0
        %1228 = vmatpush1.msra.mxu0 %v1220
        %1229 = vmatprep.subr.mxu0 0.0
        %1230 = vmatpush1.msra.mxu0 0.0
        %1231 = vmatprep.subr.mxu0 0.0
        %1232 = vmatpush1.msra.mxu0 0.0
        %1233 = vmatprep.subr.mxu0 0.0
        %1234 = vmatpush1.msra.mxu0 0.0
        %1235 = vmatprep.subr.mxu0 0.0
        %1236 = vmatpush1.msra.mxu0 0.0
        %1237 = vmatprep.subr.mxu0 0.0
        %1238 = vmatpush1.msra.mxu0 0.0
        %1239 = vmatprep.subr.mxu0 0.0
        %1240 = vmatpush1.msra.mxu0 0.0
        %1241 = vmatprep.subr.mxu0 0.0
        %1242 = vmatpush1.msra.mxu0 0.0
        %1243 = vmatprep.subr.mxu0 0.0
        %1244 = vmatpush1.msra.mxu0 0.0
        %1245 = vmatprep.subr.mxu0 0.0
        %1246 = vmatpush1.msra.mxu0 0.0
        %1247 = vmatprep.subr.mxu0 0.0
        %1248 = vmatpush1.msra.mxu0 0.0
        %1249 = vmatprep.subr.mxu0 0.0
        %1250 = vmatpush1.msra.mxu0 0.0
        %1251 = vmatprep.subr.mxu0 0.0
        %1252 = vmatpush1.msra.mxu0 0.0
        %1253 = vmatprep.subr.mxu0 0.0
        %1254 = vmatpush1.msra.mxu0 0.0
        %1255 = vmatprep.subr.mxu0 0.0
        %1256 = vmatpush1.msra.mxu0 0.0
        %1257 = vmatprep.subr.mxu0 0.0
        %1258 = vmatpush1.msra.mxu0 0.0
        %1259 = vmatprep.subr.mxu0 0.0
        %1260 = vmatpush1.msra.mxu0 0.0
        %1261 = vmatprep.subr.mxu0 0.0
        %1262 = vmatpush1.msra.mxu0 0.0
        %1263 = vmatprep.subr.mxu0 0.0
        %1264 = vmatpush1.msra.mxu0 0.0
        %1265 = vmatprep.subr.mxu0 0.0
        %1266 = vmatpush1.msra.mxu0 0.0
        %1267 = vmatprep.subr.mxu0 0.0
        %1268 = vmatpush1.msra.mxu0 0.0
        %1269 = vmatprep.subr.mxu0 0.0
        %1270 = vmatpush1.msra.mxu0 0.0
        %1271 = vmatprep.subr.mxu0 0.0
        %1272 = vmatpush1.msra.mxu0 0.0
        %1273 = vmatprep.subr.mxu0 0.0
        %1274 = vmatpush1.msra.mxu0 0.0
        %1275 = vmatprep.subr.mxu0 0.0
        %1276 = vmatpush1.msra.mxu0 0.0
        %1277 = vmatprep.subr.mxu0 0.0
        %1278 = vmatpush1.msra.mxu0 0.0
        %1279 = vmatprep.subr.mxu0 0.0
        %1280 = vmatpush1.msra.mxu0 0.0
        %1281 = vmatprep.subr.mxu0 0.0
        %1282 = vmatpush1.msra.mxu0 0.0
        %1283 = vmatprep.subr.mxu0 0.0
        %1284 = vmatpush1.msra.mxu0 0.0
        %1285 = vmatprep.mubr.f32.mxu0 0.0
        %1286 = vmatmul.mubr.f32.gmra.mrb[0].mxu0 %v643
        %v1287 = vpop.f32.mrb[0].mxu0
        %v1288 = vadd.f32 0.0, %v1287
        %v1289 = vpop.f32.mrb[0].mxu0
        %1290 = vmatprep.mubr.f32.mxu0 0.0
        %1291 = vmatmul.mubr.f32.gmra.mrb[0].mxu0 %v646
        %v1292 = vpop.f32.mrb[0].mxu0
        %v1293 = vadd.f32 0.0, %v1292
        %v1294 = vpop.f32.mrb[0].mxu0
        %1295 = vdwg.mxu0
        %v1297 = vsel %vm471, %v1128, 0
        %v1300 = vsel %vm471, %v1208, 0
        %1302 = vmatprep.subr.mxu0 0.0
        %1303 = vmatpush1.xpose.msra.mxu0 %v1300
        %1304 = vmatprep.subr.mxu0 0.0
        %1305 = vmatpush1.xpose.msra.mxu0 0.0
        %1306 = vmatprep.subr.mxu0 0.0
        %1307 = vmatpush1.xpose.msra.mxu0 0.0
        %1308 = vmatprep.subr.mxu0 0.0
        %1309 = vmatpush1.xpose.msra.mxu0 0.0
        %1310 = vmatprep.subr.mxu0 0.0
        %1311 = vmatpush1.xpose.msra.mxu0 0.0
        %1312 = vmatprep.subr.mxu0 0.0
        %1313 = vmatpush1.xpose.msra.mxu0 0.0
        %1314 = vmatprep.subr.mxu0 0.0
        %1315 = vmatpush1.xpose.msra.mxu0 0.0
        %1316 = vmatprep.subr.mxu0 0.0
        %1317 = vmatpush1.xpose.msra.mxu0 0.0
        %1318 = vmatprep.subr.mxu0 0.0
        %1319 = vmatpush1.xpose.msra.mxu0 0.0
        %1320 = vmatprep.subr.mxu0 0.0
        %1321 = vmatpush1.xpose.msra.mxu0 0.0
        %1322 = vmatprep.subr.mxu0 0.0
        %1323 = vmatpush1.xpose.msra.mxu0 0.0
        %1324 = vmatprep.subr.mxu0 0.0
        %1325 = vmatpush1.xpose.msra.mxu0 0.0
        %1326 = vmatprep.subr.mxu0 0.0
        %1327 = vmatpush1.xpose.msra.mxu0 0.0
        %1328 = vmatprep.subr.mxu0 0.0
        %1329 = vmatpush1.xpose.msra.mxu0 0.0
        %1330 = vmatprep.subr.mxu0 0.0
        %1331 = vmatpush1.xpose.msra.mxu0 0.0
        %1332 = vmatprep.subr.mxu0 0.0
        %1333 = vmatpush1.xpose.msra.mxu0 0.0
        %1334 = vmatprep.subr.mxu0 0.0
        %1335 = vmatpush1.xpose.msra.mxu0 0.0
        %1336 = vmatprep.subr.mxu0 0.0
        %1337 = vmatpush1.xpose.msra.mxu0 0.0
        %1338 = vmatprep.subr.mxu0 0.0
        %1339 = vmatpush1.xpose.msra.mxu0 0.0
        %1340 = vmatprep.subr.mxu0 0.0
        %1341 = vmatpush1.xpose.msra.mxu0 0.0
        %1342 = vmatprep.subr.mxu0 0.0
        %1343 = vmatpush1.xpose.msra.mxu0 0.0
        %1344 = vmatprep.subr.mxu0 0.0
        %1345 = vmatpush1.xpose.msra.mxu0 0.0
        %1346 = vmatprep.subr.mxu0 0.0
        %1347 = vmatpush1.xpose.msra.mxu0 0.0
        %1348 = vmatprep.subr.mxu0 0.0
        %1349 = vmatpush1.xpose.msra.mxu0 0.0
        %1350 = vmatprep.subr.mxu0 0.0
        %1351 = vmatpush1.xpose.msra.mxu0 0.0
        %1352 = vmatprep.subr.mxu0 0.0
        %1353 = vmatpush1.xpose.msra.mxu0 0.0
        %1354 = vmatprep.subr.mxu0 0.0
        %1355 = vmatpush1.xpose.msra.mxu0 0.0
        %1356 = vmatprep.subr.mxu0 0.0
        %1357 = vmatpush1.xpose.msra.mxu0 0.0
        %1358 = vmatprep.subr.mxu0 0.0
        %1359 = vmatpush1.xpose.msra.mxu0 0.0
        %1360 = vmatprep.subr.mxu0 0.0
        %1361 = vmatpush1.xpose.msra.mxu0 0.0
        %1362 = vmatprep.subr.mxu0 0.0
        %1363 = vmatpush1.xpose.msra.mxu0 0.0
        %1364 = vmatprep.subr.mxu0 0.0
        %1365 = vmatpush1.xpose.msra.mxu0 0.0
        %1366 = vmatprep.mubr.f32.mxu0 0.0
        %1367 = vmatmul.mubr.f32.gmra.mrb[0].mxu0 %v1297
        %v1368 = vpop.f32.mrb[0].mxu0
        %v1369 = vadd.f32 0.0, %v1368
        %v1370 = vpop.f32.mrb[0].mxu0
        %1371 = vdwg.mxu0
        %v1372 = vmul.f32 %v1369, 0.17677669
        %v1373 = vsel %vm800, %v1372, -inf
        %1374 = vmax.xlane.f32.xlu0 %v1373
        %v1375 = vpop.xlane.xlu0 %1374
        %v1376 = vsub.f32 %v1372, %v1375
        %v1377 = vmul.f32 %v1376, 1.442695
        %v1378 = vpow.pop %v1377
        %v1379 = vsel %vm800, %v1378, 0.0
        %1380 = vadd.xlane.f32.xlu0 %v1379
        %v1381 = vpop.xlane.xlu0 %1380
        %v1382 = vrcp.pop %v1381
        %v1383 = vmul.f32 %v1378, %v1382
        %v1385 = vsel %vm800, %v1383, 0
        %1387 = vmatprep.subr.mxu0 0.0
        %1388 = vmatpush1.msra.mxu0 %v1288
        %1389 = vmatprep.subr.mxu0 0.0
        %1390 = vmatpush1.msra.mxu0 0.0
        %1391 = vmatprep.subr.mxu0 0.0
        %1392 = vmatpush1.msra.mxu0 0.0
        %1393 = vmatprep.subr.mxu0 0.0
        %1394 = vmatpush1.msra.mxu0 0.0
        %1395 = vmatprep.subr.mxu0 0.0
        %1396 = vmatpush1.msra.mxu0 0.0
        %1397 = vmatprep.subr.mxu0 0.0
        %1398 = vmatpush1.msra.mxu0 0.0
        %1399 = vmatprep.subr.mxu0 0.0
        %1400 = vmatpush1.msra.mxu0 0.0
        %1401 = vmatprep.subr.mxu0 0.0
        %1402 = vmatpush1.msra.mxu0 0.0
        %1403 = vmatprep.subr.mxu0 0.0
        %1404 = vmatpush1.msra.mxu0 0.0
        %1405 = vmatprep.subr.mxu0 0.0
        %1406 = vmatpush1.msra.mxu0 0.0
        %1407 = vmatprep.subr.mxu0 0.0
        %1408 = vmatpush1.msra.mxu0 0.0
        %1409 = vmatprep.subr.mxu0 0.0
        %1410 = vmatpush1.msra.mxu0 0.0
        %1411 = vmatprep.subr.mxu0 0.0
        %1412 = vmatpush1.msra.mxu0 0.0
        %1413 = vmatprep.subr.mxu0 0.0
        %1414 = vmatpush1.msra.mxu0 0.0
        %1415 = vmatprep.subr.mxu0 0.0
        %1416 = vmatpush1.msra.mxu0 0.0
        %1417 = vmatprep.subr.mxu0 0.0
        %1418 = vmatpush1.msra.mxu0 0.0
        %1419 = vmatprep.subr.mxu0 0.0
        %1420 = vmatpush1.msra.mxu0 0.0
        %1421 = vmatprep.subr.mxu0 0.0
        %1422 = vmatpush1.msra.mxu0 0.0
        %1423 = vmatprep.subr.mxu0 0.0
        %1424 = vmatpush1.msra.mxu0 0.0
        %1425 = vmatprep.subr.mxu0 0.0
        %1426 = vmatpush1.msra.mxu0 0.0
        %1427 = vmatprep.subr.mxu0 0.0
        %1428 = vmatpush1.msra.mxu0 0.0
        %1429 = vmatprep.subr.mxu0 0.0
        %1430 = vmatpush1.msra.mxu0 0.0
        %1431 = vmatprep.subr.mxu0 0.0
        %1432 = vmatpush1.msra.mxu0 0.0
        %1433 = vmatprep.subr.mxu0 0.0
        %1434 = vmatpush1.msra.mxu0 0.0
        %1435 = vmatprep.subr.mxu0 0.0
        %1436 = vmatpush1.msra.mxu0 0.0
        %1437 = vmatprep.subr.mxu0 0.0
        %1438 = vmatpush1.msra.mxu0 0.0
        %1439 = vmatprep.subr.mxu0 0.0
        %1440 = vmatpush1.msra.mxu0 0.0
        %1441 = vmatprep.subr.mxu0 0.0
        %1442 = vmatpush1.msra.mxu0 0.0
        %1443 = vmatprep.subr.mxu0 0.0
        %1444 = vmatpush1.msra.mxu0 0.0
        %1445 = vmatprep.subr.mxu0 0.0
        %1446 = vmatpush1.msra.mxu0 0.0
        %1447 = vmatprep.subr.mxu0 0.0
        %1448 = vmatpush1.msra.mxu0 0.0
        %1449 = vmatprep.subr.mxu0 0.0
        %1450 = vmatpush1.msra.mxu0 0.0
        %1451 = vmatprep.mubr.f32.mxu0 0.0
        %1452 = vmatmul.mubr.f32.gmra.mrb[0].mxu0 %v1385
        %v1453 = vpop.f32.mrb[0].mxu0
        %v1454 = vadd.f32 0.0, %v1453
        %v1455 = vpop.f32.mrb[0].mxu0
        %1456 = vdwg.mxu0
        %v1458 = vsel %vm471, %v1133, 0
        %v1461 = vsel %vm471, %v1213, 0
        %1463 = vmatprep.subr.mxu0 0.0
        %1464 = vmatpush1.xpose.msra.mxu0 %v1461
        %1465 = vmatprep.subr.mxu0 0.0
        %1466 = vmatpush1.xpose.msra.mxu0 0.0
        %1467 = vmatprep.subr.mxu0 0.0
        %1468 = vmatpush1.xpose.msra.mxu0 0.0
        %1469 = vmatprep.subr.mxu0 0.0
        %1470 = vmatpush1.xpose.msra.mxu0 0.0
        %1471 = vmatprep.subr.mxu0 0.0
        %1472 = vmatpush1.xpose.msra.mxu0 0.0
        %1473 = vmatprep.subr.mxu0 0.0
        %1474 = vmatpush1.xpose.msra.mxu0 0.0
        %1475 = vmatprep.subr.mxu0 0.0
        %1476 = vmatpush1.xpose.msra.mxu0 0.0
        %1477 = vmatprep.subr.mxu0 0.0
        %1478 = vmatpush1.xpose.msra.mxu0 0.0
        %1479 = vmatprep.subr.mxu0 0.0
        %1480 = vmatpush1.xpose.msra.mxu0 0.0
        %1481 = vmatprep.subr.mxu0 0.0
        %1482 = vmatpush1.xpose.msra.mxu0 0.0
        %1483 = vmatprep.subr.mxu0 0.0
        %1484 = vmatpush1.xpose.msra.mxu0 0.0
        %1485 = vmatprep.subr.mxu0 0.0
        %1486 = vmatpush1.xpose.msra.mxu0 0.0
        %1487 = vmatprep.subr.mxu0 0.0
        %1488 = vmatpush1.xpose.msra.mxu0 0.0
        %1489 = vmatprep.subr.mxu0 0.0
        %1490 = vmatpush1.xpose.msra.mxu0 0.0
        %1491 = vmatprep.subr.mxu0 0.0
        %1492 = vmatpush1.xpose.msra.mxu0 0.0
        %1493 = vmatprep.subr.mxu0 0.0
        %1494 = vmatpush1.xpose.msra.mxu0 0.0
        %1495 = vmatprep.subr.mxu0 0.0
        %1496 = vmatpush1.xpose.msra.mxu0 0.0
        %1497 = vmatprep.subr.mxu0 0.0
        %1498 = vmatpush1.xpose.msra.mxu0 0.0
        %1499 = vmatprep.subr.mxu0 0.0
        %1500 = vmatpush1.xpose.msra.mxu0 0.0
        %1501 = vmatprep.subr.mxu0 0.0
        %1502 = vmatpush1.xpose.msra.mxu0 0.0
        %1503 = vmatprep.subr.mxu0 0.0
        %1504 = vmatpush1.xpose.msra.mxu0 0.0
        %1505 = vmatprep.subr.mxu0 0.0
        %1506 = vmatpush1.xpose.msra.mxu0 0.0
        %1507 = vmatprep.subr.mxu0 0.0
        %1508 = vmatpush1.xpose.msra.mxu0 0.0
        %1509 = vmatprep.subr.mxu0 0.0
        %1510 = vmatpush1.xpose.msra.mxu0 0.0
        %1511 = vmatprep.subr.mxu0 0.0
        %1512 = vmatpush1.xpose.msra.mxu0 0.0
        %1513 = vmatprep.subr.mxu0 0.0
        %1514 = vmatpush1.xpose.msra.mxu0 0.0
        %1515 = vmatprep.subr.mxu0 0.0
        %1516 = vmatpush1.xpose.msra.mxu0 0.0
        %1517 = vmatprep.subr.mxu0 0.0
        %1518 = vmatpush1.xpose.msra.mxu0 0.0
        %1519 = vmatprep.subr.mxu0 0.0
        %1520 = vmatpush1.xpose.msra.mxu0 0.0
        %1521 = vmatprep.subr.mxu0 0.0
        %1522 = vmatpush1.xpose.msra.mxu0 0.0
        %1523 = vmatprep.subr.mxu0 0.0
        %1524 = vmatpush1.xpose.msra.mxu0 0.0
        %1525 = vmatprep.subr.mxu0 0.0
        %1526 = vmatpush1.xpose.msra.mxu0 0.0
        %1527 = vmatprep.mubr.f32.mxu0 0.0
        %1528 = vmatmul.mubr.f32.gmra.mrb[0].mxu0 %v1458
        %v1529 = vpop.f32.mrb[0].mxu0
        %v1530 = vadd.f32 0.0, %v1529
        %v1531 = vpop.f32.mrb[0].mxu0
        %1532 = vdwg.mxu0
        %v1533 = vmul.f32 %v1530, 0.17677669
        %v1534 = vsel %vm800, %v1533, -inf
        %1535 = vmax.xlane.f32.xlu0 %v1534
        %v1536 = vpop.xlane.xlu0 %1535
        %v1537 = vsub.f32 %v1533, %v1536
        %v1538 = vmul.f32 %v1537, 1.442695
        %v1539 = vpow.pop %v1538
        %v1540 = vsel %vm800, %v1539, 0.0
        %1541 = vadd.xlane.f32.xlu0 %v1540
        %v1542 = vpop.xlane.xlu0 %1541
        %v1543 = vrcp.pop %v1542
        %v1544 = vmul.f32 %v1539, %v1543
        %v1546 = vsel %vm800, %v1544, 0
        %1548 = vmatprep.subr.mxu0 0.0
        %1549 = vmatpush1.msra.mxu0 %v1293
        %1550 = vmatprep.subr.mxu0 0.0
        %1551 = vmatpush1.msra.mxu0 0.0
        %1552 = vmatprep.subr.mxu0 0.0
        %1553 = vmatpush1.msra.mxu0 0.0
        %1554 = vmatprep.subr.mxu0 0.0
        %1555 = vmatpush1.msra.mxu0 0.0
        %1556 = vmatprep.subr.mxu0 0.0
        %1557 = vmatpush1.msra.mxu0 0.0
        %1558 = vmatprep.subr.mxu0 0.0
        %1559 = vmatpush1.msra.mxu0 0.0
        %1560 = vmatprep.subr.mxu0 0.0
        %1561 = vmatpush1.msra.mxu0 0.0
        %1562 = vmatprep.subr.mxu0 0.0
        %1563 = vmatpush1.msra.mxu0 0.0
        %1564 = vmatprep.subr.mxu0 0.0
        %1565 = vmatpush1.msra.mxu0 0.0
        %1566 = vmatprep.subr.mxu0 0.0
        %1567 = vmatpush1.msra.mxu0 0.0
        %1568 = vmatprep.subr.mxu0 0.0
        %1569 = vmatpush1.msra.mxu0 0.0
        %1570 = vmatprep.subr.mxu0 0.0
        %1571 = vmatpush1.msra.mxu0 0.0
        %1572 = vmatprep.subr.mxu0 0.0
        %1573 = vmatpush1.msra.mxu0 0.0
        %1574 = vmatprep.subr.mxu0 0.0
        %1575 = vmatpush1.msra.mxu0 0.0
        %1576 = vmatprep.subr.mxu0 0.0
        %1577 = vmatpush1.msra.mxu0 0.0
        %1578 = vmatprep.subr.mxu0 0.0
        %1579 = vmatpush1.msra.mxu0 0.0
        %1580 = vmatprep.subr.mxu0 0.0
        %1581 = vmatpush1.msra.mxu0 0.0
        %1582 = vmatprep.subr.mxu0 0.0
        %1583 = vmatpush1.msra.mxu0 0.0
        %1584 = vmatprep.subr.mxu0 0.0
        %1585 = vmatpush1.msra.mxu0 0.0
        %1586 = vmatprep.subr.mxu0 0.0
        %1587 = vmatpush1.msra.mxu0 0.0
        %1588 = vmatprep.subr.mxu0 0.0
        %1589 = vmatpush1.msra.mxu0 0.0
        %1590 = vmatprep.subr.mxu0 0.0
        %1591 = vmatpush1.msra.mxu0 0.0
        %1592 = vmatprep.subr.mxu0 0.0
        %1593 = vmatpush1.msra.mxu0 0.0
        %1594 = vmatprep.subr.mxu0 0.0
        %1595 = vmatpush1.msra.mxu0 0.0
        %1596 = vmatprep.subr.mxu0 0.0
        %1597 = vmatpush1.msra.mxu0 0.0
        %1598 = vmatprep.subr.mxu0 0.0
        %1599 = vmatpush1.msra.mxu0 0.0
        %1600 = vmatprep.subr.mxu0 0.0
        %1601 = vmatpush1.msra.mxu0 0.0
        %1602 = vmatprep.subr.mxu0 0.0
        %1603 = vmatpush1.msra.mxu0 0.0
        %1604 = vmatprep.subr.mxu0 0.0
        %1605 = vmatpush1.msra.mxu0 0.0
        %1606 = vmatprep.subr.mxu0 0.0
        %1607 = vmatpush1.msra.mxu0 0.0
        %1608 = vmatprep.subr.mxu0 0.0
        %1609 = vmatpush1.msra.mxu0 0.0
        %1610 = vmatprep.subr.mxu0 0.0
        %1611 = vmatpush1.msra.mxu0 0.0
        %1612 = vmatprep.mubr.f32.mxu0 0.0
        %1613 = vmatmul.mubr.f32.gmra.mrb[0].mxu0 %v1546
        %v1614 = vpop.f32.mrb[0].mxu0
        %v1615 = vadd.f32 0.0, %v1614
        %v1616 = vpop.f32.mrb[0].mxu0
        %1617 = vdwg.mxu0
        %vm1618 = vcmp.ne.f32.partialorder %v1454, %v1454
        %vm1619 = vcmp.ne.f32.partialorder %v1615, %v1615
        %v1620 = vsel %vm1618, 0.0, %v1454
        %v1621 = vsel %vm1619, 0.0, %v1615
        %v1622 = vadd.f32 %v1050, %v1620
        %v1623 = vadd.f32 %v1051, %v1621
        %v1624 = vsel %vm1618, 0.0, 1.0
        %v1625 = vsel %vm1619, 0.0, 1.0
        %v1626 = vadd.f32 %v1054, %v1624
        %v1627 = vadd.f32 %v1055, %v1625
        %s1628 = scalar_lea.vmem %s389, 64 [#allocation8]
        %v1629 = vld [vmem:[%s1628] sm:$0xff]
        %v1630 = vld [vmem:[%s1628 + $0x8] sm:$0xff]
        %v1631 = vld [vmem:[%s1628 + $0x10] sm:$0xff]
        %v1632 = vld [vmem:[%s1628 + $0x18] sm:$0xff]
        %1633 = vmatprep.subr.mxu0 0.0
        %1634 = vmatpush1.msra.mxu0 %v1629
        %1635 = vmatprep.subr.mxu0 0.0
        %1636 = vmatpush1.msra.mxu0 %v1630
        %1637 = vmatprep.subr.mxu0 0.0
        %1638 = vmatpush1.msra.mxu0 %v1631
        %1639 = vmatprep.subr.mxu0 0.0
        %1640 = vmatpush1.msra.mxu0 %v1632
        %1641 = vmatprep.subr.mxu0 0.0
        %1642 = vmatpush1.msra.mxu0 0.0
        %1643 = vmatprep.subr.mxu0 0.0
        %1644 = vmatpush1.msra.mxu0 0.0
        %1645 = vmatprep.subr.mxu0 0.0
        %1646 = vmatpush1.msra.mxu0 0.0
        %1647 = vmatprep.subr.mxu0 0.0
        %1648 = vmatpush1.msra.mxu0 0.0
        %1649 = vmatprep.subr.mxu0 0.0
        %1650 = vmatpush1.msra.mxu0 0.0
        %1651 = vmatprep.subr.mxu0 0.0
        %1652 = vmatpush1.msra.mxu0 0.0
        %1653 = vmatprep.subr.mxu0 0.0
        %1654 = vmatpush1.msra.mxu0 0.0
        %1655 = vmatprep.subr.mxu0 0.0
        %1656 = vmatpush1.msra.mxu0 0.0
        %1657 = vmatprep.subr.mxu0 0.0
        %1658 = vmatpush1.msra.mxu0 0.0
        %1659 = vmatprep.subr.mxu0 0.0
        %1660 = vmatpush1.msra.mxu0 0.0
        %1661 = vmatprep.subr.mxu0 0.0
        %1662 = vmatpush1.msra.mxu0 0.0
        %1663 = vmatprep.subr.mxu0 0.0
        %1664 = vmatpush1.msra.mxu0 0.0
        %1665 = vmatprep.subr.mxu0 0.0
        %1666 = vmatpush1.msra.mxu0 0.0
        %1667 = vmatprep.subr.mxu0 0.0
        %1668 = vmatpush1.msra.mxu0 0.0
        %1669 = vmatprep.subr.mxu0 0.0
        %1670 = vmatpush1.msra.mxu0 0.0
        %1671 = vmatprep.subr.mxu0 0.0
        %1672 = vmatpush1.msra.mxu0 0.0
        %1673 = vmatprep.subr.mxu0 0.0
        %1674 = vmatpush1.msra.mxu0 0.0
        %1675 = vmatprep.subr.mxu0 0.0
        %1676 = vmatpush1.msra.mxu0 0.0
        %1677 = vmatprep.subr.mxu0 0.0
        %1678 = vmatpush1.msra.mxu0 0.0
        %1679 = vmatprep.subr.mxu0 0.0
        %1680 = vmatpush1.msra.mxu0 0.0
        %1681 = vmatprep.subr.mxu0 0.0
        %1682 = vmatpush1.msra.mxu0 0.0
        %1683 = vmatprep.subr.mxu0 0.0
        %1684 = vmatpush1.msra.mxu0 0.0
        %1685 = vmatprep.subr.mxu0 0.0
        %1686 = vmatpush1.msra.mxu0 0.0
        %1687 = vmatprep.subr.mxu0 0.0
        %1688 = vmatpush1.msra.mxu0 0.0
        %1689 = vmatprep.subr.mxu0 0.0
        %1690 = vmatpush1.msra.mxu0 0.0
        %1691 = vmatprep.subr.mxu0 0.0
        %1692 = vmatpush1.msra.mxu0 0.0
        %1693 = vmatprep.subr.mxu0 0.0
        %1694 = vmatpush1.msra.mxu0 0.0
        %1695 = vmatprep.subr.mxu0 0.0
        %1696 = vmatpush1.msra.mxu0 0.0
        %1697 = vmatprep.mubr.f32.mxu0 0.0
        %1698 = vmatmul.mubr.f32.gmra.mrb[0].mxu0 %v473
        %v1699 = vpop.f32.mrb[0].mxu0
        %v1700 = vadd.f32 0.0, %v1699
        %v1701 = vpop.f32.mrb[0].mxu0
        %1702 = vmatprep.mubr.f32.mxu0 0.0
        %1703 = vmatmul.mubr.f32.gmra.mrb[0].mxu0 %v476
        %v1704 = vpop.f32.mrb[0].mxu0
        %v1705 = vadd.f32 0.0, %v1704
        %v1706 = vpop.f32.mrb[0].mxu0
        %1707 = vdwg.mxu0
        %s1708 = scalar_lea.vmem %s398, 64 [#allocation10]
        %v1709 = vld [vmem:[%s1708] sm:$0xff]
        %v1710 = vld [vmem:[%s1708 + $0x8] sm:$0xff]
        %v1711 = vld [vmem:[%s1708 + $0x10] sm:$0xff]
        %v1712 = vld [vmem:[%s1708 + $0x18] sm:$0xff]
        %1713 = vmatprep.subr.mxu0 0.0
        %1714 = vmatpush1.msra.mxu0 %v1709
        %1715 = vmatprep.subr.mxu0 0.0
        %1716 = vmatpush1.msra.mxu0 %v1710
        %1717 = vmatprep.subr.mxu0 0.0
        %1718 = vmatpush1.msra.mxu0 %v1711
        %1719 = vmatprep.subr.mxu0 0.0
        %1720 = vmatpush1.msra.mxu0 %v1712
        %1721 = vmatprep.subr.mxu0 0.0
        %1722 = vmatpush1.msra.mxu0 0.0
        %1723 = vmatprep.subr.mxu0 0.0
        %1724 = vmatpush1.msra.mxu0 0.0
        %1725 = vmatprep.subr.mxu0 0.0
        %1726 = vmatpush1.msra.mxu0 0.0
        %1727 = vmatprep.subr.mxu0 0.0
        %1728 = vmatpush1.msra.mxu0 0.0
        %1729 = vmatprep.subr.mxu0 0.0
        %1730 = vmatpush1.msra.mxu0 0.0
        %1731 = vmatprep.subr.mxu0 0.0
        %1732 = vmatpush1.msra.mxu0 0.0
        %1733 = vmatprep.subr.mxu0 0.0
        %1734 = vmatpush1.msra.mxu0 0.0
        %1735 = vmatprep.subr.mxu0 0.0
        %1736 = vmatpush1.msra.mxu0 0.0
        %1737 = vmatprep.subr.mxu0 0.0
        %1738 = vmatpush1.msra.mxu0 0.0
        %1739 = vmatprep.subr.mxu0 0.0
        %1740 = vmatpush1.msra.mxu0 0.0
        %1741 = vmatprep.subr.mxu0 0.0
        %1742 = vmatpush1.msra.mxu0 0.0
        %1743 = vmatprep.subr.mxu0 0.0
        %1744 = vmatpush1.msra.mxu0 0.0
        %1745 = vmatprep.subr.mxu0 0.0
        %1746 = vmatpush1.msra.mxu0 0.0
        %1747 = vmatprep.subr.mxu0 0.0
        %1748 = vmatpush1.msra.mxu0 0.0
        %1749 = vmatprep.subr.mxu0 0.0
        %1750 = vmatpush1.msra.mxu0 0.0
        %1751 = vmatprep.subr.mxu0 0.0
        %1752 = vmatpush1.msra.mxu0 0.0
        %1753 = vmatprep.subr.mxu0 0.0
        %1754 = vmatpush1.msra.mxu0 0.0
        %1755 = vmatprep.subr.mxu0 0.0
        %1756 = vmatpush1.msra.mxu0 0.0
        %1757 = vmatprep.subr.mxu0 0.0
        %1758 = vmatpush1.msra.mxu0 0.0
        %1759 = vmatprep.subr.mxu0 0.0
        %1760 = vmatpush1.msra.mxu0 0.0
        %1761 = vmatprep.subr.mxu0 0.0
        %1762 = vmatpush1.msra.mxu0 0.0
        %1763 = vmatprep.subr.mxu0 0.0
        %1764 = vmatpush1.msra.mxu0 0.0
        %1765 = vmatprep.subr.mxu0 0.0
        %1766 = vmatpush1.msra.mxu0 0.0
        %1767 = vmatprep.subr.mxu0 0.0
        %1768 = vmatpush1.msra.mxu0 0.0
        %1769 = vmatprep.subr.mxu0 0.0
        %1770 = vmatpush1.msra.mxu0 0.0
        %1771 = vmatprep.subr.mxu0 0.0
        %1772 = vmatpush1.msra.mxu0 0.0
        %1773 = vmatprep.subr.mxu0 0.0
        %1774 = vmatpush1.msra.mxu0 0.0
        %1775 = vmatprep.subr.mxu0 0.0
        %1776 = vmatpush1.msra.mxu0 0.0
        %1777 = vmatprep.mubr.f32.mxu0 0.0
        %1778 = vmatmul.mubr.f32.gmra.mrb[0].mxu0 %v558
        %v1779 = vpop.f32.mrb[0].mxu0
        %v1780 = vadd.f32 0.0, %v1779
        %v1781 = vpop.f32.mrb[0].mxu0
        %1782 = vmatprep.mubr.f32.mxu0 0.0
        %1783 = vmatmul.mubr.f32.gmra.mrb[0].mxu0 %v561
        %v1784 = vpop.f32.mrb[0].mxu0
        %v1785 = vadd.f32 0.0, %v1784
        %v1786 = vpop.f32.mrb[0].mxu0
        %1787 = vdwg.mxu0
        %s1788 = scalar_lea.vmem %s407, 64 [#allocation11]
        %v1789 = vld [vmem:[%s1788] sm:$0xff]
        %v1790 = vld [vmem:[%s1788 + $0x8] sm:$0xff]
        %v1791 = vld [vmem:[%s1788 + $0x10] sm:$0xff]
        %v1792 = vld [vmem:[%s1788 + $0x18] sm:$0xff]
        %1793 = vmatprep.subr.mxu0 0.0
        %1794 = vmatpush1.msra.mxu0 %v1789
        %1795 = vmatprep.subr.mxu0 0.0
        %1796 = vmatpush1.msra.mxu0 %v1790
        %1797 = vmatprep.subr.mxu0 0.0
        %1798 = vmatpush1.msra.mxu0 %v1791
        %1799 = vmatprep.subr.mxu0 0.0
        %1800 = vmatpush1.msra.mxu0 %v1792
        %1801 = vmatprep.subr.mxu0 0.0
        %1802 = vmatpush1.msra.mxu0 0.0
        %1803 = vmatprep.subr.mxu0 0.0
        %1804 = vmatpush1.msra.mxu0 0.0
        %1805 = vmatprep.subr.mxu0 0.0
        %1806 = vmatpush1.msra.mxu0 0.0
        %1807 = vmatprep.subr.mxu0 0.0
        %1808 = vmatpush1.msra.mxu0 0.0
        %1809 = vmatprep.subr.mxu0 0.0
        %1810 = vmatpush1.msra.mxu0 0.0
        %1811 = vmatprep.subr.mxu0 0.0
        %1812 = vmatpush1.msra.mxu0 0.0
        %1813 = vmatprep.subr.mxu0 0.0
        %1814 = vmatpush1.msra.mxu0 0.0
        %1815 = vmatprep.subr.mxu0 0.0
        %1816 = vmatpush1.msra.mxu0 0.0
        %1817 = vmatprep.subr.mxu0 0.0
        %1818 = vmatpush1.msra.mxu0 0.0
        %1819 = vmatprep.subr.mxu0 0.0
        %1820 = vmatpush1.msra.mxu0 0.0
        %1821 = vmatprep.subr.mxu0 0.0
        %1822 = vmatpush1.msra.mxu0 0.0
        %1823 = vmatprep.subr.mxu0 0.0
        %1824 = vmatpush1.msra.mxu0 0.0
        %1825 = vmatprep.subr.mxu0 0.0
        %1826 = vmatpush1.msra.mxu0 0.0
        %1827 = vmatprep.subr.mxu0 0.0
        %1828 = vmatpush1.msra.mxu0 0.0
        %1829 = vmatprep.subr.mxu0 0.0
        %1830 = vmatpush1.msra.mxu0 0.0
        %1831 = vmatprep.subr.mxu0 0.0
        %1832 = vmatpush1.msra.mxu0 0.0
        %1833 = vmatprep.subr.mxu0 0.0
        %1834 = vmatpush1.msra.mxu0 0.0
        %1835 = vmatprep.subr.mxu0 0.0
        %1836 = vmatpush1.msra.mxu0 0.0
        %1837 = vmatprep.subr.mxu0 0.0
        %1838 = vmatpush1.msra.mxu0 0.0
        %1839 = vmatprep.subr.mxu0 0.0
        %1840 = vmatpush1.msra.mxu0 0.0
        %1841 = vmatprep.subr.mxu0 0.0
        %1842 = vmatpush1.msra.mxu0 0.0
        %1843 = vmatprep.subr.mxu0 0.0
        %1844 = vmatpush1.msra.mxu0 0.0
        %1845 = vmatprep.subr.mxu0 0.0
        %1846 = vmatpush1.msra.mxu0 0.0
        %1847 = vmatprep.subr.mxu0 0.0
        %1848 = vmatpush1.msra.mxu0 0.0
        %1849 = vmatprep.subr.mxu0 0.0
        %1850 = vmatpush1.msra.mxu0 0.0
        %1851 = vmatprep.subr.mxu0 0.0
        %1852 = vmatpush1.msra.mxu0 0.0
        %1853 = vmatprep.subr.mxu0 0.0
        %1854 = vmatpush1.msra.mxu0 0.0
        %1855 = vmatprep.subr.mxu0 0.0
        %1856 = vmatpush1.msra.mxu0 0.0
        %1857 = vmatprep.mubr.f32.mxu0 0.0
        %1858 = vmatmul.mubr.f32.gmra.mrb[0].mxu0 %v643
        %v1859 = vpop.f32.mrb[0].mxu0
        %v1860 = vadd.f32 0.0, %v1859
        %v1861 = vpop.f32.mrb[0].mxu0
        %1862 = vmatprep.mubr.f32.mxu0 0.0
        %1863 = vmatmul.mubr.f32.gmra.mrb[0].mxu0 %v646
        %v1864 = vpop.f32.mrb[0].mxu0
        %v1865 = vadd.f32 0.0, %v1864
        %v1866 = vpop.f32.mrb[0].mxu0
        %1867 = vdwg.mxu0
        %v1869 = vsel %vm471, %v1700, 0
        %v1872 = vsel %vm471, %v1780, 0
        %1874 = vmatprep.subr.mxu0 0.0
        %1875 = vmatpush1.xpose.msra.mxu0 %v1872
        %1876 = vmatprep.subr.mxu0 0.0
        %1877 = vmatpush1.xpose.msra.mxu0 0.0
        %1878 = vmatprep.subr.mxu0 0.0
        %1879 = vmatpush1.xpose.msra.mxu0 0.0
        %1880 = vmatprep.subr.mxu0 0.0
        %1881 = vmatpush1.xpose.msra.mxu0 0.0
        %1882 = vmatprep.subr.mxu0 0.0
        %1883 = vmatpush1.xpose.msra.mxu0 0.0
        %1884 = vmatprep.subr.mxu0 0.0
        %1885 = vmatpush1.xpose.msra.mxu0 0.0
        %1886 = vmatprep.subr.mxu0 0.0
        %1887 = vmatpush1.xpose.msra.mxu0 0.0
        %1888 = vmatprep.subr.mxu0 0.0
        %1889 = vmatpush1.xpose.msra.mxu0 0.0
        %1890 = vmatprep.subr.mxu0 0.0
        %1891 = vmatpush1.xpose.msra.mxu0 0.0
        %1892 = vmatprep.subr.mxu0 0.0
        %1893 = vmatpush1.xpose.msra.mxu0 0.0
        %1894 = vmatprep.subr.mxu0 0.0
        %1895 = vmatpush1.xpose.msra.mxu0 0.0
        %1896 = vmatprep.subr.mxu0 0.0
        %1897 = vmatpush1.xpose.msra.mxu0 0.0
        %1898 = vmatprep.subr.mxu0 0.0
        %1899 = vmatpush1.xpose.msra.mxu0 0.0
        %1900 = vmatprep.subr.mxu0 0.0
        %1901 = vmatpush1.xpose.msra.mxu0 0.0
        %1902 = vmatprep.subr.mxu0 0.0
        %1903 = vmatpush1.xpose.msra.mxu0 0.0
        %1904 = vmatprep.subr.mxu0 0.0
        %1905 = vmatpush1.xpose.msra.mxu0 0.0
        %1906 = vmatprep.subr.mxu0 0.0
        %1907 = vmatpush1.xpose.msra.mxu0 0.0
        %1908 = vmatprep.subr.mxu0 0.0
        %1909 = vmatpush1.xpose.msra.mxu0 0.0
        %1910 = vmatprep.subr.mxu0 0.0
        %1911 = vmatpush1.xpose.msra.mxu0 0.0
        %1912 = vmatprep.subr.mxu0 0.0
        %1913 = vmatpush1.xpose.msra.mxu0 0.0
        %1914 = vmatprep.subr.mxu0 0.0
        %1915 = vmatpush1.xpose.msra.mxu0 0.0
        %1916 = vmatprep.subr.mxu0 0.0
        %1917 = vmatpush1.xpose.msra.mxu0 0.0
        %1918 = vmatprep.subr.mxu0 0.0
        %1919 = vmatpush1.xpose.msra.mxu0 0.0
        %1920 = vmatprep.subr.mxu0 0.0
        %1921 = vmatpush1.xpose.msra.mxu0 0.0
        %1922 = vmatprep.subr.mxu0 0.0
        %1923 = vmatpush1.xpose.msra.mxu0 0.0
        %1924 = vmatprep.subr.mxu0 0.0
        %1925 = vmatpush1.xpose.msra.mxu0 0.0
        %1926 = vmatprep.subr.mxu0 0.0
        %1927 = vmatpush1.xpose.msra.mxu0 0.0
        %1928 = vmatprep.subr.mxu0 0.0
        %1929 = vmatpush1.xpose.msra.mxu0 0.0
        %1930 = vmatprep.subr.mxu0 0.0
        %1931 = vmatpush1.xpose.msra.mxu0 0.0
        %1932 = vmatprep.subr.mxu0 0.0
        %1933 = vmatpush1.xpose.msra.mxu0 0.0
        %1934 = vmatprep.subr.mxu0 0.0
        %1935 = vmatpush1.xpose.msra.mxu0 0.0
        %1936 = vmatprep.subr.mxu0 0.0
        %1937 = vmatpush1.xpose.msra.mxu0 0.0
        %1938 = vmatprep.mubr.f32.mxu0 0.0
        %1939 = vmatmul.mubr.f32.gmra.mrb[0].mxu0 %v1869
        %v1940 = vpop.f32.mrb[0].mxu0
        %v1941 = vadd.f32 0.0, %v1940
        %v1942 = vpop.f32.mrb[0].mxu0
        %1943 = vdwg.mxu0
        %v1944 = vmul.f32 %v1941, 0.17677669
        %v1945 = vsel %vm800, %v1944, -inf
        %1946 = vmax.xlane.f32.xlu0 %v1945
        %v1947 = vpop.xlane.xlu0 %1946
        %v1948 = vsub.f32 %v1944, %v1947
        %v1949 = vmul.f32 %v1948, 1.442695
        %v1950 = vpow.pop %v1949
        %v1951 = vsel %vm800, %v1950, 0.0
        %1952 = vadd.xlane.f32.xlu0 %v1951
        %v1953 = vpop.xlane.xlu0 %1952
        %v1954 = vrcp.pop %v1953
        %v1955 = vmul.f32 %v1950, %v1954
        %v1957 = vsel %vm800, %v1955, 0
        %1959 = vmatprep.subr.mxu0 0.0
        %1960 = vmatpush1.msra.mxu0 %v1860
        %1961 = vmatprep.subr.mxu0 0.0
        %1962 = vmatpush1.msra.mxu0 0.0
        %1963 = vmatprep.subr.mxu0 0.0
        %1964 = vmatpush1.msra.mxu0 0.0
        %1965 = vmatprep.subr.mxu0 0.0
        %1966 = vmatpush1.msra.mxu0 0.0
        %1967 = vmatprep.subr.mxu0 0.0
        %1968 = vmatpush1.msra.mxu0 0.0
        %1969 = vmatprep.subr.mxu0 0.0
        %1970 = vmatpush1.msra.mxu0 0.0
        %1971 = vmatprep.subr.mxu0 0.0
        %1972 = vmatpush1.msra.mxu0 0.0
        %1973 = vmatprep.subr.mxu0 0.0
        %1974 = vmatpush1.msra.mxu0 0.0
        %1975 = vmatprep.subr.mxu0 0.0
        %1976 = vmatpush1.msra.mxu0 0.0
        %1977 = vmatprep.subr.mxu0 0.0
        %1978 = vmatpush1.msra.mxu0 0.0
        %1979 = vmatprep.subr.mxu0 0.0
        %1980 = vmatpush1.msra.mxu0 0.0
        %1981 = vmatprep.subr.mxu0 0.0
        %1982 = vmatpush1.msra.mxu0 0.0
        %1983 = vmatprep.subr.mxu0 0.0
        %1984 = vmatpush1.msra.mxu0 0.0
        %1985 = vmatprep.subr.mxu0 0.0
        %1986 = vmatpush1.msra.mxu0 0.0
        %1987 = vmatprep.subr.mxu0 0.0
        %1988 = vmatpush1.msra.mxu0 0.0
        %1989 = vmatprep.subr.mxu0 0.0
        %1990 = vmatpush1.msra.mxu0 0.0
        %1991 = vmatprep.subr.mxu0 0.0
        %1992 = vmatpush1.msra.mxu0 0.0
        %1993 = vmatprep.subr.mxu0 0.0
        %1994 = vmatpush1.msra.mxu0 0.0
        %1995 = vmatprep.subr.mxu0 0.0
        %1996 = vmatpush1.msra.mxu0 0.0
        %1997 = vmatprep.subr.mxu0 0.0
        %1998 = vmatpush1.msra.mxu0 0.0
        %1999 = vmatprep.subr.mxu0 0.0
        %2000 = vmatpush1.msra.mxu0 0.0
        %2001 = vmatprep.subr.mxu0 0.0
        %2002 = vmatpush1.msra.mxu0 0.0
        %2003 = vmatprep.subr.mxu0 0.0
        %2004 = vmatpush1.msra.mxu0 0.0
        %2005 = vmatprep.subr.mxu0 0.0
        %2006 = vmatpush1.msra.mxu0 0.0
        %2007 = vmatprep.subr.mxu0 0.0
        %2008 = vmatpush1.msra.mxu0 0.0
        %2009 = vmatprep.subr.mxu0 0.0
        %2010 = vmatpush1.msra.mxu0 0.0
        %2011 = vmatprep.subr.mxu0 0.0
        %2012 = vmatpush1.msra.mxu0 0.0
        %2013 = vmatprep.subr.mxu0 0.0
        %2014 = vmatpush1.msra.mxu0 0.0
        %2015 = vmatprep.subr.mxu0 0.0
        %2016 = vmatpush1.msra.mxu0 0.0
        %2017 = vmatprep.subr.mxu0 0.0
        %2018 = vmatpush1.msra.mxu0 0.0
        %2019 = vmatprep.subr.mxu0 0.0
        %2020 = vmatpush1.msra.mxu0 0.0
        %2021 = vmatprep.subr.mxu0 0.0
        %2022 = vmatpush1.msra.mxu0 0.0
        %2023 = vmatprep.mubr.f32.mxu0 0.0
        %2024 = vmatmul.mubr.f32.gmra.mrb[0].mxu0 %v1957
        %v2025 = vpop.f32.mrb[0].mxu0
        %v2026 = vadd.f32 0.0, %v2025
        %v2027 = vpop.f32.mrb[0].mxu0
        %2028 = vdwg.mxu0
        %v2030 = vsel %vm471, %v1705, 0
        %v2033 = vsel %vm471, %v1785, 0
        %2035 = vmatprep.subr.mxu0 0.0
        %2036 = vmatpush1.xpose.msra.mxu0 %v2033
        %2037 = vmatprep.subr.mxu0 0.0
        %2038 = vmatpush1.xpose.msra.mxu0 0.0
        %2039 = vmatprep.subr.mxu0 0.0
        %2040 = vmatpush1.xpose.msra.mxu0 0.0
        %2041 = vmatprep.subr.mxu0 0.0
        %2042 = vmatpush1.xpose.msra.mxu0 0.0
        %2043 = vmatprep.subr.mxu0 0.0
        %2044 = vmatpush1.xpose.msra.mxu0 0.0
        %2045 = vmatprep.subr.mxu0 0.0
        %2046 = vmatpush1.xpose.msra.mxu0 0.0
        %2047 = vmatprep.subr.mxu0 0.0
        %2048 = vmatpush1.xpose.msra.mxu0 0.0
        %2049 = vmatprep.subr.mxu0 0.0
        %2050 = vmatpush1.xpose.msra.mxu0 0.0
        %2051 = vmatprep.subr.mxu0 0.0
        %2052 = vmatpush1.xpose.msra.mxu0 0.0
        %2053 = vmatprep.subr.mxu0 0.0
        %2054 = vmatpush1.xpose.msra.mxu0 0.0
        %2055 = vmatprep.subr.mxu0 0.0
        %2056 = vmatpush1.xpose.msra.mxu0 0.0
        %2057 = vmatprep.subr.mxu0 0.0
        %2058 = vmatpush1.xpose.msra.mxu0 0.0
        %2059 = vmatprep.subr.mxu0 0.0
        %2060 = vmatpush1.xpose.msra.mxu0 0.0
        %2061 = vmatprep.subr.mxu0 0.0
        %2062 = vmatpush1.xpose.msra.mxu0 0.0
        %2063 = vmatprep.subr.mxu0 0.0
        %2064 = vmatpush1.xpose.msra.mxu0 0.0
        %2065 = vmatprep.subr.mxu0 0.0
        %2066 = vmatpush1.xpose.msra.mxu0 0.0
        %2067 = vmatprep.subr.mxu0 0.0
        %2068 = vmatpush1.xpose.msra.mxu0 0.0
        %2069 = vmatprep.subr.mxu0 0.0
        %2070 = vmatpush1.xpose.msra.mxu0 0.0
        %2071 = vmatprep.subr.mxu0 0.0
        %2072 = vmatpush1.xpose.msra.mxu0 0.0
        %2073 = vmatprep.subr.mxu0 0.0
        %2074 = vmatpush1.xpose.msra.mxu0 0.0
        %2075 = vmatprep.subr.mxu0 0.0
        %2076 = vmatpush1.xpose.msra.mxu0 0.0
        %2077 = vmatprep.subr.mxu0 0.0
        %2078 = vmatpush1.xpose.msra.mxu0 0.0
        %2079 = vmatprep.subr.mxu0 0.0
        %2080 = vmatpush1.xpose.msra.mxu0 0.0
        %2081 = vmatprep.subr.mxu0 0.0
        %2082 = vmatpush1.xpose.msra.mxu0 0.0
        %2083 = vmatprep.subr.mxu0 0.0
        %2084 = vmatpush1.xpose.msra.mxu0 0.0
        %2085 = vmatprep.subr.mxu0 0.0
        %2086 = vmatpush1.xpose.msra.mxu0 0.0
        %2087 = vmatprep.subr.mxu0 0.0
        %2088 = vmatpush1.xpose.msra.mxu0 0.0
        %2089 = vmatprep.subr.mxu0 0.0
        %2090 = vmatpush1.xpose.msra.mxu0 0.0
        %2091 = vmatprep.subr.mxu0 0.0
        %2092 = vmatpush1.xpose.msra.mxu0 0.0
        %2093 = vmatprep.subr.mxu0 0.0
        %2094 = vmatpush1.xpose.msra.mxu0 0.0
        %2095 = vmatprep.subr.mxu0 0.0
        %2096 = vmatpush1.xpose.msra.mxu0 0.0
        %2097 = vmatprep.subr.mxu0 0.0
        %2098 = vmatpush1.xpose.msra.mxu0 0.0
        %2099 = vmatprep.mubr.f32.mxu0 0.0
        %2100 = vmatmul.mubr.f32.gmra.mrb[0].mxu0 %v2030
        %v2101 = vpop.f32.mrb[0].mxu0
        %v2102 = vadd.f32 0.0, %v2101
        %v2103 = vpop.f32.mrb[0].mxu0
        %2104 = vdwg.mxu0
        %v2105 = vmul.f32 %v2102, 0.17677669
        %v2106 = vsel %vm800, %v2105, -inf
        %2107 = vmax.xlane.f32.xlu0 %v2106
        %v2108 = vpop.xlane.xlu0 %2107
        %v2109 = vsub.f32 %v2105, %v2108
        %v2110 = vmul.f32 %v2109, 1.442695
        %v2111 = vpow.pop %v2110
        %v2112 = vsel %vm800, %v2111, 0.0
        %2113 = vadd.xlane.f32.xlu0 %v2112
        %v2114 = vpop.xlane.xlu0 %2113
        %v2115 = vrcp.pop %v2114
        %v2116 = vmul.f32 %v2111, %v2115
        %v2118 = vsel %vm800, %v2116, 0
        %2120 = vmatprep.subr.mxu0 0.0
        %2121 = vmatpush1.msra.mxu0 %v1865
        %2122 = vmatprep.subr.mxu0 0.0
        %2123 = vmatpush1.msra.mxu0 0.0
        %2124 = vmatprep.subr.mxu0 0.0
        %2125 = vmatpush1.msra.mxu0 0.0
        %2126 = vmatprep.subr.mxu0 0.0
        %2127 = vmatpush1.msra.mxu0 0.0
        %2128 = vmatprep.subr.mxu0 0.0
        %2129 = vmatpush1.msra.mxu0 0.0
        %2130 = vmatprep.subr.mxu0 0.0
        %2131 = vmatpush1.msra.mxu0 0.0
        %2132 = vmatprep.subr.mxu0 0.0
        %2133 = vmatpush1.msra.mxu0 0.0
        %2134 = vmatprep.subr.mxu0 0.0
        %2135 = vmatpush1.msra.mxu0 0.0
        %2136 = vmatprep.subr.mxu0 0.0
        %2137 = vmatpush1.msra.mxu0 0.0
        %2138 = vmatprep.subr.mxu0 0.0
        %2139 = vmatpush1.msra.mxu0 0.0
        %2140 = vmatprep.subr.mxu0 0.0
        %2141 = vmatpush1.msra.mxu0 0.0
        %2142 = vmatprep.subr.mxu0 0.0
        %2143 = vmatpush1.msra.mxu0 0.0
        %2144 = vmatprep.subr.mxu0 0.0
        %2145 = vmatpush1.msra.mxu0 0.0
        %2146 = vmatprep.subr.mxu0 0.0
        %2147 = vmatpush1.msra.mxu0 0.0
        %2148 = vmatprep.subr.mxu0 0.0
        %2149 = vmatpush1.msra.mxu0 0.0
        %2150 = vmatprep.subr.mxu0 0.0
        %2151 = vmatpush1.msra.mxu0 0.0
        %2152 = vmatprep.subr.mxu0 0.0
        %2153 = vmatpush1.msra.mxu0 0.0
        %2154 = vmatprep.subr.mxu0 0.0
        %2155 = vmatpush1.msra.mxu0 0.0
        %2156 = vmatprep.subr.mxu0 0.0
        %2157 = vmatpush1.msra.mxu0 0.0
        %2158 = vmatprep.subr.mxu0 0.0
        %2159 = vmatpush1.msra.mxu0 0.0
        %2160 = vmatprep.subr.mxu0 0.0
        %2161 = vmatpush1.msra.mxu0 0.0
        %2162 = vmatprep.subr.mxu0 0.0
        %2163 = vmatpush1.msra.mxu0 0.0
        %2164 = vmatprep.subr.mxu0 0.0
        %2165 = vmatpush1.msra.mxu0 0.0
        %2166 = vmatprep.subr.mxu0 0.0
        %2167 = vmatpush1.msra.mxu0 0.0
        %2168 = vmatprep.subr.mxu0 0.0
        %2169 = vmatpush1.msra.mxu0 0.0
        %2170 = vmatprep.subr.mxu0 0.0
        %2171 = vmatpush1.msra.mxu0 0.0
        %2172 = vmatprep.subr.mxu0 0.0
        %2173 = vmatpush1.msra.mxu0 0.0
        %2174 = vmatprep.subr.mxu0 0.0
        %2175 = vmatpush1.msra.mxu0 0.0
        %2176 = vmatprep.subr.mxu0 0.0
        %2177 = vmatpush1.msra.mxu0 0.0
        %2178 = vmatprep.subr.mxu0 0.0
        %2179 = vmatpush1.msra.mxu0 0.0
        %2180 = vmatprep.subr.mxu0 0.0
        %2181 = vmatpush1.msra.mxu0 0.0
        %2182 = vmatprep.subr.mxu0 0.0
        %2183 = vmatpush1.msra.mxu0 0.0
        %2184 = vmatprep.mubr.f32.mxu0 0.0
        %2185 = vmatmul.mubr.f32.gmra.mrb[0].mxu0 %v2118
        %v2186 = vpop.f32.mrb[0].mxu0
        %v2187 = vadd.f32 0.0, %v2186
        %v2188 = vpop.f32.mrb[0].mxu0
        %2189 = vdwg.mxu0
        %vm2190 = vcmp.ne.f32.partialorder %v2026, %v2026
        %vm2191 = vcmp.ne.f32.partialorder %v2187, %v2187
        %v2192 = vsel %vm2190, 0.0, %v2026
        %v2193 = vsel %vm2191, 0.0, %v2187
        %v2194 = vadd.f32 %v1622, %v2192
        %v2195 = vadd.f32 %v1623, %v2193
        %v2196 = vsel %vm2190, 0.0, 1.0
        %v2197 = vsel %vm2191, 0.0, 1.0
        %v2198 = vadd.f32 %v1626, %v2196
        %v2199 = vadd.f32 %v1627, %v2197
        %s2200 = scalar_lea.vmem %s389, 96 [#allocation8]
        %v2201 = vld [vmem:[%s2200] sm:$0xff]
        %v2202 = vld [vmem:[%s2200 + $0x8] sm:$0xff]
        %v2203 = vld [vmem:[%s2200 + $0x10] sm:$0xff]
        %v2204 = vld [vmem:[%s2200 + $0x18] sm:$0xff]
        %2205 = vmatprep.subr.mxu0 0.0
        %2206 = vmatpush1.msra.mxu0 %v2201
        %2207 = vmatprep.subr.mxu0 0.0
        %2208 = vmatpush1.msra.mxu0 %v2202
        %2209 = vmatprep.subr.mxu0 0.0
        %2210 = vmatpush1.msra.mxu0 %v2203
        %2211 = vmatprep.subr.mxu0 0.0
        %2212 = vmatpush1.msra.mxu0 %v2204
        %2213 = vmatprep.subr.mxu0 0.0
        %2214 = vmatpush1.msra.mxu0 0.0
        %2215 = vmatprep.subr.mxu0 0.0
        %2216 = vmatpush1.msra.mxu0 0.0
        %2217 = vmatprep.subr.mxu0 0.0
        %2218 = vmatpush1.msra.mxu0 0.0
        %2219 = vmatprep.subr.mxu0 0.0
        %2220 = vmatpush1.msra.mxu0 0.0
        %2221 = vmatprep.subr.mxu0 0.0
        %2222 = vmatpush1.msra.mxu0 0.0
        %2223 = vmatprep.subr.mxu0 0.0
        %2224 = vmatpush1.msra.mxu0 0.0
        %2225 = vmatprep.subr.mxu0 0.0
        %2226 = vmatpush1.msra.mxu0 0.0
        %2227 = vmatprep.subr.mxu0 0.0
        %2228 = vmatpush1.msra.mxu0 0.0
        %2229 = vmatprep.subr.mxu0 0.0
        %2230 = vmatpush1.msra.mxu0 0.0
        %2231 = vmatprep.subr.mxu0 0.0
        %2232 = vmatpush1.msra.mxu0 0.0
        %2233 = vmatprep.subr.mxu0 0.0
        %2234 = vmatpush1.msra.mxu0 0.0
        %2235 = vmatprep.subr.mxu0 0.0
        %2236 = vmatpush1.msra.mxu0 0.0
        %2237 = vmatprep.subr.mxu0 0.0
        %2238 = vmatpush1.msra.mxu0 0.0
        %2239 = vmatprep.subr.mxu0 0.0
        %2240 = vmatpush1.msra.mxu0 0.0
        %2241 = vmatprep.subr.mxu0 0.0
        %2242 = vmatpush1.msra.mxu0 0.0
        %2243 = vmatprep.subr.mxu0 0.0
        %2244 = vmatpush1.msra.mxu0 0.0
        %2245 = vmatprep.subr.mxu0 0.0
        %2246 = vmatpush1.msra.mxu0 0.0
        %2247 = vmatprep.subr.mxu0 0.0
        %2248 = vmatpush1.msra.mxu0 0.0
        %2249 = vmatprep.subr.mxu0 0.0
        %2250 = vmatpush1.msra.mxu0 0.0
        %2251 = vmatprep.subr.mxu0 0.0
        %2252 = vmatpush1.msra.mxu0 0.0
        %2253 = vmatprep.subr.mxu0 0.0
        %2254 = vmatpush1.msra.mxu0 0.0
        %2255 = vmatprep.subr.mxu0 0.0
        %2256 = vmatpush1.msra.mxu0 0.0
        %2257 = vmatprep.subr.mxu0 0.0
        %2258 = vmatpush1.msra.mxu0 0.0
        %2259 = vmatprep.subr.mxu0 0.0
        %2260 = vmatpush1.msra.mxu0 0.0
        %2261 = vmatprep.subr.mxu0 0.0
        %2262 = vmatpush1.msra.mxu0 0.0
        %2263 = vmatprep.subr.mxu0 0.0
        %2264 = vmatpush1.msra.mxu0 0.0
        %2265 = vmatprep.subr.mxu0 0.0
        %2266 = vmatpush1.msra.mxu0 0.0
        %2267 = vmatprep.subr.mxu0 0.0
        %2268 = vmatpush1.msra.mxu0 0.0
        %2269 = vmatprep.mubr.f32.mxu0 0.0
        %2270 = vmatmul.mubr.f32.gmra.mrb[0].mxu0 %v473
        %v2271 = vpop.f32.mrb[0].mxu0
        %v2272 = vadd.f32 0.0, %v2271
        %v2273 = vpop.f32.mrb[0].mxu0
        %2274 = vmatprep.mubr.f32.mxu0 0.0
        %2275 = vmatmul.mubr.f32.gmra.mrb[0].mxu0 %v476
        %v2276 = vpop.f32.mrb[0].mxu0
        %v2277 = vadd.f32 0.0, %v2276
        %v2278 = vpop.f32.mrb[0].mxu0
        %2279 = vdwg.mxu0
        %s2280 = scalar_lea.vmem %s398, 96 [#allocation10]
        %v2281 = vld [vmem:[%s2280] sm:$0xff]
        %v2282 = vld [vmem:[%s2280 + $0x8] sm:$0xff]
        %v2283 = vld [vmem:[%s2280 + $0x10] sm:$0xff]
        %v2284 = vld [vmem:[%s2280 + $0x18] sm:$0xff]
        %2285 = vmatprep.subr.mxu0 0.0
        %2286 = vmatpush1.msra.mxu0 %v2281
        %2287 = vmatprep.subr.mxu0 0.0
        %2288 = vmatpush1.msra.mxu0 %v2282
        %2289 = vmatprep.subr.mxu0 0.0
        %2290 = vmatpush1.msra.mxu0 %v2283
        %2291 = vmatprep.subr.mxu0 0.0
        %2292 = vmatpush1.msra.mxu0 %v2284
        %2293 = vmatprep.subr.mxu0 0.0
        %2294 = vmatpush1.msra.mxu0 0.0
        %2295 = vmatprep.subr.mxu0 0.0
        %2296 = vmatpush1.msra.mxu0 0.0
        %2297 = vmatprep.subr.mxu0 0.0
        %2298 = vmatpush1.msra.mxu0 0.0
        %2299 = vmatprep.subr.mxu0 0.0
        %2300 = vmatpush1.msra.mxu0 0.0
        %2301 = vmatprep.subr.mxu0 0.0
        %2302 = vmatpush1.msra.mxu0 0.0
        %2303 = vmatprep.subr.mxu0 0.0
        %2304 = vmatpush1.msra.mxu0 0.0
        %2305 = vmatprep.subr.mxu0 0.0
        %2306 = vmatpush1.msra.mxu0 0.0
        %2307 = vmatprep.subr.mxu0 0.0
        %2308 = vmatpush1.msra.mxu0 0.0
        %2309 = vmatprep.subr.mxu0 0.0
        %2310 = vmatpush1.msra.mxu0 0.0
        %2311 = vmatprep.subr.mxu0 0.0
        %2312 = vmatpush1.msra.mxu0 0.0
        %2313 = vmatprep.subr.mxu0 0.0
        %2314 = vmatpush1.msra.mxu0 0.0
        %2315 = vmatprep.subr.mxu0 0.0
        %2316 = vmatpush1.msra.mxu0 0.0
        %2317 = vmatprep.subr.mxu0 0.0
        %2318 = vmatpush1.msra.mxu0 0.0
        %2319 = vmatprep.subr.mxu0 0.0
        %2320 = vmatpush1.msra.mxu0 0.0
        %2321 = vmatprep.subr.mxu0 0.0
        %2322 = vmatpush1.msra.mxu0 0.0
        %2323 = vmatprep.subr.mxu0 0.0
        %2324 = vmatpush1.msra.mxu0 0.0
        %2325 = vmatprep.subr.mxu0 0.0
        %2326 = vmatpush1.msra.mxu0 0.0
        %2327 = vmatprep.subr.mxu0 0.0
        %2328 = vmatpush1.msra.mxu0 0.0
        %2329 = vmatprep.subr.mxu0 0.0
        %2330 = vmatpush1.msra.mxu0 0.0
        %2331 = vmatprep.subr.mxu0 0.0
        %2332 = vmatpush1.msra.mxu0 0.0
        %2333 = vmatprep.subr.mxu0 0.0
        %2334 = vmatpush1.msra.mxu0 0.0
        %2335 = vmatprep.subr.mxu0 0.0
        %2336 = vmatpush1.msra.mxu0 0.0
        %2337 = vmatprep.subr.mxu0 0.0
        %2338 = vmatpush1.msra.mxu0 0.0
        %2339 = vmatprep.subr.mxu0 0.0
        %2340 = vmatpush1.msra.mxu0 0.0
        %2341 = vmatprep.subr.mxu0 0.0
        %2342 = vmatpush1.msra.mxu0 0.0
        %2343 = vmatprep.subr.mxu0 0.0
        %2344 = vmatpush1.msra.mxu0 0.0
        %2345 = vmatprep.subr.mxu0 0.0
        %2346 = vmatpush1.msra.mxu0 0.0
        %2347 = vmatprep.subr.mxu0 0.0
        %2348 = vmatpush1.msra.mxu0 0.0
        %2349 = vmatprep.mubr.f32.mxu0 0.0
        %2350 = vmatmul.mubr.f32.gmra.mrb[0].mxu0 %v558
        %v2351 = vpop.f32.mrb[0].mxu0
        %v2352 = vadd.f32 0.0, %v2351
        %v2353 = vpop.f32.mrb[0].mxu0
        %2354 = vmatprep.mubr.f32.mxu0 0.0
        %2355 = vmatmul.mubr.f32.gmra.mrb[0].mxu0 %v561
        %v2356 = vpop.f32.mrb[0].mxu0
        %v2357 = vadd.f32 0.0, %v2356
        %v2358 = vpop.f32.mrb[0].mxu0
        %2359 = vdwg.mxu0
        %s2360 = scalar_lea.vmem %s407, 96 [#allocation11]
        %v2361 = vld [vmem:[%s2360] sm:$0xff]
        %v2362 = vld [vmem:[%s2360 + $0x8] sm:$0xff]
        %v2363 = vld [vmem:[%s2360 + $0x10] sm:$0xff]
        %v2364 = vld [vmem:[%s2360 + $0x18] sm:$0xff]
        %2365 = vmatprep.subr.mxu0 0.0
        %2366 = vmatpush1.msra.mxu0 %v2361
        %2367 = vmatprep.subr.mxu0 0.0
        %2368 = vmatpush1.msra.mxu0 %v2362
        %2369 = vmatprep.subr.mxu0 0.0
        %2370 = vmatpush1.msra.mxu0 %v2363
        %2371 = vmatprep.subr.mxu0 0.0
        %2372 = vmatpush1.msra.mxu0 %v2364
        %2373 = vmatprep.subr.mxu0 0.0
        %2374 = vmatpush1.msra.mxu0 0.0
        %2375 = vmatprep.subr.mxu0 0.0
        %2376 = vmatpush1.msra.mxu0 0.0
        %2377 = vmatprep.subr.mxu0 0.0
        %2378 = vmatpush1.msra.mxu0 0.0
        %2379 = vmatprep.subr.mxu0 0.0
        %2380 = vmatpush1.msra.mxu0 0.0
        %2381 = vmatprep.subr.mxu0 0.0
        %2382 = vmatpush1.msra.mxu0 0.0
        %2383 = vmatprep.subr.mxu0 0.0
        %2384 = vmatpush1.msra.mxu0 0.0
        %2385 = vmatprep.subr.mxu0 0.0
        %2386 = vmatpush1.msra.mxu0 0.0
        %2387 = vmatprep.subr.mxu0 0.0
        %2388 = vmatpush1.msra.mxu0 0.0
        %2389 = vmatprep.subr.mxu0 0.0
        %2390 = vmatpush1.msra.mxu0 0.0
        %2391 = vmatprep.subr.mxu0 0.0
        %2392 = vmatpush1.msra.mxu0 0.0
        %2393 = vmatprep.subr.mxu0 0.0
        %2394 = vmatpush1.msra.mxu0 0.0
        %2395 = vmatprep.subr.mxu0 0.0
        %2396 = vmatpush1.msra.mxu0 0.0
        %2397 = vmatprep.subr.mxu0 0.0
        %2398 = vmatpush1.msra.mxu0 0.0
        %2399 = vmatprep.subr.mxu0 0.0
        %2400 = vmatpush1.msra.mxu0 0.0
        %2401 = vmatprep.subr.mxu0 0.0
        %2402 = vmatpush1.msra.mxu0 0.0
        %2403 = vmatprep.subr.mxu0 0.0
        %2404 = vmatpush1.msra.mxu0 0.0
        %2405 = vmatprep.subr.mxu0 0.0
        %2406 = vmatpush1.msra.mxu0 0.0
        %2407 = vmatprep.subr.mxu0 0.0
        %2408 = vmatpush1.msra.mxu0 0.0
        %2409 = vmatprep.subr.mxu0 0.0
        %2410 = vmatpush1.msra.mxu0 0.0
        %2411 = vmatprep.subr.mxu0 0.0
        %2412 = vmatpush1.msra.mxu0 0.0
        %2413 = vmatprep.subr.mxu0 0.0
        %2414 = vmatpush1.msra.mxu0 0.0
        %2415 = vmatprep.subr.mxu0 0.0
        %2416 = vmatpush1.msra.mxu0 0.0
        %2417 = vmatprep.subr.mxu0 0.0
        %2418 = vmatpush1.msra.mxu0 0.0
        %2419 = vmatprep.subr.mxu0 0.0
        %2420 = vmatpush1.msra.mxu0 0.0
        %2421 = vmatprep.subr.mxu0 0.0
        %2422 = vmatpush1.msra.mxu0 0.0
        %2423 = vmatprep.subr.mxu0 0.0
        %2424 = vmatpush1.msra.mxu0 0.0
        %2425 = vmatprep.subr.mxu0 0.0
        %2426 = vmatpush1.msra.mxu0 0.0
        %2427 = vmatprep.subr.mxu0 0.0
        %2428 = vmatpush1.msra.mxu0 0.0
        %2429 = vmatprep.mubr.f32.mxu0 0.0
        %2430 = vmatmul.mubr.f32.gmra.mrb[0].mxu0 %v643
        %v2431 = vpop.f32.mrb[0].mxu0
        %v2432 = vadd.f32 0.0, %v2431
        %v2433 = vpop.f32.mrb[0].mxu0
        %2434 = vmatprep.mubr.f32.mxu0 0.0
        %2435 = vmatmul.mubr.f32.gmra.mrb[0].mxu0 %v646
        %v2436 = vpop.f32.mrb[0].mxu0
        %v2437 = vadd.f32 0.0, %v2436
        %v2438 = vpop.f32.mrb[0].mxu0
        %2439 = vdwg.mxu0
        %v2441 = vsel %vm471, %v2272, 0
        %v2444 = vsel %vm471, %v2352, 0
        %2446 = vmatprep.subr.mxu0 0.0
        %2447 = vmatpush1.xpose.msra.mxu0 %v2444
        %2448 = vmatprep.subr.mxu0 0.0
        %2449 = vmatpush1.xpose.msra.mxu0 0.0
        %2450 = vmatprep.subr.mxu0 0.0
        %2451 = vmatpush1.xpose.msra.mxu0 0.0
        %2452 = vmatprep.subr.mxu0 0.0
        %2453 = vmatpush1.xpose.msra.mxu0 0.0
        %2454 = vmatprep.subr.mxu0 0.0
        %2455 = vmatpush1.xpose.msra.mxu0 0.0
        %2456 = vmatprep.subr.mxu0 0.0
        %2457 = vmatpush1.xpose.msra.mxu0 0.0
        %2458 = vmatprep.subr.mxu0 0.0
        %2459 = vmatpush1.xpose.msra.mxu0 0.0
        %2460 = vmatprep.subr.mxu0 0.0
        %2461 = vmatpush1.xpose.msra.mxu0 0.0
        %2462 = vmatprep.subr.mxu0 0.0
        %2463 = vmatpush1.xpose.msra.mxu0 0.0
        %2464 = vmatprep.subr.mxu0 0.0
        %2465 = vmatpush1.xpose.msra.mxu0 0.0
        %2466 = vmatprep.subr.mxu0 0.0
        %2467 = vmatpush1.xpose.msra.mxu0 0.0
        %2468 = vmatprep.subr.mxu0 0.0
        %2469 = vmatpush1.xpose.msra.mxu0 0.0
        %2470 = vmatprep.subr.mxu0 0.0
        %2471 = vmatpush1.xpose.msra.mxu0 0.0
        %2472 = vmatprep.subr.mxu0 0.0
        %2473 = vmatpush1.xpose.msra.mxu0 0.0
        %2474 = vmatprep.subr.mxu0 0.0
        %2475 = vmatpush1.xpose.msra.mxu0 0.0
        %2476 = vmatprep.subr.mxu0 0.0
        %2477 = vmatpush1.xpose.msra.mxu0 0.0
        %2478 = vmatprep.subr.mxu0 0.0
        %2479 = vmatpush1.xpose.msra.mxu0 0.0
        %2480 = vmatprep.subr.mxu0 0.0
        %2481 = vmatpush1.xpose.msra.mxu0 0.0
        %2482 = vmatprep.subr.mxu0 0.0
        %2483 = vmatpush1.xpose.msra.mxu0 0.0
        %2484 = vmatprep.subr.mxu0 0.0
        %2485 = vmatpush1.xpose.msra.mxu0 0.0
        %2486 = vmatprep.subr.mxu0 0.0
        %2487 = vmatpush1.xpose.msra.mxu0 0.0
        %2488 = vmatprep.subr.mxu0 0.0
        %2489 = vmatpush1.xpose.msra.mxu0 0.0
        %2490 = vmatprep.subr.mxu0 0.0
        %2491 = vmatpush1.xpose.msra.mxu0 0.0
        %2492 = vmatprep.subr.mxu0 0.0
        %2493 = vmatpush1.xpose.msra.mxu0 0.0
        %2494 = vmatprep.subr.mxu0 0.0
        %2495 = vmatpush1.xpose.msra.mxu0 0.0
        %2496 = vmatprep.subr.mxu0 0.0
        %2497 = vmatpush1.xpose.msra.mxu0 0.0
        %2498 = vmatprep.subr.mxu0 0.0
        %2499 = vmatpush1.xpose.msra.mxu0 0.0
        %2500 = vmatprep.subr.mxu0 0.0
        %2501 = vmatpush1.xpose.msra.mxu0 0.0
        %2502 = vmatprep.subr.mxu0 0.0
        %2503 = vmatpush1.xpose.msra.mxu0 0.0
        %2504 = vmatprep.subr.mxu0 0.0
        %2505 = vmatpush1.xpose.msra.mxu0 0.0
        %2506 = vmatprep.subr.mxu0 0.0
        %2507 = vmatpush1.xpose.msra.mxu0 0.0
        %2508 = vmatprep.subr.mxu0 0.0
        %2509 = vmatpush1.xpose.msra.mxu0 0.0
        %2510 = vmatprep.mubr.f32.mxu0 0.0
        %2511 = vmatmul.mubr.f32.gmra.mrb[0].mxu0 %v2441
        %v2512 = vpop.f32.mrb[0].mxu0
        %v2513 = vadd.f32 0.0, %v2512
        %v2514 = vpop.f32.mrb[0].mxu0
        %2515 = vdwg.mxu0
        %v2516 = vmul.f32 %v2513, 0.17677669
        %v2517 = vsel %vm800, %v2516, -inf
        %2518 = vmax.xlane.f32.xlu0 %v2517
        %v2519 = vpop.xlane.xlu0 %2518
        %v2520 = vsub.f32 %v2516, %v2519
        %v2521 = vmul.f32 %v2520, 1.442695
        %v2522 = vpow.pop %v2521
        %v2523 = vsel %vm800, %v2522, 0.0
        %2524 = vadd.xlane.f32.xlu0 %v2523
        %v2525 = vpop.xlane.xlu0 %2524
        %v2526 = vrcp.pop %v2525
        %v2527 = vmul.f32 %v2522, %v2526
        %v2529 = vsel %vm800, %v2527, 0
        %2531 = vmatprep.subr.mxu0 0.0
        %2532 = vmatpush1.msra.mxu0 %v2432
        %2533 = vmatprep.subr.mxu0 0.0
        %2534 = vmatpush1.msra.mxu0 0.0
        %2535 = vmatprep.subr.mxu0 0.0
        %2536 = vmatpush1.msra.mxu0 0.0
        %2537 = vmatprep.subr.mxu0 0.0
        %2538 = vmatpush1.msra.mxu0 0.0
        %2539 = vmatprep.subr.mxu0 0.0
        %2540 = vmatpush1.msra.mxu0 0.0
        %2541 = vmatprep.subr.mxu0 0.0
        %2542 = vmatpush1.msra.mxu0 0.0
        %2543 = vmatprep.subr.mxu0 0.0
        %2544 = vmatpush1.msra.mxu0 0.0
        %2545 = vmatprep.subr.mxu0 0.0
        %2546 = vmatpush1.msra.mxu0 0.0
        %2547 = vmatprep.subr.mxu0 0.0
        %2548 = vmatpush1.msra.mxu0 0.0
        %2549 = vmatprep.subr.mxu0 0.0
        %2550 = vmatpush1.msra.mxu0 0.0
        %2551 = vmatprep.subr.mxu0 0.0
        %2552 = vmatpush1.msra.mxu0 0.0
        %2553 = vmatprep.subr.mxu0 0.0
        %2554 = vmatpush1.msra.mxu0 0.0
        %2555 = vmatprep.subr.mxu0 0.0
        %2556 = vmatpush1.msra.mxu0 0.0
        %2557 = vmatprep.subr.mxu0 0.0
        %2558 = vmatpush1.msra.mxu0 0.0
        %2559 = vmatprep.subr.mxu0 0.0
        %2560 = vmatpush1.msra.mxu0 0.0
        %2561 = vmatprep.subr.mxu0 0.0
        %2562 = vmatpush1.msra.mxu0 0.0
        %2563 = vmatprep.subr.mxu0 0.0
        %2564 = vmatpush1.msra.mxu0 0.0
        %2565 = vmatprep.subr.mxu0 0.0
        %2566 = vmatpush1.msra.mxu0 0.0
        %2567 = vmatprep.subr.mxu0 0.0
        %2568 = vmatpush1.msra.mxu0 0.0
        %2569 = vmatprep.subr.mxu0 0.0
        %2570 = vmatpush1.msra.mxu0 0.0
        %2571 = vmatprep.subr.mxu0 0.0
        %2572 = vmatpush1.msra.mxu0 0.0
        %2573 = vmatprep.subr.mxu0 0.0
        %2574 = vmatpush1.msra.mxu0 0.0
        %2575 = vmatprep.subr.mxu0 0.0
        %2576 = vmatpush1.msra.mxu0 0.0
        %2577 = vmatprep.subr.mxu0 0.0
        %2578 = vmatpush1.msra.mxu0 0.0
        %2579 = vmatprep.subr.mxu0 0.0
        %2580 = vmatpush1.msra.mxu0 0.0
        %2581 = vmatprep.subr.mxu0 0.0
        %2582 = vmatpush1.msra.mxu0 0.0
        %2583 = vmatprep.subr.mxu0 0.0
        %2584 = vmatpush1.msra.mxu0 0.0
        %2585 = vmatprep.subr.mxu0 0.0
        %2586 = vmatpush1.msra.mxu0 0.0
        %2587 = vmatprep.subr.mxu0 0.0
        %2588 = vmatpush1.msra.mxu0 0.0
        %2589 = vmatprep.subr.mxu0 0.0
        %2590 = vmatpush1.msra.mxu0 0.0
        %2591 = vmatprep.subr.mxu0 0.0
        %2592 = vmatpush1.msra.mxu0 0.0
        %2593 = vmatprep.subr.mxu0 0.0
        %2594 = vmatpush1.msra.mxu0 0.0
        %2595 = vmatprep.mubr.f32.mxu0 0.0
        %2596 = vmatmul.mubr.f32.gmra.mrb[0].mxu0 %v2529
        %v2597 = vpop.f32.mrb[0].mxu0
        %v2598 = vadd.f32 0.0, %v2597
        %v2599 = vpop.f32.mrb[0].mxu0
        %2600 = vdwg.mxu0
        %v2602 = vsel %vm471, %v2277, 0
        %v2605 = vsel %vm471, %v2357, 0
        %2607 = vmatprep.subr.mxu0 0.0
        %2608 = vmatpush1.xpose.msra.mxu0 %v2605
        %2609 = vmatprep.subr.mxu0 0.0
        %2610 = vmatpush1.xpose.msra.mxu0 0.0
        %2611 = vmatprep.subr.mxu0 0.0
        %2612 = vmatpush1.xpose.msra.mxu0 0.0
        %2613 = vmatprep.subr.mxu0 0.0
        %2614 = vmatpush1.xpose.msra.mxu0 0.0
        %2615 = vmatprep.subr.mxu0 0.0
        %2616 = vmatpush1.xpose.msra.mxu0 0.0
        %2617 = vmatprep.subr.mxu0 0.0
        %2618 = vmatpush1.xpose.msra.mxu0 0.0
        %2619 = vmatprep.subr.mxu0 0.0
        %2620 = vmatpush1.xpose.msra.mxu0 0.0
        %2621 = vmatprep.subr.mxu0 0.0
        %2622 = vmatpush1.xpose.msra.mxu0 0.0
        %2623 = vmatprep.subr.mxu0 0.0
        %2624 = vmatpush1.xpose.msra.mxu0 0.0
        %2625 = vmatprep.subr.mxu0 0.0
        %2626 = vmatpush1.xpose.msra.mxu0 0.0
        %2627 = vmatprep.subr.mxu0 0.0
        %2628 = vmatpush1.xpose.msra.mxu0 0.0
        %2629 = vmatprep.subr.mxu0 0.0
        %2630 = vmatpush1.xpose.msra.mxu0 0.0
        %2631 = vmatprep.subr.mxu0 0.0
        %2632 = vmatpush1.xpose.msra.mxu0 0.0
        %2633 = vmatprep.subr.mxu0 0.0
        %2634 = vmatpush1.xpose.msra.mxu0 0.0
        %2635 = vmatprep.subr.mxu0 0.0
        %2636 = vmatpush1.xpose.msra.mxu0 0.0
        %2637 = vmatprep.subr.mxu0 0.0
        %2638 = vmatpush1.xpose.msra.mxu0 0.0
        %2639 = vmatprep.subr.mxu0 0.0
        %2640 = vmatpush1.xpose.msra.mxu0 0.0
        %2641 = vmatprep.subr.mxu0 0.0
        %2642 = vmatpush1.xpose.msra.mxu0 0.0
        %2643 = vmatprep.subr.mxu0 0.0
        %2644 = vmatpush1.xpose.msra.mxu0 0.0
        %2645 = vmatprep.subr.mxu0 0.0
        %2646 = vmatpush1.xpose.msra.mxu0 0.0
        %2647 = vmatprep.subr.mxu0 0.0
        %2648 = vmatpush1.xpose.msra.mxu0 0.0
        %2649 = vmatprep.subr.mxu0 0.0
        %2650 = vmatpush1.xpose.msra.mxu0 0.0
        %2651 = vmatprep.subr.mxu0 0.0
        %2652 = vmatpush1.xpose.msra.mxu0 0.0
        %2653 = vmatprep.subr.mxu0 0.0
        %2654 = vmatpush1.xpose.msra.mxu0 0.0
        %2655 = vmatprep.subr.mxu0 0.0
        %2656 = vmatpush1.xpose.msra.mxu0 0.0
        %2657 = vmatprep.subr.mxu0 0.0
        %2658 = vmatpush1.xpose.msra.mxu0 0.0
        %2659 = vmatprep.subr.mxu0 0.0
        %2660 = vmatpush1.xpose.msra.mxu0 0.0
        %2661 = vmatprep.subr.mxu0 0.0
        %2662 = vmatpush1.xpose.msra.mxu0 0.0
        %2663 = vmatprep.subr.mxu0 0.0
        %2664 = vmatpush1.xpose.msra.mxu0 0.0
        %2665 = vmatprep.subr.mxu0 0.0
        %2666 = vmatpush1.xpose.msra.mxu0 0.0
        %2667 = vmatprep.subr.mxu0 0.0
        %2668 = vmatpush1.xpose.msra.mxu0 0.0
        %2669 = vmatprep.subr.mxu0 0.0
        %2670 = vmatpush1.xpose.msra.mxu0 0.0
        %2671 = vmatprep.mubr.f32.mxu0 0.0
        %2672 = vmatmul.mubr.f32.gmra.mrb[0].mxu0 %v2602
        %v2673 = vpop.f32.mrb[0].mxu0
        %v2674 = vadd.f32 0.0, %v2673
        %v2675 = vpop.f32.mrb[0].mxu0
        %2676 = vdwg.mxu0
        %v2677 = vmul.f32 %v2674, 0.17677669
        %v2678 = vsel %vm800, %v2677, -inf
        %2679 = vmax.xlane.f32.xlu0 %v2678
        %v2680 = vpop.xlane.xlu0 %2679
        %v2681 = vsub.f32 %v2677, %v2680
        %v2682 = vmul.f32 %v2681, 1.442695
        %v2683 = vpow.pop %v2682
        %v2684 = vsel %vm800, %v2683, 0.0
        %2685 = vadd.xlane.f32.xlu0 %v2684
        %v2686 = vpop.xlane.xlu0 %2685
        %v2687 = vrcp.pop %v2686
        %v2688 = vmul.f32 %v2683, %v2687
        %v2690 = vsel %vm800, %v2688, 0
        %2692 = vmatprep.subr.mxu0 0.0
        %2693 = vmatpush1.msra.mxu0 %v2437
        %2694 = vmatprep.subr.mxu0 0.0
        %2695 = vmatpush1.msra.mxu0 0.0
        %2696 = vmatprep.subr.mxu0 0.0
        %2697 = vmatpush1.msra.mxu0 0.0
        %2698 = vmatprep.subr.mxu0 0.0
        %2699 = vmatpush1.msra.mxu0 0.0
        %2700 = vmatprep.subr.mxu0 0.0
        %2701 = vmatpush1.msra.mxu0 0.0
        %2702 = vmatprep.subr.mxu0 0.0
        %2703 = vmatpush1.msra.mxu0 0.0
        %2704 = vmatprep.subr.mxu0 0.0
        %2705 = vmatpush1.msra.mxu0 0.0
        %2706 = vmatprep.subr.mxu0 0.0
        %2707 = vmatpush1.msra.mxu0 0.0
        %2708 = vmatprep.subr.mxu0 0.0
        %2709 = vmatpush1.msra.mxu0 0.0
        %2710 = vmatprep.subr.mxu0 0.0
        %2711 = vmatpush1.msra.mxu0 0.0
        %2712 = vmatprep.subr.mxu0 0.0
        %2713 = vmatpush1.msra.mxu0 0.0
        %2714 = vmatprep.subr.mxu0 0.0
        %2715 = vmatpush1.msra.mxu0 0.0
        %2716 = vmatprep.subr.mxu0 0.0
        %2717 = vmatpush1.msra.mxu0 0.0
        %2718 = vmatprep.subr.mxu0 0.0
        %2719 = vmatpush1.msra.mxu0 0.0
        %2720 = vmatprep.subr.mxu0 0.0
        %2721 = vmatpush1.msra.mxu0 0.0
        %2722 = vmatprep.subr.mxu0 0.0
        %2723 = vmatpush1.msra.mxu0 0.0
        %2724 = vmatprep.subr.mxu0 0.0
        %2725 = vmatpush1.msra.mxu0 0.0
        %2726 = vmatprep.subr.mxu0 0.0
        %2727 = vmatpush1.msra.mxu0 0.0
        %2728 = vmatprep.subr.mxu0 0.0
        %2729 = vmatpush1.msra.mxu0 0.0
        %2730 = vmatprep.subr.mxu0 0.0
        %2731 = vmatpush1.msra.mxu0 0.0
        %2732 = vmatprep.subr.mxu0 0.0
        %2733 = vmatpush1.msra.mxu0 0.0
        %2734 = vmatprep.subr.mxu0 0.0
        %2735 = vmatpush1.msra.mxu0 0.0
        %2736 = vmatprep.subr.mxu0 0.0
        %2737 = vmatpush1.msra.mxu0 0.0
        %2738 = vmatprep.subr.mxu0 0.0
        %2739 = vmatpush1.msra.mxu0 0.0
        %2740 = vmatprep.subr.mxu0 0.0
        %2741 = vmatpush1.msra.mxu0 0.0
        %2742 = vmatprep.subr.mxu0 0.0
        %2743 = vmatpush1.msra.mxu0 0.0
        %2744 = vmatprep.subr.mxu0 0.0
        %2745 = vmatpush1.msra.mxu0 0.0
        %2746 = vmatprep.subr.mxu0 0.0
        %2747 = vmatpush1.msra.mxu0 0.0
        %2748 = vmatprep.subr.mxu0 0.0
        %2749 = vmatpush1.msra.mxu0 0.0
        %2750 = vmatprep.subr.mxu0 0.0
        %2751 = vmatpush1.msra.mxu0 0.0
        %2752 = vmatprep.subr.mxu0 0.0
        %2753 = vmatpush1.msra.mxu0 0.0
        %2754 = vmatprep.subr.mxu0 0.0
        %2755 = vmatpush1.msra.mxu0 0.0
        %2756 = vmatprep.mubr.f32.mxu0 0.0
        %2757 = vmatmul.mubr.f32.gmra.mrb[0].mxu0 %v2690
        %v2758 = vpop.f32.mrb[0].mxu0
        %v2759 = vadd.f32 0.0, %v2758
        %v2760 = vpop.f32.mrb[0].mxu0
        %2761 = vdwg.mxu0
        %vm2762 = vcmp.ne.f32.partialorder %v2598, %v2598
        %vm2763 = vcmp.ne.f32.partialorder %v2759, %v2759
        %v2764 = vsel %vm2762, 0.0, %v2598
        %v2765 = vsel %vm2763, 0.0, %v2759
        %v2766 = vadd.f32 %v2194, %v2764
        %v2767 = vadd.f32 %v2195, %v2765
        %v2768 = vsel %vm2762, 0.0, 1.0
        %v2769 = vsel %vm2763, 0.0, 1.0
        %v2770 = vadd.f32 %v2198, %v2768
        %v2771 = vadd.f32 %v2199, %v2769
        %v2772 = vrcp.pop %v2770
        %v2773 = vmul.f32 %v2766, %v2772
        %v2774 = vrcp.pop %v2771
        %v2775 = vmul.f32 %v2767, %v2774
        %v2776 = vadd.f32 %v2773, %v461
        %v2777 = vadd.f32 %v2775, %v462
        %2778 = vst.msk [vmem:[%s460] sm:$0xff] %vm471, %v2776
        %2779 = vst.msk [vmem:[%s460 + $0x8] sm:$0xff] %vm471, %v2777
        %s2780 = sand.u32 %s196, 1
        %s2781 = scalar_lea.sflag [#allocation4], %s2780
        %s2782 = sand.u32 %s196, 1
        %s2783 = smul.addr %s2782, 16
        %s2784 = scalar_lea.vmem [#allocation13], %s2783
        // Predicated region
        $region69: #{tpu_custom_call.1} parent=43 // pred_check
          %p2785 = pneg %p206
        $region70: #{tpu_custom_call.1} parent=43 // pred_check_branch
          %2787 = sbr.rel (%p2785) target = $region72
        $region71: #{tpu_custom_call.1} parent=43 // pred_region
          %s2789 = ssub.s32 256, 256
          %2790 = vsyncadd %s2781, %s2789
          %s2791 = smul.addr %s32, 128
          %s2792 = scalar_lea.hbm %s6, %s2791
          %s2793 = sshll.u32 %s2784, 4
          %s2794 = int_to_ptr.vmem [resolvable:$true] %s2793
          %2799 = dma.vmem_to_hbm [thread:$0]  %s2794, 256, %s2792, %s2781, 128, 384, 8
        $region72: #{tpu_custom_call.1} parent=43 // pred_fallthru
          _
      $region44: #{tpu_custom_call.1} parent=5 // pred_fallthru
        _
      %p2800 = scmp.le.s32.totalorder 2, %s27
      // Predicated region
      $region73: #{tpu_custom_call.1} parent=5 // pred_check
        %p2801 = pneg %p2800
      $region74: #{tpu_custom_call.1} parent=5 // pred_check_branch
        %2803 = sbr.rel (%p2801) target = $region76
      $region75: #{tpu_custom_call.1} parent=5 // pred_region
        %s2804 = ssub.s32 %s27, 2
        // Predicated region
        $region77: #{tpu_custom_call.1} parent=75 // pred_check
          %p2805 = pneg %p212
        $region78: #{tpu_custom_call.1} parent=75 // pred_check_branch
          %2807 = sbr.rel (%p2805) target = $region80
        $region79: #{tpu_custom_call.1} parent=75 // pred_region
          %s2808 = sand.u32 %s197, 1
          %s2809 = scalar_lea.sflag [#allocation4], %s2808
          %s2810 = sand.u32 %s197, 1
          %s2811 = smul.addr %s2810, 16
          %s2812 = scalar_lea.vmem [#allocation13], %s2811
          %2813 = dma.done %s2809, 256
        $region80: #{tpu_custom_call.1} parent=75 // pred_fallthru
          _
      $region76: #{tpu_custom_call.1} parent=5 // pred_fallthru
        _
    $region6: #{tpu_custom_call.1} parent=1 // loop_footer
      %s31 = sadd.s32 1, %s27
    $region7: #{tpu_custom_call.1} parent=1 // loop_footer_branch
      %26 = sbr.rel target = $region3
    $region8: #{tpu_custom_call.1} parent=1 // loop_exit
      _
    %2814 = vsyncpa [#allocation3], 1
    %s2815 = scalar_lea.sflag [#allocation3], 1
    %2816 = vsyncpa %s2815, 1
    %2817 = vsyncpa [#allocation6], 1
    %s2818 = scalar_lea.sflag [#allocation6], 1
    %2819 = vsyncpa %s2818, 1
    %2820 = vsyncpa [#allocation9], 1
    %s2821 = scalar_lea.sflag [#allocation9], 1
    %2822 = vsyncpa %s2821, 1
    %2823 = vsyncpa [#allocation12], 1
    %s2824 = scalar_lea.sflag [#allocation12], 1
    %2825 = vsyncpa %s2824, 1
    %2826 = vsyncpa [#allocation4], 1
    %s2827 = scalar_lea.sflag [#allocation4], 1
    %2828 = vsyncpa %s2827, 1

</llo_original>
